<compile_context>
chip_gen: v7x
topology: tpu7x:2x2x1
jax: 0.10.0
libtpu: 0.0.40
codegen_flags: <defaults>
</compile_context>

<pallas_src>
import functools

import jax
import jax.numpy as jnp
from jax.experimental import pallas as pl
from jax.experimental.pallas import tpu as pltpu

BN_EPS = 1e-5
LANE = 128


def _round_up(c, m=LANE):
    return ((c + m - 1) // m) * m


def _vmem_limit_bytes():
    # ~48 MiB on v7x (64 MiB physical VMEM), ~96 MiB on v5e/v6e (128 MiB).
    try:
        cap = int(pltpu.get_tpu_info().vmem_capacity_bytes)
    except Exception:
        cap = 64 * 1024 * 1024
    return int(min((cap * 3) // 4, 100 * 1024 * 1024))


# ---------------------------------------------------------------------------
# Pass 1: conv1 + fused 1x1 skip conv + BN1 partial stats  (per batch tile).
# ---------------------------------------------------------------------------
def _conv1_skip_kernel(stride, x_ref, w1_ref, w3_ref, b3_ref,
                       o1_ref, ident_ref, st1_ref):
    tn, ho, wo, cmp_ = o1_ref.shape
    cop = ident_ref.shape[-1]
    sh = stride * (ho - 1) + 1
    sw = stride * (wo - 1) + 1
    m = tn * ho * wo

    xp = x_ref[...]                                   # (tn, H+2, W+2, Cin_p)

    # conv1: 9 accumulated K=Cin_p matmuls (no 9x im2col buffer).  b1 dropped:
    # a per-channel constant bias cancels in the training-mode BN that follows.
    acc1 = jnp.zeros((m, cmp_), jnp.float32)
    for ki in range(3):
        for kj in range(3):
            tap = xp[:, ki:ki + sh:stride, kj:kj + sw:stride, :].reshape(m, -1)
            acc1 = acc1 + jnp.dot(tap, w1_ref[ki * 3 + kj],
                                  preferred_element_type=jnp.float32)

    # 1x1 skip conv: one extra matmul on the center tap only (keeps its bias).
    center = xp[:, 1:1 + sh:stride, 1:1 + sw:stride, :].reshape(m, -1)
    ident = jnp.dot(center, w3_ref[...], preferred_element_type=jnp.float32)
    ident = ident + b3_ref[...]                       # (1, Co_p) broadcast
    ident_ref[...] = ident.reshape(tn, ho, wo, cop)

    o1_ref[...] = acc1.reshape(tn, ho, wo, cmp_)

    # BN1 per-tile partial stats from the live f32 accumulator:
    # sum + centered sum of squares (combined exactly across tiles in wrapper).
    s1 = jnp.sum(acc1, axis=0)
    mean_t = s1 * (1.0 / m)
    d = acc1 - mean_t[None, :]
    m2 = jnp.sum(d * d, axis=0)
    st1_ref[...] = jnp.concatenate([s1[None, :], m2[None, :]], axis=0)[None]


# ---------------------------------------------------------------------------
# Pass 2: BN1 (folded) + ReLU -> conv2 + BN2 partial stats  (per batch tile).
# ---------------------------------------------------------------------------
def _bn1_conv2_kernel(o1_ref, sc1_ref, sh1_ref, w2_ref,
                      o2_ref, st2_ref, o1p_ref):
    tn, ho, wo, cop = o2_ref.shape
    cmp_ = o1_ref.shape[-1]
    m = tn * ho * wo

    # BN1 normalize (+affine) + ReLU in f32, cast once to the MXU dtype.
    y1 = o1_ref[...].reshape(m, cmp_) * sc1_ref[...] + sh1_ref[...]
    y1 = jnp.maximum(y1, 0.0).astype(o1p_ref.dtype).reshape(tn, ho, wo, cmp_)

    # Halo-pad into the MXU-dtype scratch: zero only the 1-pixel border ring,
    # lane-dense interior store.
    zr = jnp.zeros((tn, 1, wo + 2, cmp_), o1p_ref.dtype)
    zc = jnp.zeros((tn, ho + 2, 1, cmp_), o1p_ref.dtype)
    o1p_ref[:, 0:1, :, :] = zr
    o1p_ref[:, ho + 1:ho + 2, :, :] = zr
    o1p_ref[:, :, 0:1, :] = zc
    o1p_ref[:, :, wo + 1:wo + 2, :] = zc
    o1p_ref[:, 1:ho + 1, 1:wo + 1, :] = y1

    # conv2: 9 accumulated K=Cm_p matmuls.  b2 dropped (cancels in BN2).
    o1p = o1p_ref[...]
    acc2 = jnp.zeros((m, cop), jnp.float32)
    for ki in range(3):
        for kj in range(3):
            tap = o1p[:, ki:ki + ho, kj:kj + wo, :].reshape(m, cmp_)
            acc2 = acc2 + jnp.dot(tap, w2_ref[ki * 3 + kj],
                                  preferred_element_type=jnp.float32)

    o2_ref[...] = acc2.reshape(tn, ho, wo, cop)

    s1 = jnp.sum(acc2, axis=0)
    mean_t = s1 * (1.0 / m)
    d = acc2 - mean_t[None, :]
    m2 = jnp.sum(d * d, axis=0)
    st2_ref[...] = jnp.concatenate([s1[None, :], m2[None, :]], axis=0)[None]


# ---------------------------------------------------------------------------
# Pass 3: BN2 (folded) + skip add + ReLU  (per batch tile).
# ---------------------------------------------------------------------------
def _bn2_add_relu_kernel(o2_ref, ident_ref, sc2_ref, sh2_ref, out_ref):
    tn, ho, wo, cop = out_ref.shape
    m = tn * ho * wo
    y = o2_ref[...].reshape(m, cop) * sc2_ref[...] + sh2_ref[...]
    y = y + ident_ref[...].reshape(m, cop)
    out_ref[...] = jnp.maximum(y, 0.0).reshape(tn, ho, wo, cop)


# ---------------------------------------------------------------------------
# Wrapper-side BN statistics combine (tiny, O(channels)).
# ---------------------------------------------------------------------------
def _combine_bn_stats(st, cnt_per_tile, total_cnt):
    s1 = st[:, 0, :]                                  # (T, C) per-tile sums
    m2 = st[:, 1, :]                                  # (T, C) centered SSQ
    mean_t = s1 / cnt_per_tile
    mean_g = jnp.sum(s1, axis=0) / total_cnt
    var_g = (jnp.sum(m2, axis=0)
             + cnt_per_tile * jnp.sum((mean_t - mean_g) ** 2, axis=0)) / total_cnt
    return mean_g, jnp.maximum(var_g, 0.0)


def _fold_bn(gamma, beta, mean, var):
    scale = gamma * jax.lax.rsqrt(var + BN_EPS)
    shift = beta - mean * scale
    return scale[None, :], shift[None, :]             # (1, C) each


# ---------------------------------------------------------------------------
# Wrapper: PyTorch-style NCHW in / NCHW out.
# ---------------------------------------------------------------------------
def residual_block(x_nchw, params, stride=1, mxu_dtype=jnp.bfloat16):
    w1, w2, w3 = params["w1"], params["w2"], params["w3"]
    cin, cm = w1.shape[2], w1.shape[3]
    co = w2.shape[3]
    cp, cmp_, cop = _round_up(cin), _round_up(cm), _round_up(co)

    n, _, h, w_sp = x_nchw.shape
    ho = (h - 1) // stride + 1
    wo = (w_sp - 1) // stride + 1

    # NCHW -> NHWC, cast to MXU dtype early (halves x DMA vs f32), pad the
    # channels to a lane-dense multiple of 128 and add the 3x3 halo.
    x = jnp.transpose(x_nchw, (0, 2, 3, 1)).astype(mxu_dtype)
    x = jnp.pad(x, ((0, 0), (1, 1), (1, 1), (0, cp - cin)))

    # Per-tap weights (9, K, N) so the kernels run accumulated matmuls.
    w1t = (jnp.zeros((9, cp, cmp_), jnp.float32)
           .at[:, :cin, :cm].set(w1.reshape(9, cin, cm)).astype(mxu_dtype))
    w2t = (jnp.zeros((9, cmp_, cop), jnp.float32)
           .at[:, :cm, :co].set(w2.reshape(9, cm, co)).astype(mxu_dtype))
    w3p = (jnp.zeros((cp, cop), jnp.float32)
           .at[:cin, :co].set(w3).astype(mxu_dtype))
    b3p = jnp.zeros((1, cop), jnp.float32).at[0, :co].set(params["b3"])

    g1p = jnp.zeros((cmp_,), jnp.float32).at[:cm].set(params["g1"])
    be1p = jnp.zeros((cmp_,), jnp.float32).at[:cm].set(params["be1"])
    g2p = jnp.zeros((cop,), jnp.float32).at[:co].set(params["g2"])
    be2p = jnp.zeros((cop,), jnp.float32).at[:co].set(params["be2"])

    cparams = pltpu.CompilerParams(
        dimension_semantics=("parallel",),
        vmem_limit_bytes=_vmem_limit_bytes())

    # ---- pass 1: conv1 + 1x1 skip + BN1 partial stats ----------------------
    o1_pre, ident, st1 = pl.pallas_call(
        functools.partial(_conv1_skip_kernel, stride),
        grid=(n,),
        in_specs=[
            pl.BlockSpec((1, h + 2, w_sp + 2, cp), lambda i: (i, 0, 0, 0)),
            pl.BlockSpec((9, cp, cmp_), lambda i: (0, 0, 0)),
            pl.BlockSpec((cp, cop), lambda i: (0, 0)),
            pl.BlockSpec((1, cop), lambda i: (0, 0)),
        ],
        out_specs=[
            pl.BlockSpec((1, ho, wo, cmp_), lambda i: (i, 0, 0, 0)),
            pl.BlockSpec((1, ho, wo, cop), lambda i: (i, 0, 0, 0)),
            pl.BlockSpec((1, 2, cmp_), lambda i: (i, 0, 0)),
        ],
        out_shape=(
            jax.ShapeDtypeStruct((n, ho, wo, cmp_), jnp.float32),
            jax.ShapeDtypeStruct((n, ho, wo, cop), jnp.float32),
            jax.ShapeDtypeStruct((n, 2, cmp_), jnp.float32),
        ),
        compiler_params=cparams,
    )(x, w1t, w3p, b3p)

    cnt_tile = ho * wo
    cnt_total = n * ho * wo
    mean1, var1 = _combine_bn_stats(st1, cnt_tile, cnt_total)
    sc1, sh1 = _fold_bn(g1p, be1p, mean1, var1)

    # ---- pass 2: BN1 + ReLU -> conv2 + BN2 partial stats --------------------
    o2_pre, st2 = pl.pallas_call(
        _bn1_conv2_kernel,
        grid=(n,),
        in_specs=[
            pl.BlockSpec((1, ho, wo, cmp_), lambda i: (i, 0, 0, 0)),
            pl.BlockSpec((1, cmp_), lambda i: (0, 0)),
            pl.BlockSpec((1, cmp_), lambda i: (0, 0)),
            pl.BlockSpec((9, cmp_, cop), lambda i: (0, 0, 0)),
        ],
        out_specs=[
            pl.BlockSpec((1, ho, wo, cop), lambda i: (i, 0, 0, 0)),
            pl.BlockSpec((1, 2, cop), lambda i: (i, 0, 0)),
        ],
        out_shape=(
            jax.ShapeDtypeStruct((n, ho, wo, cop), jnp.float32),
            jax.ShapeDtypeStruct((n, 2, cop), jnp.float32),
        ),
        scratch_shapes=[pltpu.VMEM((1, ho + 2, wo + 2, cmp_), mxu_dtype)],
        compiler_params=cparams,
    )(o1_pre, sc1, sh1, w2t)

    mean2, var2 = _combine_bn_stats(st2, cnt_tile, cnt_total)
    sc2, sh2 = _fold_bn(g2p, be2p, mean2, var2)

    # ---- pass 3: BN2 + skip add + ReLU --------------------------------------
    out = pl.pallas_call(
        _bn2_add_relu_kernel,
        grid=(n,),
        in_specs=[
            pl.BlockSpec((1, ho, wo, cop), lambda i: (i, 0, 0, 0)),
            pl.BlockSpec((1, ho, wo, cop), lambda i: (i, 0, 0, 0)),
            pl.BlockSpec((1, cop), lambda i: (0, 0)),
            pl.BlockSpec((1, cop), lambda i: (0, 0)),
        ],
        out_specs=pl.BlockSpec((1, ho, wo, cop), lambda i: (i, 0, 0, 0)),
        out_shape=jax.ShapeDtypeStruct((n, ho, wo, cop), jnp.float32),
        compiler_params=cparams,
    )(o2_pre, ident, sc2, sh2)

    # TODO(synk): emit bf16 intermediates/output when downstream tolerates it.
    return jnp.transpose(out[..., :co], (0, 3, 1, 2))


# ---------------------------------------------------------------------------
# Pure-JAX reference (training-mode BatchNorm, matches the PyTorch module).
# ---------------------------------------------------------------------------
def _ref_conv(x, w, b, stride, pad):
    y = jax.lax.conv_general_dilated(
        x, w, window_strides=(stride, stride),
        padding=[(pad, pad), (pad, pad)],
        dimension_numbers=("NHWC", "HWIO", "NHWC"))
    return y + b.reshape(1, 1, 1, -1)


def _ref_bn_train(x, gamma, beta):
    mean = jnp.mean(x, axis=(0, 1, 2))
    var = jnp.mean((x - mean) ** 2, axis=(0, 1, 2))   # biased variance
    return (x - mean) * jax.lax.rsqrt(var + BN_EPS) * gamma + beta


def _ref_block(x_nchw, p, stride):
    x = jnp.transpose(x_nchw, (0, 2, 3, 1)).astype(jnp.float32)
    ident = _ref_conv(x, p["w3"][None, None, :, :], p["b3"], stride, 0)
    o = _ref_conv(x, p["w1"], p["b1"], stride, 1)
    o = jnp.maximum(_ref_bn_train(o, p["g1"], p["be1"]), 0.0)
    o = _ref_conv(o, p["w2"], p["b2"], 1, 1)
    o = _ref_bn_train(o, p["g2"], p["be2"])
    return jnp.transpose(jnp.maximum(o + ident, 0.0), (0, 3, 1, 2))


if __name__ == "__main__":
    key = jax.random.PRNGKey(0)
    N, Cin, H, W = 2, 4, 16, 16
    Cm, Co = 8, 8
    stride = 1

    ks = jax.random.split(key, 12)
    x_nchw = jax.random.normal(ks[0], (N, Cin, H, W), jnp.float32)

    params = dict(
        w1=0.1 * jax.random.normal(ks[1], (3, 3, Cin, Cm), jnp.float32),
        b1=0.1 * jax.random.normal(ks[2], (Cm,), jnp.float32),
        g1=1.0 + 0.1 * jax.random.normal(ks[3], (Cm,), jnp.float32),
        be1=0.1 * jax.random.normal(ks[4], (Cm,), jnp.float32),
        w2=0.1 * jax.random.normal(ks[5], (3, 3, Cm, Co), jnp.float32),
        b2=0.1 * jax.random.normal(ks[6], (Co,), jnp.float32),
        g2=1.0 + 0.1 * jax.random.normal(ks[7], (Co,), jnp.float32),
        be2=0.1 * jax.random.normal(ks[8], (Co,), jnp.float32),
        w3=0.1 * jax.random.normal(ks[9], (Cin, Co), jnp.float32),
        b3=0.1 * jax.random.normal(ks[10], (Co,), jnp.float32),
    )

    ref = _ref_block(x_nchw, params, stride)

    # 1) f32-MXU mode: tight check of the fused kernel semantics.
    out_f32 = jax.block_until_ready(
        residual_block(x_nchw, params, stride=stride, mxu_dtype=jnp.float32))
    assert out_f32.shape == ref.shape, (out_f32.shape, ref.shape)
    err32 = float(jnp.max(jnp.abs(out_f32 - ref)))
    assert err32 < 2e-3, err32

    # 2) bf16-MXU mode (default / production path).
    out_bf16 = jax.block_until_ready(
        residual_block(x_nchw, params, stride=stride, mxu_dtype=jnp.bfloat16))
    assert out_bf16.shape == ref.shape, (out_bf16.shape, ref.shape)
    err16 = float(jnp.max(jnp.abs(out_bf16 - ref)))
    assert err16 < 7e-2, err16

    print("KERNEL_OK")
</pallas_src>

<mosaic_0001>
module attributes {stable_mosaic.version = 11 : i64} {
  func.func @_conv1_skip_kernel(%arg0: i32, %arg1: memref<1x18x18x128xf32, #tpu.memory_space<vmem>>, %arg2: memref<9x128x128xf32, #tpu.memory_space<vmem>>, %arg3: memref<128x128xf32, #tpu.memory_space<vmem>>, %arg4: memref<1x128xf32, #tpu.memory_space<vmem>>, %arg5: memref<1x16x16x128xf32, #tpu.memory_space<vmem>>, %arg6: memref<1x16x16x128xf32, #tpu.memory_space<vmem>>, %arg7: memref<1x2x128xf32, #tpu.memory_space<vmem>>) attributes {dimension_semantics = [#tpu.dimension_semantics<parallel>], iteration_bounds = array<i64: 2>, scalar_prefetch = 0 : i64, scratch_operands = 0 : i64, tpu.core_type = #tpu.core_type<tc>, window_params = [{transform_indices = @transform_0, window_bounds = array<i64: 1, 18, 18, 128>}, {pipeline_mode = #tpu.pipeline_mode<synchronous>, transform_indices = @transform_1, window_bounds = array<i64: 9, 128, 128>}, {pipeline_mode = #tpu.pipeline_mode<synchronous>, transform_indices = @transform_2, window_bounds = array<i64: 128, 128>}, {pipeline_mode = #tpu.pipeline_mode<synchronous>, transform_indices = @transform_3, window_bounds = array<i64: 1, 128>}, {transform_indices = @transform_4, window_bounds = array<i64: 1, 16, 16, 128>}, {transform_indices = @transform_5, window_bounds = array<i64: 1, 16, 16, 128>}, {transform_indices = @transform_6, window_bounds = array<i64: 1, 2, 128>}]} {
    %c0 = arith.constant 0 : index
    %c0_0 = arith.constant 0 : index
    %c0_1 = arith.constant 0 : index
    %c0_2 = arith.constant 0 : index
    %0 = vector.load %arg1[%c0, %c0_0, %c0_1, %c0_2] : memref<1x18x18x128xf32, #tpu.memory_space<vmem>>, vector<1x18x18x128xf32>
    %cst = arith.constant 0.000000e+00 : f32
    %1 = vector.broadcast %cst : f32 to vector<256x128xf32>
    %2 = vector.extract_strided_slice %0 {offsets = [0, 0, 0, 0], sizes = [1, 16, 16, 128], strides = [1, 1, 1, 1]} : vector<1x18x18x128xf32> to vector<1x16x16x128xf32>
    %3 = vector.shape_cast %2 : vector<1x16x16x128xf32> to vector<256x128xf32>
    %c0_3 = arith.constant 0 : index
    %c0_4 = arith.constant 0 : index
    %c0_5 = arith.constant 0 : index
    %4 = vector.load %arg2[%c0_3, %c0_4, %c0_5] : memref<9x128x128xf32, #tpu.memory_space<vmem>>, vector<1x128x128xf32>
    %5 = vector.shape_cast %4 : vector<1x128x128xf32> to vector<128x128xf32>
    %cst_6 = arith.constant dense<0.000000e+00> : vector<256x128xf32>
    %6 = tpu.matmul %3, %5, %cst_6 {dimension_numbers = #tpu.dot_dimension_numbers<[1], [0], [0], [1], [0, 0, 1, 1], [], []>} : vector<256x128xf32>, vector<128x128xf32>, vector<256x128xf32> -> vector<256x128xf32>
    %7 = arith.addf %1, %6 : vector<256x128xf32>
    %8 = vector.extract_strided_slice %0 {offsets = [0, 0, 1, 0], sizes = [1, 16, 16, 128], strides = [1, 1, 1, 1]} : vector<1x18x18x128xf32> to vector<1x16x16x128xf32>
    %9 = vector.shape_cast %8 : vector<1x16x16x128xf32> to vector<256x128xf32>
    %c1 = arith.constant 1 : index
    %c0_7 = arith.constant 0 : index
    %c0_8 = arith.constant 0 : index
    %10 = vector.load %arg2[%c1, %c0_7, %c0_8] : memref<9x128x128xf32, #tpu.memory_space<vmem>>, vector<1x128x128xf32>
    %11 = vector.shape_cast %10 : vector<1x128x128xf32> to vector<128x128xf32>
    %cst_9 = arith.constant dense<0.000000e+00> : vector<256x128xf32>
    %12 = tpu.matmul %9, %11, %cst_9 {dimension_numbers = #tpu.dot_dimension_numbers<[1], [0], [0], [1], [0, 0, 1, 1], [], []>} : vector<256x128xf32>, vector<128x128xf32>, vector<256x128xf32> -> vector<256x128xf32>
    %13 = arith.addf %7, %12 : vector<256x128xf32>
    %14 = vector.extract_strided_slice %0 {offsets = [0, 0, 2, 0], sizes = [1, 16, 16, 128], strides = [1, 1, 1, 1]} : vector<1x18x18x128xf32> to vector<1x16x16x128xf32>
    %15 = vector.shape_cast %14 : vector<1x16x16x128xf32> to vector<256x128xf32>
    %c2 = arith.constant 2 : index
    %c0_10 = arith.constant 0 : index
    %c0_11 = arith.constant 0 : index
    %16 = vector.load %arg2[%c2, %c0_10, %c0_11] : memref<9x128x128xf32, #tpu.memory_space<vmem>>, vector<1x128x128xf32>
    %17 = vector.shape_cast %16 : vector<1x128x128xf32> to vector<128x128xf32>
    %cst_12 = arith.constant dense<0.000000e+00> : vector<256x128xf32>
    %18 = tpu.matmul %15, %17, %cst_12 {dimension_numbers = #tpu.dot_dimension_numbers<[1], [0], [0], [1], [0, 0, 1, 1], [], []>} : vector<256x128xf32>, vector<128x128xf32>, vector<256x128xf32> -> vector<256x128xf32>
    %19 = arith.addf %13, %18 : vector<256x128xf32>
    %20 = vector.extract_strided_slice %0 {offsets = [0, 1, 0, 0], sizes = [1, 16, 16, 128], strides = [1, 1, 1, 1]} : vector<1x18x18x128xf32> to vector<1x16x16x128xf32>
    %21 = vector.shape_cast %20 : vector<1x16x16x128xf32> to vector<256x128xf32>
    %c3 = arith.constant 3 : index
    %c0_13 = arith.constant 0 : index
    %c0_14 = arith.constant 0 : index
    %22 = vector.load %arg2[%c3, %c0_13, %c0_14] : memref<9x128x128xf32, #tpu.memory_space<vmem>>, vector<1x128x128xf32>
    %23 = vector.shape_cast %22 : vector<1x128x128xf32> to vector<128x128xf32>
    %cst_15 = arith.constant dense<0.000000e+00> : vector<256x128xf32>
    %24 = tpu.matmul %21, %23, %cst_15 {dimension_numbers = #tpu.dot_dimension_numbers<[1], [0], [0], [1], [0, 0, 1, 1], [], []>} : vector<256x128xf32>, vector<128x128xf32>, vector<256x128xf32> -> vector<256x128xf32>
    %25 = arith.addf %19, %24 : vector<256x128xf32>
    %26 = vector.extract_strided_slice %0 {offsets = [0, 1, 1, 0], sizes = [1, 16, 16, 128], strides = [1, 1, 1, 1]} : vector<1x18x18x128xf32> to vector<1x16x16x128xf32>
    %27 = vector.shape_cast %26 : vector<1x16x16x128xf32> to vector<256x128xf32>
    %c4 = arith.constant 4 : index
    %c0_16 = arith.constant 0 : index
    %c0_17 = arith.constant 0 : index
    %28 = vector.load %arg2[%c4, %c0_16, %c0_17] : memref<9x128x128xf32, #tpu.memory_space<vmem>>, vector<1x128x128xf32>
    %29 = vector.shape_cast %28 : vector<1x128x128xf32> to vector<128x128xf32>
    %cst_18 = arith.constant dense<0.000000e+00> : vector<256x128xf32>
    %30 = tpu.matmul %27, %29, %cst_18 {dimension_numbers = #tpu.dot_dimension_numbers<[1], [0], [0], [1], [0, 0, 1, 1], [], []>} : vector<256x128xf32>, vector<128x128xf32>, vector<256x128xf32> -> vector<256x128xf32>
    %31 = arith.addf %25, %30 : vector<256x128xf32>
    %32 = vector.extract_strided_slice %0 {offsets = [0, 1, 2, 0], sizes = [1, 16, 16, 128], strides = [1, 1, 1, 1]} : vector<1x18x18x128xf32> to vector<1x16x16x128xf32>
    %33 = vector.shape_cast %32 : vector<1x16x16x128xf32> to vector<256x128xf32>
    %c5 = arith.constant 5 : index
    %c0_19 = arith.constant 0 : index
    %c0_20 = arith.constant 0 : index
    %34 = vector.load %arg2[%c5, %c0_19, %c0_20] : memref<9x128x128xf32, #tpu.memory_space<vmem>>, vector<1x128x128xf32>
    %35 = vector.shape_cast %34 : vector<1x128x128xf32> to vector<128x128xf32>
    %cst_21 = arith.constant dense<0.000000e+00> : vector<256x128xf32>
    %36 = tpu.matmul %33, %35, %cst_21 {dimension_numbers = #tpu.dot_dimension_numbers<[1], [0], [0], [1], [0, 0, 1, 1], [], []>} : vector<256x128xf32>, vector<128x128xf32>, vector<256x128xf32> -> vector<256x128xf32>
    %37 = arith.addf %31, %36 : vector<256x128xf32>
    %38 = vector.extract_strided_slice %0 {offsets = [0, 2, 0, 0], sizes = [1, 16, 16, 128], strides = [1, 1, 1, 1]} : vector<1x18x18x128xf32> to vector<1x16x16x128xf32>
    %39 = vector.shape_cast %38 : vector<1x16x16x128xf32> to vector<256x128xf32>
    %c6 = arith.constant 6 : index
    %c0_22 = arith.constant 0 : index
    %c0_23 = arith.constant 0 : index
    %40 = vector.load %arg2[%c6, %c0_22, %c0_23] : memref<9x128x128xf32, #tpu.memory_space<vmem>>, vector<1x128x128xf32>
    %41 = vector.shape_cast %40 : vector<1x128x128xf32> to vector<128x128xf32>
    %cst_24 = arith.constant dense<0.000000e+00> : vector<256x128xf32>
    %42 = tpu.matmul %39, %41, %cst_24 {dimension_numbers = #tpu.dot_dimension_numbers<[1], [0], [0], [1], [0, 0, 1, 1], [], []>} : vector<256x128xf32>, vector<128x128xf32>, vector<256x128xf32> -> vector<256x128xf32>
    %43 = arith.addf %37, %42 : vector<256x128xf32>
    %44 = vector.extract_strided_slice %0 {offsets = [0, 2, 1, 0], sizes = [1, 16, 16, 128], strides = [1, 1, 1, 1]} : vector<1x18x18x128xf32> to vector<1x16x16x128xf32>
    %45 = vector.shape_cast %44 : vector<1x16x16x128xf32> to vector<256x128xf32>
    %c7 = arith.constant 7 : index
    %c0_25 = arith.constant 0 : index
    %c0_26 = arith.constant 0 : index
    %46 = vector.load %arg2[%c7, %c0_25, %c0_26] : memref<9x128x128xf32, #tpu.memory_space<vmem>>, vector<1x128x128xf32>
    %47 = vector.shape_cast %46 : vector<1x128x128xf32> to vector<128x128xf32>
    %cst_27 = arith.constant dense<0.000000e+00> : vector<256x128xf32>
    %48 = tpu.matmul %45, %47, %cst_27 {dimension_numbers = #tpu.dot_dimension_numbers<[1], [0], [0], [1], [0, 0, 1, 1], [], []>} : vector<256x128xf32>, vector<128x128xf32>, vector<256x128xf32> -> vector<256x128xf32>
    %49 = arith.addf %43, %48 : vector<256x128xf32>
    %50 = vector.extract_strided_slice %0 {offsets = [0, 2, 2, 0], sizes = [1, 16, 16, 128], strides = [1, 1, 1, 1]} : vector<1x18x18x128xf32> to vector<1x16x16x128xf32>
    %51 = vector.shape_cast %50 : vector<1x16x16x128xf32> to vector<256x128xf32>
    %c8 = arith.constant 8 : index
    %c0_28 = arith.constant 0 : index
    %c0_29 = arith.constant 0 : index
    %52 = vector.load %arg2[%c8, %c0_28, %c0_29] : memref<9x128x128xf32, #tpu.memory_space<vmem>>, vector<1x128x128xf32>
    %53 = vector.shape_cast %52 : vector<1x128x128xf32> to vector<128x128xf32>
    %cst_30 = arith.constant dense<0.000000e+00> : vector<256x128xf32>
    %54 = tpu.matmul %51, %53, %cst_30 {dimension_numbers = #tpu.dot_dimension_numbers<[1], [0], [0], [1], [0, 0, 1, 1], [], []>} : vector<256x128xf32>, vector<128x128xf32>, vector<256x128xf32> -> vector<256x128xf32>
    %55 = arith.addf %49, %54 : vector<256x128xf32>
    %56 = vector.extract_strided_slice %0 {offsets = [0, 1, 1, 0], sizes = [1, 16, 16, 128], strides = [1, 1, 1, 1]} : vector<1x18x18x128xf32> to vector<1x16x16x128xf32>
    %57 = vector.shape_cast %56 : vector<1x16x16x128xf32> to vector<256x128xf32>
    %c0_31 = arith.constant 0 : index
    %c0_32 = arith.constant 0 : index
    %58 = vector.load %arg3[%c0_31, %c0_32] : memref<128x128xf32, #tpu.memory_space<vmem>>, vector<128x128xf32>
    %cst_33 = arith.constant dense<0.000000e+00> : vector<256x128xf32>
    %59 = tpu.matmul %57, %58, %cst_33 {dimension_numbers = #tpu.dot_dimension_numbers<[1], [0], [0], [1], [0, 0, 1, 1], [], []>} : vector<256x128xf32>, vector<128x128xf32>, vector<256x128xf32> -> vector<256x128xf32>
    %c0_34 = arith.constant 0 : index
    %c0_35 = arith.constant 0 : index
    %60 = vector.load %arg4[%c0_34, %c0_35] : memref<1x128xf32, #tpu.memory_space<vmem>>, vector<1x128xf32>
    %61 = vector.broadcast %60 : vector<1x128xf32> to vector<256x128xf32>
    %62 = arith.addf %59, %61 : vector<256x128xf32>
    %63 = vector.shape_cast %62 : vector<256x128xf32> to vector<1x16x16x128xf32>
    %c0_36 = arith.constant 0 : index
    %c0_37 = arith.constant 0 : index
    %c0_38 = arith.constant 0 : index
    %c0_39 = arith.constant 0 : index
    %64 = vector.load %arg6[%c0_36, %c0_37, %c0_38, %c0_39] : memref<1x16x16x128xf32, #tpu.memory_space<vmem>>, vector<1x16x16x128xf32>
    tpu.vector_store %arg6[%c0_36, %c0_37, %c0_38, %c0_39], %63 {strides = array<i32>} : memref<1x16x16x128xf32, #tpu.memory_space<vmem>>, vector<1x16x16x128xf32>,
    %65 = vector.shape_cast %55 : vector<256x128xf32> to vector<1x16x16x128xf32>
    %c0_40 = arith.constant 0 : index
    %c0_41 = arith.constant 0 : index
    %c0_42 = arith.constant 0 : index
    %c0_43 = arith.constant 0 : index
    %66 = vector.load %arg5[%c0_40, %c0_41, %c0_42, %c0_43] : memref<1x16x16x128xf32, #tpu.memory_space<vmem>>, vector<1x16x16x128xf32>
    tpu.vector_store %arg5[%c0_40, %c0_41, %c0_42, %c0_43], %65 {strides = array<i32>} : memref<1x16x16x128xf32, #tpu.memory_space<vmem>>, vector<1x16x16x128xf32>,
    %cst_44 = arith.constant dense<0.000000e+00> : vector<128xf32>
    %67 = vector.multi_reduction <add>, %55, %cst_44 [0] : vector<256x128xf32> to vector<128xf32>
    %cst_45 = arith.constant 3.906250e-03 : f32
    %68 = vector.broadcast %cst_45 : f32 to vector<128xf32>
    %69 = arith.mulf %67, %68 : vector<128xf32>
    %70 = vector.shape_cast %69 : vector<128xf32> to vector<1x128xf32>
    %71 = vector.broadcast %70 : vector<1x128xf32> to vector<256x128xf32>
    %72 = arith.subf %55, %71 : vector<256x128xf32>
    %73 = arith.mulf %72, %72 : vector<256x128xf32>
    %cst_46 = arith.constant dense<0.000000e+00> : vector<128xf32>
    %74 = vector.multi_reduction <add>, %73, %cst_46 [0] : vector<256x128xf32> to vector<128xf32>
    %75 = vector.shape_cast %67 : vector<128xf32> to vector<1x128xf32>
    %76 = vector.shape_cast %74 : vector<128xf32> to vector<1x128xf32>
    %77 = tpu.concatenate %75, %76 in 0 : vector<1x128xf32>, vector<1x128xf32> -> vector<2x128xf32>
    %78 = vector.shape_cast %77 : vector<2x128xf32> to vector<1x2x128xf32>
    %c0_47 = arith.constant 0 : index
    %c0_48 = arith.constant 0 : index
    %c0_49 = arith.constant 0 : index
    %79 = vector.load %arg7[%c0_47, %c0_48, %c0_49] : memref<1x2x128xf32, #tpu.memory_space<vmem>>, vector<1x2x128xf32>
    tpu.vector_store %arg7[%c0_47, %c0_48, %c0_49], %78 {strides = array<i32>} : memref<1x2x128xf32, #tpu.memory_space<vmem>>, vector<1x2x128xf32>,
    return
  }
  func.func @transform_0(%arg0: i32) -> (i32, i32, i32, i32) {
    %c0_i32 = arith.constant 0 : i32
    %c0_i32_0 = arith.constant 0 : i32
    %c0_i32_1 = arith.constant 0 : i32
    %c0_i32_2 = arith.constant 0 : i32
    return %arg0, %c0_i32, %c0_i32_0, %c0_i32_1 : i32, i32, i32, i32
  }
  func.func @transform_1(%arg0: i32) -> (i32, i32, i32) {
    %c0_i32 = arith.constant 0 : i32
    %c0_i32_0 = arith.constant 0 : i32
    %c0_i32_1 = arith.constant 0 : i32
    %c0_i32_2 = arith.constant 0 : i32
    return %c0_i32, %c0_i32_0, %c0_i32_1 : i32, i32, i32
  }
  func.func @transform_2(%arg0: i32) -> (i32, i32) {
    %c0_i32 = arith.constant 0 : i32
    %c0_i32_0 = arith.constant 0 : i32
    %c0_i32_1 = arith.constant 0 : i32
    return %c0_i32, %c0_i32_0 : i32, i32
  }
  func.func @transform_3(%arg0: i32) -> (i32, i32) {
    %c0_i32 = arith.constant 0 : i32
    %c0_i32_0 = arith.constant 0 : i32
    %c0_i32_1 = arith.constant 0 : i32
    return %c0_i32, %c0_i32_0 : i32, i32
  }
  func.func @transform_4(%arg0: i32) -> (i32, i32, i32, i32) {
    %c0_i32 = arith.constant 0 : i32
    %c0_i32_0 = arith.constant 0 : i32
    %c0_i32_1 = arith.constant 0 : i32
    %c0_i32_2 = arith.constant 0 : i32
    return %arg0, %c0_i32, %c0_i32_0, %c0_i32_1 : i32, i32, i32, i32
  }
  func.func @transform_5(%arg0: i32) -> (i32, i32, i32, i32) {
    %c0_i32 = arith.constant 0 : i32
    %c0_i32_0 = arith.constant 0 : i32
    %c0_i32_1 = arith.constant 0 : i32
    %c0_i32_2 = arith.constant 0 : i32
    return %arg0, %c0_i32, %c0_i32_0, %c0_i32_1 : i32, i32, i32, i32
  }
  func.func @transform_6(%arg0: i32) -> (i32, i32, i32) {
    %c0_i32 = arith.constant 0 : i32
    %c0_i32_0 = arith.constant 0 : i32
    %c0_i32_1 = arith.constant 0 : i32
    return %arg0, %c0_i32, %c0_i32_0 : i32, i32, i32
  }
}

</mosaic_0001>

<llo_original>
// kernel: tpu_custom_call.1
$region0: #{tpu_custom_call.1}
  #allocation0 [shape = 'u32[]', space=smem, size = 0x4, offset = 0x4, fixed_abs, tag = 'smem constant byte address 0x4 - core index']
  #allocation1 [shape = 'u32[144,128]{1,0:T(1,128)}', space=vmem, size = 0x12000, scoped, tag = 'internal scratch']
  %s0 = inlined_call_operand.vmem [shape: f32[2,18,18,128], index: 0, kind: input, shape index: {}]
  %s1 = inlined_call_operand.vmem [shape: f32[9,128,128], index: 1, kind: input, shape index: {}]
  %s2 = inlined_call_operand.vmem [shape: f32[128,128], index: 2, kind: input, shape index: {}]
  %s3 = inlined_call_operand.vmem [shape: f32[1,128], index: 3, kind: input, shape index: {}]
  %s4 = inlined_call_operand.hbm [shape: f32[2,16,16,128], index: 4, kind: output, shape index: {0}]
  %s5 = inlined_call_operand.hbm [shape: f32[2,16,16,128], index: 5, kind: output, shape index: {1}]
  %s6 = inlined_call_operand.hbm [shape: f32[2,2,128], index: 6, kind: output, shape index: {2}]
  %7 = xla_tuple %s4, %s5, %s6
  %s8 = sld [smem:[#allocation0]]
  $region65: #{tpu_custom_call.1} parent=0
    _
  %s10 = ssub.s32 1, %s8
  %s11 = scalar_select 0, %s10, %s8
  $region1: #{tpu_custom_call.1} parent=0
    #allocation2 [shape = 'u8[262144]{0}', space=vmem, size = 0x40000, scoped, tag = 'output window, operand 0']
    #allocation3 [shape = 's32[2]{0}', space=sflag, size = 0x8, scoped, tag = 'scoped memory for tpu_custom_call.1']
    #allocation4 [shape = 'u8[262144]{0}', space=vmem, size = 0x40000, scoped, tag = 'output window, operand 1']
    #allocation5 [shape = 's32[2]{0}', space=sflag, size = 0x8, scoped, tag = 'scoped memory for tpu_custom_call.1']
    #allocation6 [shape = 'u8[2048]{0}', space=vmem, size = 0x800, scoped, tag = 'output window, operand 2']
    %12 = vsyncpa [#allocation3], 0
    %s13 = scalar_lea.sflag [#allocation3], 1
    %14 = vsyncpa %s13, 0
    %15 = vsyncpa [#allocation5], 0
    %s16 = scalar_lea.sflag [#allocation5], 1
    %17 = vsyncpa %s16, 0
    loop: start=0, step=1, limit=4
    $region2: #{tpu_custom_call.1} parent=1 // loop_pre_header
      _
    $region3: #{tpu_custom_call.1} parent=1 // loop_header
      %s19 = sphi 0, %s23
      %p20 = scmp.ge.s32.totalorder %s19, 4
      %s29 = sphi 0, %s31
      %s32 = sphi 0, %s29
      %s33 = sphi 0, %s32
      %s49 = sphi 0, %s33
      %s53 = sphi 0, %s53
      %s55 = sphi 0, %s53
      %s56 = sphi 0, %s55
      %s70 = sphi 0, %s56
      %s74 = sphi 0, %s74
      %s76 = sphi 0, %s74
      %s77 = sphi 0, %s76
      %s91 = sphi 0, %s77
      %s95 = sphi 0, %s95
      %s97 = sphi 0, %s95
      %s98 = sphi 0, %s97
      %s112 = sphi 0, %s98
      %s118 = sphi 0, %s120
      %s121 = sphi 0, %s118
      %s122 = sphi 0, %s121
      %s138 = sphi 0, %s122
      %s144 = sphi 0, %s146
      %s147 = sphi 0, %s144
      %s148 = sphi 0, %s147
      %s164 = sphi 0, %s148
      %s170 = sphi 0, %s172
      %s173 = sphi 0, %s170
      %s174 = sphi 0, %s173
      %s190 = sphi 0, %s174
    $region4: #{tpu_custom_call.1} parent=1 // loop_header_branch
      %22 = sbr.rel (%p20) target = $region8
    $region5: #{tpu_custom_call.1} parent=1 // loop_body
      %s24 = ssub.s32 %s19, 1
      %s25 = ssub.s32 %s19, 2
      %s26 = sadd.s32 %s19, 1
      %s27 = ssub.s32 %s19, %s26
      %p28 = scmp.eq.s32.totalorder %s27, 0
      %s30 = sadd.s32 %s29, 1
      %s31 = scalar_select %p28, %s29, %s30
      %p34 = pneg %p28
      %p35 = scmp.eq.s32.totalorder %s19, 1
      %p36 = por %p34, %p35
      %p37 = scmp.ne.s32.totalorder %s29, %s32
      %p38 = scmp.eq.s32.totalorder %s19, 0
      %p39 = por %p37, %p38
      %p40 = scmp.ne.s32.totalorder %s29, %s32
      %p41 = scmp.eq.s32.totalorder %s24, 1
      %p42 = por %p40, %p41
      %p43 = scmp.ne.s32.totalorder %s32, %s33
      %p44 = scmp.eq.s32.totalorder %s24, 0
      %p45 = por %p43, %p44
      %p46 = scmp.ne.s32.totalorder %s32, %s33
      %p47 = scmp.eq.s32.totalorder %s25, 1
      %p48 = por %p46, %p47
      %p50 = scmp.ne.s32.totalorder %s33, %s49
      %p51 = scmp.eq.s32.totalorder %s25, 0
      %p52 = por %p50, %p51
      %s54 = sadd.s32 %s53, 1
      %p57 = scmp.eq.s32.totalorder %s19, 1
      %p58 = scmp.ne.s32.totalorder %s53, %s55
      %p59 = scmp.eq.s32.totalorder %s19, 0
      %p60 = por %p58, %p59
      %p61 = scmp.ne.s32.totalorder %s53, %s55
      %p62 = scmp.eq.s32.totalorder %s24, 1
      %p63 = por %p61, %p62
      %p64 = scmp.ne.s32.totalorder %s55, %s56
      %p65 = scmp.eq.s32.totalorder %s24, 0
      %p66 = por %p64, %p65
      %p67 = scmp.ne.s32.totalorder %s55, %s56
      %p68 = scmp.eq.s32.totalorder %s25, 1
      %p69 = por %p67, %p68
      %p71 = scmp.ne.s32.totalorder %s56, %s70
      %p72 = scmp.eq.s32.totalorder %s25, 0
      %p73 = por %p71, %p72
      %s75 = sadd.s32 %s74, 1
      %p78 = scmp.eq.s32.totalorder %s19, 1
      %p79 = scmp.ne.s32.totalorder %s74, %s76
      %p80 = scmp.eq.s32.totalorder %s19, 0
      %p81 = por %p79, %p80
      %p82 = scmp.ne.s32.totalorder %s74, %s76
      %p83 = scmp.eq.s32.totalorder %s24, 1
      %p84 = por %p82, %p83
      %p85 = scmp.ne.s32.totalorder %s76, %s77
      %p86 = scmp.eq.s32.totalorder %s24, 0
      %p87 = por %p85, %p86
      %p88 = scmp.ne.s32.totalorder %s76, %s77
      %p89 = scmp.eq.s32.totalorder %s25, 1
      %p90 = por %p88, %p89
      %p92 = scmp.ne.s32.totalorder %s77, %s91
      %p93 = scmp.eq.s32.totalorder %s25, 0
      %p94 = por %p92, %p93
      %s96 = sadd.s32 %s95, 1
      %p99 = scmp.eq.s32.totalorder %s19, 1
      %p100 = scmp.ne.s32.totalorder %s95, %s97
      %p101 = scmp.eq.s32.totalorder %s19, 0
      %p102 = por %p100, %p101
      %p103 = scmp.ne.s32.totalorder %s95, %s97
      %p104 = scmp.eq.s32.totalorder %s24, 1
      %p105 = por %p103, %p104
      %p106 = scmp.ne.s32.totalorder %s97, %s98
      %p107 = scmp.eq.s32.totalorder %s24, 0
      %p108 = por %p106, %p107
      %p109 = scmp.ne.s32.totalorder %s97, %s98
      %p110 = scmp.eq.s32.totalorder %s25, 1
      %p111 = por %p109, %p110
      %p113 = scmp.ne.s32.totalorder %s98, %s112
      %p114 = scmp.eq.s32.totalorder %s25, 0
      %p115 = por %p113, %p114
      %s116 = ssub.s32 %s19, %s26
      %p117 = scmp.eq.s32.totalorder %s116, 0
      %s119 = sadd.s32 %s118, 1
      %s120 = scalar_select %p117, %s118, %s119
      %p123 = pneg %p117
      %p124 = scmp.eq.s32.totalorder %s19, 1
      %p125 = por %p123, %p124
      %p126 = scmp.ne.s32.totalorder %s118, %s121
      %p127 = scmp.eq.s32.totalorder %s19, 0
      %p128 = por %p126, %p127
      %p129 = scmp.ne.s32.totalorder %s118, %s121
      %p130 = scmp.eq.s32.totalorder %s24, 1
      %p131 = por %p129, %p130
      %p132 = scmp.ne.s32.totalorder %s121, %s122
      %p133 = scmp.eq.s32.totalorder %s24, 0
      %p134 = por %p132, %p133
      %p135 = scmp.ne.s32.totalorder %s121, %s122
      %p136 = scmp.eq.s32.totalorder %s25, 1
      %p137 = por %p135, %p136
      %p139 = scmp.ne.s32.totalorder %s122, %s138
      %p140 = scmp.eq.s32.totalorder %s25, 0
      %p141 = por %p139, %p140
      %s142 = ssub.s32 %s19, %s26
      %p143 = scmp.eq.s32.totalorder %s142, 0
      %s145 = sadd.s32 %s144, 1
      %s146 = scalar_select %p143, %s144, %s145
      %p149 = pneg %p143
      %p150 = scmp.eq.s32.totalorder %s19, 1
      %p151 = por %p149, %p150
      %p152 = scmp.ne.s32.totalorder %s144, %s147
      %p153 = scmp.eq.s32.totalorder %s19, 0
      %p154 = por %p152, %p153
      %p155 = scmp.ne.s32.totalorder %s144, %s147
      %p156 = scmp.eq.s32.totalorder %s24, 1
      %p157 = por %p155, %p156
      %p158 = scmp.ne.s32.totalorder %s147, %s148
      %p159 = scmp.eq.s32.totalorder %s24, 0
      %p160 = por %p158, %p159
      %p161 = scmp.ne.s32.totalorder %s147, %s148
      %p162 = scmp.eq.s32.totalorder %s25, 1
      %p163 = por %p161, %p162
      %p165 = scmp.ne.s32.totalorder %s148, %s164
      %p166 = scmp.eq.s32.totalorder %s25, 0
      %p167 = por %p165, %p166
      %s168 = ssub.s32 %s19, %s26
      %p169 = scmp.eq.s32.totalorder %s168, 0
      %s171 = sadd.s32 %s170, 1
      %s172 = scalar_select %p169, %s170, %s171
      %p175 = pneg %p169
      %p176 = scmp.eq.s32.totalorder %s19, 1
      %p177 = por %p175, %p176
      %p178 = scmp.ne.s32.totalorder %s170, %s173
      %p179 = scmp.eq.s32.totalorder %s19, 0
      %p180 = por %p178, %p179
      %p181 = scmp.ne.s32.totalorder %s170, %s173
      %p182 = scmp.eq.s32.totalorder %s24, 1
      %p183 = por %p181, %p182
      %p184 = scmp.ne.s32.totalorder %s173, %s174
      %p185 = scmp.eq.s32.totalorder %s24, 0
      %p186 = por %p184, %p185
      %p187 = scmp.ne.s32.totalorder %s173, %s174
      %p188 = scmp.eq.s32.totalorder %s25, 1
      %p189 = por %p187, %p188
      %p191 = scmp.ne.s32.totalorder %s174, %s190
      %p192 = scmp.eq.s32.totalorder %s25, 0
      %p193 = por %p191, %p192
      %p194 = scmp.le.s32.totalorder 1, %s19
      %p195 = scmp.lt.s32.totalorder %s19, 3
      %p196 = pnand %p194, %p195
      %p197 = pneg %p196
      // Predicated region
      $region9: #{tpu_custom_call.1} parent=5 // pred_check
        _
      $region10: #{tpu_custom_call.1} parent=5 // pred_check_branch
        %199 = sbr.rel (%p196) target = $region12
      $region11: #{tpu_custom_call.1} parent=5 // pred_region
        %s200 = ssub.s32 %s19, 1
        // Predicated region
        $region13: #{tpu_custom_call.1} parent=11 // pred_check
          %p201 = pneg %p66
        $region14: #{tpu_custom_call.1} parent=11 // pred_check_branch
          %203 = sbr.rel (%p201) target = $region16
        $region15: #{tpu_custom_call.1} parent=11 // pred_region
          _
        $region16: #{tpu_custom_call.1} parent=11 // pred_fallthru
          _
        // Predicated region
        $region17: #{tpu_custom_call.1} parent=11 // pred_check
          %p204 = pneg %p87
        $region18: #{tpu_custom_call.1} parent=11 // pred_check_branch
          %206 = sbr.rel (%p204) target = $region20
        $region19: #{tpu_custom_call.1} parent=11 // pred_region
          _
        $region20: #{tpu_custom_call.1} parent=11 // pred_fallthru
          _
        // Predicated region
        $region21: #{tpu_custom_call.1} parent=11 // pred_check
          %p207 = pneg %p108
        $region22: #{tpu_custom_call.1} parent=11 // pred_check_branch
          %209 = sbr.rel (%p207) target = $region24
        $region23: #{tpu_custom_call.1} parent=11 // pred_region
          _
        $region24: #{tpu_custom_call.1} parent=11 // pred_fallthru
          _
      $region12: #{tpu_custom_call.1} parent=5 // pred_fallthru
        _
      %p210 = scmp.lt.s32.totalorder %s19, 2
      // Predicated region
      $region25: #{tpu_custom_call.1} parent=5 // pred_check
        %p211 = pneg %p210
      $region26: #{tpu_custom_call.1} parent=5 // pred_check_branch
        %213 = sbr.rel (%p211) target = $region28
      $region27: #{tpu_custom_call.1} parent=5 // pred_region
        // Predicated region
        $region29: #{tpu_custom_call.1} parent=27 // pred_check
          %p214 = pneg %p39
        $region30: #{tpu_custom_call.1} parent=27 // pred_check_branch
          %216 = sbr.rel (%p214) target = $region32
        $region31: #{tpu_custom_call.1} parent=27 // pred_region
          %p217 = scmp.lt.s32.totalorder %s19, 1
          %s218 = scalar_select %p217, %s19, 1
          %s219 = smul.addr %s218, 54
          %s220 = smul.addr %s219, 8
          %s221 = scalar_lea.vmem %s0, %s220
        $region32: #{tpu_custom_call.1} parent=27 // pred_fallthru
          _
      $region28: #{tpu_custom_call.1} parent=5 // pred_fallthru
        _
      %p222 = scmp.le.s32.totalorder 1, %s19
      %p223 = scmp.lt.s32.totalorder %s19, 3
      %p224 = pnand %p222, %p223
      %p225 = pneg %p224
      // Predicated region
      $region33: #{tpu_custom_call.1} parent=5 // pred_check
        _
      $region34: #{tpu_custom_call.1} parent=5 // pred_check_branch
        %227 = sbr.rel (%p224) target = $region36
      $region35: #{tpu_custom_call.1} parent=5 // pred_region
        %s228 = ssub.s32 %s19, 1
        %p229 = scmp.lt.s32.totalorder %s24, 1
        %s230 = scalar_select %p229, %s24, 1
        %s231 = smul.addr %s230, 54
        %s232 = smul.addr %s231, 8
        %s233 = scalar_lea.vmem %s0, %s232
        %p234 = pneg %p45
        %p235 = pneg %p42
        %p236 = pneg %p66
        %p237 = pneg %p63
        %p238 = pneg %p87
        %p239 = pneg %p84
        %p240 = pneg %p108
        %p241 = pneg %p105
        %p242 = pneg %p134
        %p243 = pneg %p131
        %s244 = sand.u32 %s121, 1
        %s245 = scalar_lea.sflag [#allocation3], %s244
        %s246 = sand.u32 %s121, 1
        %s247 = smul.addr %s246, 256
        %s248 = scalar_lea.vmem [#allocation2], %s247
        %p249 = pneg %p160
        %p250 = pneg %p157
        %s251 = sand.u32 %s24, 1
        %s252 = scalar_lea.sflag [#allocation5], %s251
        %s253 = sand.u32 %s147, 1
        %s254 = smul.addr %s253, 256
        %s255 = scalar_lea.vmem [#allocation4], %s254
        %p256 = pneg %p186
        %p257 = pneg %p183
        %s258 = sand.u32 %s24, 1
        %s259 = scalar_lea.sflag [#allocation5], %s258
        %s260 = sand.u32 %s173, 1
        %s261 = smul.addr %s260, 2
        %s262 = scalar_lea.vmem [#allocation6], %s261
        %p263 = scmp.lt.s32.totalorder %s24, 1
        %s264 = scalar_select %p263, %s24, 1
        %s265 = smul.addr %s264, 54
        %s266 = smul.addr %s265, 8
        %s267 = scalar_lea.vmem %s0, %s266
        %v268 = vld [vmem:[%s267] sm:$0xff]
        %v269 = vld [vmem:[%s267 + $0x8] sm:$0xff]
        %v270 = vld [vmem:[%s267 + $0x10] sm:$0x3]
        %v271 = vld [vmem:[%s267 + $0x18] sm:$0xff]
        %v272 = vld [vmem:[%s267 + $0x20] sm:$0xff]
        %v273 = vld [vmem:[%s267 + $0x28] sm:$0x3]
        %v274 = vld [vmem:[%s267 + $0x30] sm:$0xff]
        %v275 = vld [vmem:[%s267 + $0x38] sm:$0xff]
        %v276 = vld [vmem:[%s267 + $0x40] sm:$0x3]
        %v277 = vld [vmem:[%s267 + $0x48] sm:$0xff]
        %v278 = vld [vmem:[%s267 + $0x50] sm:$0xff]
        %v279 = vld [vmem:[%s267 + $0x58] sm:$0x3]
        %v280 = vld [vmem:[%s267 + $0x60] sm:$0xff]
        %v281 = vld [vmem:[%s267 + $0x68] sm:$0xff]
        %v282 = vld [vmem:[%s267 + $0x70] sm:$0x3]
        %v283 = vld [vmem:[%s267 + $0x78] sm:$0xff]
        %v284 = vld [vmem:[%s267 + $0x80] sm:$0xff]
        %v285 = vld [vmem:[%s267 + $0x88] sm:$0x3]
        %v286 = vld [vmem:[%s267 + $0x90] sm:$0xff]
        %v287 = vld [vmem:[%s267 + $0x98] sm:$0xff]
        %v288 = vld [vmem:[%s267 + $0xa0] sm:$0x3]
        %v289 = vld [vmem:[%s267 + $0xa8] sm:$0xff]
        %v290 = vld [vmem:[%s267 + $0xb0] sm:$0xff]
        %v291 = vld [vmem:[%s267 + $0xb8] sm:$0x3]
        %v292 = vld [vmem:[%s267 + $0xc0] sm:$0xff]
        %v293 = vld [vmem:[%s267 + $0xc8] sm:$0xff]
        %v294 = vld [vmem:[%s267 + $0xd0] sm:$0x3]
        %v295 = vld [vmem:[%s267 + $0xd8] sm:$0xff]
        %v296 = vld [vmem:[%s267 + $0xe0] sm:$0xff]
        %v297 = vld [vmem:[%s267 + $0xe8] sm:$0x3]
        %v298 = vld [vmem:[%s267 + $0xf0] sm:$0xff]
        %v299 = vld [vmem:[%s267 + $0xf8] sm:$0xff]
        %v300 = vld [vmem:[%s267 + $0x100] sm:$0x3]
        %v301 = vld [vmem:[%s267 + $0x108] sm:$0xff]
        %v302 = vld [vmem:[%s267 + $0x110] sm:$0xff]
        %v303 = vld [vmem:[%s267 + $0x118] sm:$0x3]
        %v304 = vld [vmem:[%s267 + $0x120] sm:$0xff]
        %v305 = vld [vmem:[%s267 + $0x128] sm:$0xff]
        %v306 = vld [vmem:[%s267 + $0x130] sm:$0x3]
        %v307 = vld [vmem:[%s267 + $0x138] sm:$0xff]
        %v308 = vld [vmem:[%s267 + $0x140] sm:$0xff]
        %v309 = vld [vmem:[%s267 + $0x148] sm:$0x3]
        %v310 = vld [vmem:[%s267 + $0x150] sm:$0xff]
        %v311 = vld [vmem:[%s267 + $0x158] sm:$0xff]
        %v312 = vld [vmem:[%s267 + $0x160] sm:$0x3]
        %v313 = vld [vmem:[%s267 + $0x168] sm:$0xff]
        %v314 = vld [vmem:[%s267 + $0x170] sm:$0xff]
        %v315 = vld [vmem:[%s267 + $0x178] sm:$0x3]
        %v316 = vld [vmem:[%s267 + $0x180] sm:$0xff]
        %v317 = vld [vmem:[%s267 + $0x188] sm:$0xff]
        %v318 = vld [vmem:[%s267 + $0x190] sm:$0x3]
        %v319 = vld [vmem:[%s267 + $0x198] sm:$0xff]
        %v320 = vld [vmem:[%s267 + $0x1a0] sm:$0xff]
        %v321 = vld [vmem:[%s267 + $0x1a8] sm:$0x3]
        %v322 = vld [vmem:[%s1] sm:$0xff]
        %v323 = vld [vmem:[%s1 + $0x8] sm:$0xff]
        %v324 = vld [vmem:[%s1 + $0x10] sm:$0xff]
        %v325 = vld [vmem:[%s1 + $0x18] sm:$0xff]
        %v326 = vld [vmem:[%s1 + $0x20] sm:$0xff]
        %v327 = vld [vmem:[%s1 + $0x28] sm:$0xff]
        %v328 = vld [vmem:[%s1 + $0x30] sm:$0xff]
        %v329 = vld [vmem:[%s1 + $0x38] sm:$0xff]
        %v330 = vld [vmem:[%s1 + $0x40] sm:$0xff]
        %v331 = vld [vmem:[%s1 + $0x48] sm:$0xff]
        %v332 = vld [vmem:[%s1 + $0x50] sm:$0xff]
        %v333 = vld [vmem:[%s1 + $0x58] sm:$0xff]
        %v334 = vld [vmem:[%s1 + $0x60] sm:$0xff]
        %v335 = vld [vmem:[%s1 + $0x68] sm:$0xff]
        %v336 = vld [vmem:[%s1 + $0x70] sm:$0xff]
        %v337 = vld [vmem:[%s1 + $0x78] sm:$0xff]
        %vm386 = vcmask 1046528
        %v387 = vrot.slane %v268, 1
        %v388 = vrot.slane %v269, 1
        %v389 = vsel %vm386, %v387, %v388
        %v390 = vrot.slane %v270, 1
        %v391 = vsel %vm386, %v388, %v390
        %v392 = vrot.slane %v271, 1
        %v393 = vrot.slane %v272, 1
        %v394 = vsel %vm386, %v392, %v393
        %v395 = vrot.slane %v273, 1
        %v396 = vsel %vm386, %v393, %v395
        %v397 = vrot.slane %v274, 1
        %v398 = vrot.slane %v275, 1
        %v399 = vsel %vm386, %v397, %v398
        %v400 = vrot.slane %v276, 1
        %v401 = vsel %vm386, %v398, %v400
        %v402 = vrot.slane %v277, 1
        %v403 = vrot.slane %v278, 1
        %v404 = vsel %vm386, %v402, %v403
        %v405 = vrot.slane %v279, 1
        %v406 = vsel %vm386, %v403, %v405
        %v407 = vrot.slane %v280, 1
        %v408 = vrot.slane %v281, 1
        %v409 = vsel %vm386, %v407, %v408
        %v410 = vrot.slane %v282, 1
        %v411 = vsel %vm386, %v408, %v410
        %v412 = vrot.slane %v283, 1
        %v413 = vrot.slane %v284, 1
        %v414 = vsel %vm386, %v412, %v413
        %v415 = vrot.slane %v285, 1
        %v416 = vsel %vm386, %v413, %v415
        %v417 = vrot.slane %v286, 1
        %v418 = vrot.slane %v287, 1
        %v419 = vsel %vm386, %v417, %v418
        %v420 = vrot.slane %v288, 1
        %v421 = vsel %vm386, %v418, %v420
        %v422 = vrot.slane %v289, 1
        %v423 = vrot.slane %v290, 1
        %v424 = vsel %vm386, %v422, %v423
        %v425 = vrot.slane %v291, 1
        %v426 = vsel %vm386, %v423, %v425
        %v427 = vrot.slane %v292, 1
        %v428 = vrot.slane %v293, 1
        %v429 = vsel %vm386, %v427, %v428
        %v430 = vrot.slane %v294, 1
        %v431 = vsel %vm386, %v428, %v430
        %v432 = vrot.slane %v295, 1
        %v433 = vrot.slane %v296, 1
        %v434 = vsel %vm386, %v432, %v433
        %v435 = vrot.slane %v297, 1
        %v436 = vsel %vm386, %v433, %v435
        %v437 = vrot.slane %v298, 1
        %v438 = vrot.slane %v299, 1
        %v439 = vsel %vm386, %v437, %v438
        %v440 = vrot.slane %v300, 1
        %v441 = vsel %vm386, %v438, %v440
        %v442 = vrot.slane %v301, 1
        %v443 = vrot.slane %v302, 1
        %v444 = vsel %vm386, %v442, %v443
        %v445 = vrot.slane %v303, 1
        %v446 = vsel %vm386, %v443, %v445
        %v447 = vrot.slane %v304, 1
        %v448 = vrot.slane %v305, 1
        %v449 = vsel %vm386, %v447, %v448
        %v450 = vrot.slane %v306, 1
        %v451 = vsel %vm386, %v448, %v450
        %v452 = vrot.slane %v307, 1
        %v453 = vrot.slane %v308, 1
        %v454 = vsel %vm386, %v452, %v453
        %v455 = vrot.slane %v309, 1
        %v456 = vsel %vm386, %v453, %v455
        %v457 = vrot.slane %v310, 1
        %v458 = vrot.slane %v311, 1
        %v459 = vsel %vm386, %v457, %v458
        %v460 = vrot.slane %v312, 1
        %v461 = vsel %vm386, %v458, %v460
        %v462 = vrot.slane %v313, 1
        %v463 = vrot.slane %v314, 1
        %v464 = vsel %vm386, %v462, %v463
        %v465 = vrot.slane %v315, 1
        %v466 = vsel %vm386, %v463, %v465
        %s499 = scalar_lea.vmem %s1, 128
        %v500 = vld [vmem:[%s499] sm:$0xff]
        %v501 = vld [vmem:[%s499 + $0x8] sm:$0xff]
        %v502 = vld [vmem:[%s499 + $0x10] sm:$0xff]
        %v503 = vld [vmem:[%s499 + $0x18] sm:$0xff]
        %v504 = vld [vmem:[%s499 + $0x20] sm:$0xff]
        %v505 = vld [vmem:[%s499 + $0x28] sm:$0xff]
        %v506 = vld [vmem:[%s499 + $0x30] sm:$0xff]
        %v507 = vld [vmem:[%s499 + $0x38] sm:$0xff]
        %v508 = vld [vmem:[%s499 + $0x40] sm:$0xff]
        %v509 = vld [vmem:[%s499 + $0x48] sm:$0xff]
        %v510 = vld [vmem:[%s499 + $0x50] sm:$0xff]
        %v511 = vld [vmem:[%s499 + $0x58] sm:$0xff]
        %v512 = vld [vmem:[%s499 + $0x60] sm:$0xff]
        %v513 = vld [vmem:[%s499 + $0x68] sm:$0xff]
        %v514 = vld [vmem:[%s499 + $0x70] sm:$0xff]
        %v515 = vld [vmem:[%s499 + $0x78] sm:$0xff]
        %516 = vmatprep.subr.mxu0 0.0
        %517 = vmatpush1.msra.mxu0 %v500
        %518 = vmatprep.subr.mxu0 0.0
        %519 = vmatpush1.msra.mxu0 %v501
        %520 = vmatprep.subr.mxu0 0.0
        %521 = vmatpush1.msra.mxu0 %v502
        %522 = vmatprep.subr.mxu0 0.0
        %523 = vmatpush1.msra.mxu0 %v503
        %524 = vmatprep.subr.mxu0 0.0
        %525 = vmatpush1.msra.mxu0 %v504
        %526 = vmatprep.subr.mxu0 0.0
        %527 = vmatpush1.msra.mxu0 %v505
        %528 = vmatprep.subr.mxu0 0.0
        %529 = vmatpush1.msra.mxu0 %v506
        %530 = vmatprep.subr.mxu0 0.0
        %531 = vmatpush1.msra.mxu0 %v507
        %532 = vmatprep.subr.mxu0 0.0
        %533 = vmatpush1.msra.mxu0 %v508
        %534 = vmatprep.subr.mxu0 0.0
        %535 = vmatpush1.msra.mxu0 %v509
        %536 = vmatprep.subr.mxu0 0.0
        %537 = vmatpush1.msra.mxu0 %v510
        %538 = vmatprep.subr.mxu0 0.0
        %539 = vmatpush1.msra.mxu0 %v511
        %540 = vmatprep.subr.mxu0 0.0
        %541 = vmatpush1.msra.mxu0 %v512
        %542 = vmatprep.subr.mxu0 0.0
        %543 = vmatpush1.msra.mxu0 %v513
        %544 = vmatprep.subr.mxu0 0.0
        %545 = vmatpush1.msra.mxu0 %v514
        %546 = vmatprep.subr.mxu0 0.0
        %547 = vmatpush1.msra.mxu0 %v515
        %548 = vmatprep.subr.mxu0 0.0
        %549 = vmatpush1.msra.mxu0 0.0
        %550 = vmatprep.subr.mxu0 0.0
        %551 = vmatpush1.msra.mxu0 0.0
        %552 = vmatprep.subr.mxu0 0.0
        %553 = vmatpush1.msra.mxu0 0.0
        %554 = vmatprep.subr.mxu0 0.0
        %555 = vmatpush1.msra.mxu0 0.0
        %556 = vmatprep.subr.mxu0 0.0
        %557 = vmatpush1.msra.mxu0 0.0
        %558 = vmatprep.subr.mxu0 0.0
        %559 = vmatpush1.msra.mxu0 0.0
        %560 = vmatprep.subr.mxu0 0.0
        %561 = vmatpush1.msra.mxu0 0.0
        %562 = vmatprep.subr.mxu0 0.0
        %563 = vmatpush1.msra.mxu0 0.0
        %564 = vmatprep.subr.mxu0 0.0
        %565 = vmatpush1.msra.mxu0 0.0
        %566 = vmatprep.subr.mxu0 0.0
        %567 = vmatpush1.msra.mxu0 0.0
        %568 = vmatprep.subr.mxu0 0.0
        %569 = vmatpush1.msra.mxu0 0.0
        %570 = vmatprep.subr.mxu0 0.0
        %571 = vmatpush1.msra.mxu0 0.0
        %572 = vmatprep.subr.mxu0 0.0
        %573 = vmatpush1.msra.mxu0 0.0
        %574 = vmatprep.subr.mxu0 0.0
        %575 = vmatpush1.msra.mxu0 0.0
        %576 = vmatprep.subr.mxu0 0.0
        %577 = vmatpush1.msra.mxu0 0.0
        %578 = vmatprep.subr.mxu0 0.0
        %579 = vmatpush1.msra.mxu0 0.0
        %580 = vmatprep.mubr.f32.mxu0 0.0
        %581 = vmatmul.mubr.f32.gmra.mrb[0].mxu0 %v389
        %v582 = vpop.f32.mrb[0].mxu0
        %v583 = vadd.f32 0.0, %v582
        %v584 = vpop.f32.mrb[0].mxu0
        %585 = vmatprep.mubr.f32.mxu0 0.0
        %586 = vmatmul.mubr.f32.gmra.mrb[0].mxu0 %v391
        %v587 = vpop.f32.mrb[0].mxu0
        %v588 = vadd.f32 0.0, %v587
        %v589 = vpop.f32.mrb[0].mxu0
        %590 = vmatprep.mubr.f32.mxu0 0.0
        %591 = vmatmul.mubr.f32.gmra.mrb[0].mxu0 %v394
        %v592 = vpop.f32.mrb[0].mxu0
        %v593 = vadd.f32 0.0, %v592
        %v594 = vpop.f32.mrb[0].mxu0
        %595 = vmatprep.mubr.f32.mxu0 0.0
        %596 = vmatmul.mubr.f32.gmra.mrb[0].mxu0 %v396
        %v597 = vpop.f32.mrb[0].mxu0
        %v598 = vadd.f32 0.0, %v597
        %v599 = vpop.f32.mrb[0].mxu0
        %600 = vmatprep.mubr.f32.mxu0 0.0
        %601 = vmatmul.mubr.f32.gmra.mrb[0].mxu0 %v399
        %v602 = vpop.f32.mrb[0].mxu0
        %v603 = vadd.f32 0.0, %v602
        %v604 = vpop.f32.mrb[0].mxu0
        %605 = vmatprep.mubr.f32.mxu0 0.0
        %606 = vmatmul.mubr.f32.gmra.mrb[0].mxu0 %v401
        %v607 = vpop.f32.mrb[0].mxu0
        %v608 = vadd.f32 0.0, %v607
        %v609 = vpop.f32.mrb[0].mxu0
        %610 = vmatprep.mubr.f32.mxu0 0.0
        %611 = vmatmul.mubr.f32.gmra.mrb[0].mxu0 %v404
        %v612 = vpop.f32.mrb[0].mxu0
        %v613 = vadd.f32 0.0, %v612
        %v614 = vpop.f32.mrb[0].mxu0
        %615 = vmatprep.mubr.f32.mxu0 0.0
        %616 = vmatmul.mubr.f32.gmra.mrb[0].mxu0 %v406
        %v617 = vpop.f32.mrb[0].mxu0
        %v618 = vadd.f32 0.0, %v617
        %v619 = vpop.f32.mrb[0].mxu0
        %620 = vmatprep.mubr.f32.mxu0 0.0
        %621 = vmatmul.mubr.f32.gmra.mrb[0].mxu0 %v409
        %v622 = vpop.f32.mrb[0].mxu0
        %v623 = vadd.f32 0.0, %v622
        %v624 = vpop.f32.mrb[0].mxu0
        %625 = vmatprep.mubr.f32.mxu0 0.0
        %626 = vmatmul.mubr.f32.gmra.mrb[0].mxu0 %v411
        %v627 = vpop.f32.mrb[0].mxu0
        %v628 = vadd.f32 0.0, %v627
        %v629 = vpop.f32.mrb[0].mxu0
        %630 = vmatprep.mubr.f32.mxu0 0.0
        %631 = vmatmul.mubr.f32.gmra.mrb[0].mxu0 %v414
        %v632 = vpop.f32.mrb[0].mxu0
        %v633 = vadd.f32 0.0, %v632
        %v634 = vpop.f32.mrb[0].mxu0
        %635 = vmatprep.mubr.f32.mxu0 0.0
        %636 = vmatmul.mubr.f32.gmra.mrb[0].mxu0 %v416
        %v637 = vpop.f32.mrb[0].mxu0
        %v638 = vadd.f32 0.0, %v637
        %v639 = vpop.f32.mrb[0].mxu0
        %640 = vmatprep.mubr.f32.mxu0 0.0
        %641 = vmatmul.mubr.f32.gmra.mrb[0].mxu0 %v419
        %v642 = vpop.f32.mrb[0].mxu0
        %v643 = vadd.f32 0.0, %v642
        %v644 = vpop.f32.mrb[0].mxu0
        %645 = vmatprep.mubr.f32.mxu0 0.0
        %646 = vmatmul.mubr.f32.gmra.mrb[0].mxu0 %v421
        %v647 = vpop.f32.mrb[0].mxu0
        %v648 = vadd.f32 0.0, %v647
        %v649 = vpop.f32.mrb[0].mxu0
        %650 = vmatprep.mubr.f32.mxu0 0.0
        %651 = vmatmul.mubr.f32.gmra.mrb[0].mxu0 %v424
        %v652 = vpop.f32.mrb[0].mxu0
        %v653 = vadd.f32 0.0, %v652
        %v654 = vpop.f32.mrb[0].mxu0
        %655 = vmatprep.mubr.f32.mxu0 0.0
        %656 = vmatmul.mubr.f32.gmra.mrb[0].mxu0 %v426
        %v657 = vpop.f32.mrb[0].mxu0
        %v658 = vadd.f32 0.0, %v657
        %v659 = vpop.f32.mrb[0].mxu0
        %660 = vmatprep.mubr.f32.mxu0 0.0
        %661 = vmatmul.mubr.f32.gmra.mrb[0].mxu0 %v429
        %v662 = vpop.f32.mrb[0].mxu0
        %v663 = vadd.f32 0.0, %v662
        %v664 = vpop.f32.mrb[0].mxu0
        %665 = vmatprep.mubr.f32.mxu0 0.0
        %666 = vmatmul.mubr.f32.gmra.mrb[0].mxu0 %v431
        %v667 = vpop.f32.mrb[0].mxu0
        %v668 = vadd.f32 0.0, %v667
        %v669 = vpop.f32.mrb[0].mxu0
        %670 = vmatprep.mubr.f32.mxu0 0.0
        %671 = vmatmul.mubr.f32.gmra.mrb[0].mxu0 %v434
        %v672 = vpop.f32.mrb[0].mxu0
        %v673 = vadd.f32 0.0, %v672
        %v674 = vpop.f32.mrb[0].mxu0
        %675 = vmatprep.mubr.f32.mxu0 0.0
        %676 = vmatmul.mubr.f32.gmra.mrb[0].mxu0 %v436
        %v677 = vpop.f32.mrb[0].mxu0
        %v678 = vadd.f32 0.0, %v677
        %v679 = vpop.f32.mrb[0].mxu0
        %680 = vmatprep.mubr.f32.mxu0 0.0
        %681 = vmatmul.mubr.f32.gmra.mrb[0].mxu0 %v439
        %v682 = vpop.f32.mrb[0].mxu0
        %v683 = vadd.f32 0.0, %v682
        %v684 = vpop.f32.mrb[0].mxu0
        %685 = vmatprep.mubr.f32.mxu0 0.0
        %686 = vmatmul.mubr.f32.gmra.mrb[0].mxu0 %v441
        %v687 = vpop.f32.mrb[0].mxu0
        %v688 = vadd.f32 0.0, %v687
        %v689 = vpop.f32.mrb[0].mxu0
        %690 = vmatprep.mubr.f32.mxu0 0.0
        %691 = vmatmul.mubr.f32.gmra.mrb[0].mxu0 %v444
        %v692 = vpop.f32.mrb[0].mxu0
        %v693 = vadd.f32 0.0, %v692
        %v694 = vpop.f32.mrb[0].mxu0
        %695 = vmatprep.mubr.f32.mxu0 0.0
        %696 = vmatmul.mubr.f32.gmra.mrb[0].mxu0 %v446
        %v697 = vpop.f32.mrb[0].mxu0
        %v698 = vadd.f32 0.0, %v697
        %v699 = vpop.f32.mrb[0].mxu0
        %700 = vmatprep.mubr.f32.mxu0 0.0
        %701 = vmatmul.mubr.f32.gmra.mrb[0].mxu0 %v449
        %v702 = vpop.f32.mrb[0].mxu0
        %v703 = vadd.f32 0.0, %v702
        %v704 = vpop.f32.mrb[0].mxu0
        %705 = vmatprep.mubr.f32.mxu0 0.0
        %706 = vmatmul.mubr.f32.gmra.mrb[0].mxu0 %v451
        %v707 = vpop.f32.mrb[0].mxu0
        %v708 = vadd.f32 0.0, %v707
        %v709 = vpop.f32.mrb[0].mxu0
        %710 = vmatprep.mubr.f32.mxu0 0.0
        %711 = vmatmul.mubr.f32.gmra.mrb[0].mxu0 %v454
        %v712 = vpop.f32.mrb[0].mxu0
        %v713 = vadd.f32 0.0, %v712
        %v714 = vpop.f32.mrb[0].mxu0
        %715 = vmatprep.mubr.f32.mxu0 0.0
        %716 = vmatmul.mubr.f32.gmra.mrb[0].mxu0 %v456
        %v717 = vpop.f32.mrb[0].mxu0
        %v718 = vadd.f32 0.0, %v717
        %v719 = vpop.f32.mrb[0].mxu0
        %720 = vmatprep.mubr.f32.mxu0 0.0
        %721 = vmatmul.mubr.f32.gmra.mrb[0].mxu0 %v459
        %v722 = vpop.f32.mrb[0].mxu0
        %v723 = vadd.f32 0.0, %v722
        %v724 = vpop.f32.mrb[0].mxu0
        %725 = vmatprep.mubr.f32.mxu0 0.0
        %726 = vmatmul.mubr.f32.gmra.mrb[0].mxu0 %v461
        %v727 = vpop.f32.mrb[0].mxu0
        %v728 = vadd.f32 0.0, %v727
        %v729 = vpop.f32.mrb[0].mxu0
        %730 = vmatprep.mubr.f32.mxu0 0.0
        %731 = vmatmul.mubr.f32.gmra.mrb[0].mxu0 %v464
        %v732 = vpop.f32.mrb[0].mxu0
        %v733 = vadd.f32 0.0, %v732
        %v734 = vpop.f32.mrb[0].mxu0
        %735 = vmatprep.mubr.f32.mxu0 0.0
        %736 = vmatmul.mubr.f32.gmra.mrb[0].mxu0 %v466
        %v737 = vpop.f32.mrb[0].mxu0
        %v738 = vadd.f32 0.0, %v737
        %v739 = vpop.f32.mrb[0].mxu0
        %740 = vdwg.mxu0
        %741 = vmatprep.subr.mxu0 0.0
        %742 = vmatpush1.msra.mxu0 %v322
        %743 = vmatprep.subr.mxu0 0.0
        %744 = vmatpush1.msra.mxu0 %v323
        %745 = vmatprep.subr.mxu0 0.0
        %746 = vmatpush1.msra.mxu0 %v324
        %747 = vmatprep.subr.mxu0 0.0
        %748 = vmatpush1.msra.mxu0 %v325
        %749 = vmatprep.subr.mxu0 0.0
        %750 = vmatpush1.msra.mxu0 %v326
        %751 = vmatprep.subr.mxu0 0.0
        %752 = vmatpush1.msra.mxu0 %v327
        %753 = vmatprep.subr.mxu0 0.0
        %754 = vmatpush1.msra.mxu0 %v328
        %755 = vmatprep.subr.mxu0 0.0
        %756 = vmatpush1.msra.mxu0 %v329
        %757 = vmatprep.subr.mxu0 0.0
        %758 = vmatpush1.msra.mxu0 %v330
        %759 = vmatprep.subr.mxu0 0.0
        %760 = vmatpush1.msra.mxu0 %v331
        %761 = vmatprep.subr.mxu0 0.0
        %762 = vmatpush1.msra.mxu0 %v332
        %763 = vmatprep.subr.mxu0 0.0
        %764 = vmatpush1.msra.mxu0 %v333
        %765 = vmatprep.subr.mxu0 0.0
        %766 = vmatpush1.msra.mxu0 %v334
        %767 = vmatprep.subr.mxu0 0.0
        %768 = vmatpush1.msra.mxu0 %v335
        %769 = vmatprep.subr.mxu0 0.0
        %770 = vmatpush1.msra.mxu0 %v336
        %771 = vmatprep.subr.mxu0 0.0
        %772 = vmatpush1.msra.mxu0 %v337
        %773 = vmatprep.subr.mxu0 0.0
        %774 = vmatpush1.msra.mxu0 0.0
        %775 = vmatprep.subr.mxu0 0.0
        %776 = vmatpush1.msra.mxu0 0.0
        %777 = vmatprep.subr.mxu0 0.0
        %778 = vmatpush1.msra.mxu0 0.0
        %779 = vmatprep.subr.mxu0 0.0
        %780 = vmatpush1.msra.mxu0 0.0
        %781 = vmatprep.subr.mxu0 0.0
        %782 = vmatpush1.msra.mxu0 0.0
        %783 = vmatprep.subr.mxu0 0.0
        %784 = vmatpush1.msra.mxu0 0.0
        %785 = vmatprep.subr.mxu0 0.0
        %786 = vmatpush1.msra.mxu0 0.0
        %787 = vmatprep.subr.mxu0 0.0
        %788 = vmatpush1.msra.mxu0 0.0
        %789 = vmatprep.subr.mxu0 0.0
        %790 = vmatpush1.msra.mxu0 0.0
        %791 = vmatprep.subr.mxu0 0.0
        %792 = vmatpush1.msra.mxu0 0.0
        %793 = vmatprep.subr.mxu0 0.0
        %794 = vmatpush1.msra.mxu0 0.0
        %795 = vmatprep.subr.mxu0 0.0
        %796 = vmatpush1.msra.mxu0 0.0
        %797 = vmatprep.subr.mxu0 0.0
        %798 = vmatpush1.msra.mxu0 0.0
        %799 = vmatprep.subr.mxu0 0.0
        %800 = vmatpush1.msra.mxu0 0.0
        %801 = vmatprep.subr.mxu0 0.0
        %802 = vmatpush1.msra.mxu0 0.0
        %803 = vmatprep.subr.mxu0 0.0
        %804 = vmatpush1.msra.mxu0 0.0
        %805 = vmatprep.mubr.f32.mxu0 0.0
        %806 = vmatmul.mubr.f32.gmra.mrb[0].mxu0 %v268
        %v807 = vpop.f32.mrb[0].mxu0
        %v808 = vadd.f32 %v583, %v807
        %v809 = vpop.f32.mrb[0].mxu0
        %810 = vmatprep.mubr.f32.mxu0 0.0
        %811 = vmatmul.mubr.f32.gmra.mrb[0].mxu0 %v269
        %v812 = vpop.f32.mrb[0].mxu0
        %v813 = vadd.f32 %v588, %v812
        %v814 = vpop.f32.mrb[0].mxu0
        %815 = vmatprep.mubr.f32.mxu0 0.0
        %816 = vmatmul.mubr.f32.gmra.mrb[0].mxu0 %v271
        %v817 = vpop.f32.mrb[0].mxu0
        %v818 = vadd.f32 %v593, %v817
        %v819 = vpop.f32.mrb[0].mxu0
        %820 = vmatprep.mubr.f32.mxu0 0.0
        %821 = vmatmul.mubr.f32.gmra.mrb[0].mxu0 %v272
        %v822 = vpop.f32.mrb[0].mxu0
        %v823 = vadd.f32 %v598, %v822
        %v824 = vpop.f32.mrb[0].mxu0
        %825 = vmatprep.mubr.f32.mxu0 0.0
        %826 = vmatmul.mubr.f32.gmra.mrb[0].mxu0 %v274
        %v827 = vpop.f32.mrb[0].mxu0
        %v828 = vadd.f32 %v603, %v827
        %v829 = vpop.f32.mrb[0].mxu0
        %830 = vmatprep.mubr.f32.mxu0 0.0
        %831 = vmatmul.mubr.f32.gmra.mrb[0].mxu0 %v275
        %v832 = vpop.f32.mrb[0].mxu0
        %v833 = vadd.f32 %v608, %v832
        %v834 = vpop.f32.mrb[0].mxu0
        %835 = vmatprep.mubr.f32.mxu0 0.0
        %836 = vmatmul.mubr.f32.gmra.mrb[0].mxu0 %v277
        %v837 = vpop.f32.mrb[0].mxu0
        %v838 = vadd.f32 %v613, %v837
        %v839 = vpop.f32.mrb[0].mxu0
        %840 = vmatprep.mubr.f32.mxu0 0.0
        %841 = vmatmul.mubr.f32.gmra.mrb[0].mxu0 %v278
        %v842 = vpop.f32.mrb[0].mxu0
        %v843 = vadd.f32 %v618, %v842
        %v844 = vpop.f32.mrb[0].mxu0
        %845 = vmatprep.mubr.f32.mxu0 0.0
        %846 = vmatmul.mubr.f32.gmra.mrb[0].mxu0 %v280
        %v847 = vpop.f32.mrb[0].mxu0
        %v848 = vadd.f32 %v623, %v847
        %v849 = vpop.f32.mrb[0].mxu0
        %850 = vmatprep.mubr.f32.mxu0 0.0
        %851 = vmatmul.mubr.f32.gmra.mrb[0].mxu0 %v281
        %v852 = vpop.f32.mrb[0].mxu0
        %v853 = vadd.f32 %v628, %v852
        %v854 = vpop.f32.mrb[0].mxu0
        %855 = vmatprep.mubr.f32.mxu0 0.0
        %856 = vmatmul.mubr.f32.gmra.mrb[0].mxu0 %v283
        %v857 = vpop.f32.mrb[0].mxu0
        %v858 = vadd.f32 %v633, %v857
        %v859 = vpop.f32.mrb[0].mxu0
        %860 = vmatprep.mubr.f32.mxu0 0.0
        %861 = vmatmul.mubr.f32.gmra.mrb[0].mxu0 %v284
        %v862 = vpop.f32.mrb[0].mxu0
        %v863 = vadd.f32 %v638, %v862
        %v864 = vpop.f32.mrb[0].mxu0
        %865 = vmatprep.mubr.f32.mxu0 0.0
        %866 = vmatmul.mubr.f32.gmra.mrb[0].mxu0 %v286
        %v867 = vpop.f32.mrb[0].mxu0
        %v868 = vadd.f32 %v643, %v867
        %v869 = vpop.f32.mrb[0].mxu0
        %870 = vmatprep.mubr.f32.mxu0 0.0
        %871 = vmatmul.mubr.f32.gmra.mrb[0].mxu0 %v287
        %v872 = vpop.f32.mrb[0].mxu0
        %v873 = vadd.f32 %v648, %v872
        %v874 = vpop.f32.mrb[0].mxu0
        %875 = vmatprep.mubr.f32.mxu0 0.0
        %876 = vmatmul.mubr.f32.gmra.mrb[0].mxu0 %v289
        %v877 = vpop.f32.mrb[0].mxu0
        %v878 = vadd.f32 %v653, %v877
        %v879 = vpop.f32.mrb[0].mxu0
        %880 = vmatprep.mubr.f32.mxu0 0.0
        %881 = vmatmul.mubr.f32.gmra.mrb[0].mxu0 %v290
        %v882 = vpop.f32.mrb[0].mxu0
        %v883 = vadd.f32 %v658, %v882
        %v884 = vpop.f32.mrb[0].mxu0
        %885 = vmatprep.mubr.f32.mxu0 0.0
        %886 = vmatmul.mubr.f32.gmra.mrb[0].mxu0 %v292
        %v887 = vpop.f32.mrb[0].mxu0
        %v888 = vadd.f32 %v663, %v887
        %v889 = vpop.f32.mrb[0].mxu0
        %890 = vmatprep.mubr.f32.mxu0 0.0
        %891 = vmatmul.mubr.f32.gmra.mrb[0].mxu0 %v293
        %v892 = vpop.f32.mrb[0].mxu0
        %v893 = vadd.f32 %v668, %v892
        %v894 = vpop.f32.mrb[0].mxu0
        %895 = vmatprep.mubr.f32.mxu0 0.0
        %896 = vmatmul.mubr.f32.gmra.mrb[0].mxu0 %v295
        %v897 = vpop.f32.mrb[0].mxu0
        %v898 = vadd.f32 %v673, %v897
        %v899 = vpop.f32.mrb[0].mxu0
        %900 = vmatprep.mubr.f32.mxu0 0.0
        %901 = vmatmul.mubr.f32.gmra.mrb[0].mxu0 %v296
        %v902 = vpop.f32.mrb[0].mxu0
        %v903 = vadd.f32 %v678, %v902
        %v904 = vpop.f32.mrb[0].mxu0
        %905 = vmatprep.mubr.f32.mxu0 0.0
        %906 = vmatmul.mubr.f32.gmra.mrb[0].mxu0 %v298
        %v907 = vpop.f32.mrb[0].mxu0
        %v908 = vadd.f32 %v683, %v907
        %v909 = vpop.f32.mrb[0].mxu0
        %910 = vmatprep.mubr.f32.mxu0 0.0
        %911 = vmatmul.mubr.f32.gmra.mrb[0].mxu0 %v299
        %v912 = vpop.f32.mrb[0].mxu0
        %v913 = vadd.f32 %v688, %v912
        %v914 = vpop.f32.mrb[0].mxu0
        %915 = vmatprep.mubr.f32.mxu0 0.0
        %916 = vmatmul.mubr.f32.gmra.mrb[0].mxu0 %v301
        %v917 = vpop.f32.mrb[0].mxu0
        %v918 = vadd.f32 %v693, %v917
        %v919 = vpop.f32.mrb[0].mxu0
        %920 = vmatprep.mubr.f32.mxu0 0.0
        %921 = vmatmul.mubr.f32.gmra.mrb[0].mxu0 %v302
        %v922 = vpop.f32.mrb[0].mxu0
        %v923 = vadd.f32 %v698, %v922
        %v924 = vpop.f32.mrb[0].mxu0
        %925 = vmatprep.mubr.f32.mxu0 0.0
        %926 = vmatmul.mubr.f32.gmra.mrb[0].mxu0 %v304
        %v927 = vpop.f32.mrb[0].mxu0
        %v928 = vadd.f32 %v703, %v927
        %v929 = vpop.f32.mrb[0].mxu0
        %930 = vmatprep.mubr.f32.mxu0 0.0
        %931 = vmatmul.mubr.f32.gmra.mrb[0].mxu0 %v305
        %v932 = vpop.f32.mrb[0].mxu0
        %v933 = vadd.f32 %v708, %v932
        %v934 = vpop.f32.mrb[0].mxu0
        %935 = vmatprep.mubr.f32.mxu0 0.0
        %936 = vmatmul.mubr.f32.gmra.mrb[0].mxu0 %v307
        %v937 = vpop.f32.mrb[0].mxu0
        %v938 = vadd.f32 %v713, %v937
        %v939 = vpop.f32.mrb[0].mxu0
        %940 = vmatprep.mubr.f32.mxu0 0.0
        %941 = vmatmul.mubr.f32.gmra.mrb[0].mxu0 %v308
        %v942 = vpop.f32.mrb[0].mxu0
        %v943 = vadd.f32 %v718, %v942
        %v944 = vpop.f32.mrb[0].mxu0
        %945 = vmatprep.mubr.f32.mxu0 0.0
        %946 = vmatmul.mubr.f32.gmra.mrb[0].mxu0 %v310
        %v947 = vpop.f32.mrb[0].mxu0
        %v948 = vadd.f32 %v723, %v947
        %v949 = vpop.f32.mrb[0].mxu0
        %950 = vmatprep.mubr.f32.mxu0 0.0
        %951 = vmatmul.mubr.f32.gmra.mrb[0].mxu0 %v311
        %v952 = vpop.f32.mrb[0].mxu0
        %v953 = vadd.f32 %v728, %v952
        %v954 = vpop.f32.mrb[0].mxu0
        %955 = vmatprep.mubr.f32.mxu0 0.0
        %956 = vmatmul.mubr.f32.gmra.mrb[0].mxu0 %v313
        %v957 = vpop.f32.mrb[0].mxu0
        %v958 = vadd.f32 %v733, %v957
        %v959 = vpop.f32.mrb[0].mxu0
        %960 = vmatprep.mubr.f32.mxu0 0.0
        %961 = vmatmul.mubr.f32.gmra.mrb[0].mxu0 %v314
        %v962 = vpop.f32.mrb[0].mxu0
        %v963 = vadd.f32 %v738, %v962
        %v964 = vpop.f32.mrb[0].mxu0
        %965 = vdwg.mxu0
        %vm966 = vcmask 1045504
        %v967 = vrot.slane %v268, 2
        %v968 = vrot.slane %v269, 2
        %v969 = vsel %vm966, %v967, %v968
        %v970 = vrot.slane %v270, 2
        %v971 = vsel %vm966, %v968, %v970
        %v972 = vrot.slane %v271, 2
        %v973 = vrot.slane %v272, 2
        %v974 = vsel %vm966, %v972, %v973
        %v975 = vrot.slane %v273, 2
        %v976 = vsel %vm966, %v973, %v975
        %v977 = vrot.slane %v274, 2
        %v978 = vrot.slane %v275, 2
        %v979 = vsel %vm966, %v977, %v978
        %v980 = vrot.slane %v276, 2
        %v981 = vsel %vm966, %v978, %v980
        %v982 = vrot.slane %v277, 2
        %v983 = vrot.slane %v278, 2
        %v984 = vsel %vm966, %v982, %v983
        %v985 = vrot.slane %v279, 2
        %v986 = vsel %vm966, %v983, %v985
        %v987 = vrot.slane %v280, 2
        %v988 = vrot.slane %v281, 2
        %v989 = vsel %vm966, %v987, %v988
        %v990 = vrot.slane %v282, 2
        %v991 = vsel %vm966, %v988, %v990
        %v992 = vrot.slane %v283, 2
        %v993 = vrot.slane %v284, 2
        %v994 = vsel %vm966, %v992, %v993
        %v995 = vrot.slane %v285, 2
        %v996 = vsel %vm966, %v993, %v995
        %v997 = vrot.slane %v286, 2
        %v998 = vrot.slane %v287, 2
        %v999 = vsel %vm966, %v997, %v998
        %v1000 = vrot.slane %v288, 2
        %v1001 = vsel %vm966, %v998, %v1000
        %v1002 = vrot.slane %v289, 2
        %v1003 = vrot.slane %v290, 2
        %v1004 = vsel %vm966, %v1002, %v1003
        %v1005 = vrot.slane %v291, 2
        %v1006 = vsel %vm966, %v1003, %v1005
        %v1007 = vrot.slane %v292, 2
        %v1008 = vrot.slane %v293, 2
        %v1009 = vsel %vm966, %v1007, %v1008
        %v1010 = vrot.slane %v294, 2
        %v1011 = vsel %vm966, %v1008, %v1010
        %v1012 = vrot.slane %v295, 2
        %v1013 = vrot.slane %v296, 2
        %v1014 = vsel %vm966, %v1012, %v1013
        %v1015 = vrot.slane %v297, 2
        %v1016 = vsel %vm966, %v1013, %v1015
        %v1017 = vrot.slane %v298, 2
        %v1018 = vrot.slane %v299, 2
        %v1019 = vsel %vm966, %v1017, %v1018
        %v1020 = vrot.slane %v300, 2
        %v1021 = vsel %vm966, %v1018, %v1020
        %v1022 = vrot.slane %v301, 2
        %v1023 = vrot.slane %v302, 2
        %v1024 = vsel %vm966, %v1022, %v1023
        %v1025 = vrot.slane %v303, 2
        %v1026 = vsel %vm966, %v1023, %v1025
        %v1027 = vrot.slane %v304, 2
        %v1028 = vrot.slane %v305, 2
        %v1029 = vsel %vm966, %v1027, %v1028
        %v1030 = vrot.slane %v306, 2
        %v1031 = vsel %vm966, %v1028, %v1030
        %v1032 = vrot.slane %v307, 2
        %v1033 = vrot.slane %v308, 2
        %v1034 = vsel %vm966, %v1032, %v1033
        %v1035 = vrot.slane %v309, 2
        %v1036 = vsel %vm966, %v1033, %v1035
        %v1037 = vrot.slane %v310, 2
        %v1038 = vrot.slane %v311, 2
        %v1039 = vsel %vm966, %v1037, %v1038
        %v1040 = vrot.slane %v312, 2
        %v1041 = vsel %vm966, %v1038, %v1040
        %v1042 = vrot.slane %v313, 2
        %v1043 = vrot.slane %v314, 2
        %v1044 = vsel %vm966, %v1042, %v1043
        %v1045 = vrot.slane %v315, 2
        %v1046 = vsel %vm966, %v1043, %v1045
        %s1079 = scalar_lea.vmem %s1, 256
        %v1080 = vld [vmem:[%s1079] sm:$0xff]
        %v1081 = vld [vmem:[%s1079 + $0x8] sm:$0xff]
        %v1082 = vld [vmem:[%s1079 + $0x10] sm:$0xff]
        %v1083 = vld [vmem:[%s1079 + $0x18] sm:$0xff]
        %v1084 = vld [vmem:[%s1079 + $0x20] sm:$0xff]
        %v1085 = vld [vmem:[%s1079 + $0x28] sm:$0xff]
        %v1086 = vld [vmem:[%s1079 + $0x30] sm:$0xff]
        %v1087 = vld [vmem:[%s1079 + $0x38] sm:$0xff]
        %v1088 = vld [vmem:[%s1079 + $0x40] sm:$0xff]
        %v1089 = vld [vmem:[%s1079 + $0x48] sm:$0xff]
        %v1090 = vld [vmem:[%s1079 + $0x50] sm:$0xff]
        %v1091 = vld [vmem:[%s1079 + $0x58] sm:$0xff]
        %v1092 = vld [vmem:[%s1079 + $0x60] sm:$0xff]
        %v1093 = vld [vmem:[%s1079 + $0x68] sm:$0xff]
        %v1094 = vld [vmem:[%s1079 + $0x70] sm:$0xff]
        %v1095 = vld [vmem:[%s1079 + $0x78] sm:$0xff]
        %1096 = vmatprep.subr.mxu0 0.0
        %1097 = vmatpush1.msra.mxu0 %v1080
        %1098 = vmatprep.subr.mxu0 0.0
        %1099 = vmatpush1.msra.mxu0 %v1081
        %1100 = vmatprep.subr.mxu0 0.0
        %1101 = vmatpush1.msra.mxu0 %v1082
        %1102 = vmatprep.subr.mxu0 0.0
        %1103 = vmatpush1.msra.mxu0 %v1083
        %1104 = vmatprep.subr.mxu0 0.0
        %1105 = vmatpush1.msra.mxu0 %v1084
        %1106 = vmatprep.subr.mxu0 0.0
        %1107 = vmatpush1.msra.mxu0 %v1085
        %1108 = vmatprep.subr.mxu0 0.0
        %1109 = vmatpush1.msra.mxu0 %v1086
        %1110 = vmatprep.subr.mxu0 0.0
        %1111 = vmatpush1.msra.mxu0 %v1087
        %1112 = vmatprep.subr.mxu0 0.0
        %1113 = vmatpush1.msra.mxu0 %v1088
        %1114 = vmatprep.subr.mxu0 0.0
        %1115 = vmatpush1.msra.mxu0 %v1089
        %1116 = vmatprep.subr.mxu0 0.0
        %1117 = vmatpush1.msra.mxu0 %v1090
        %1118 = vmatprep.subr.mxu0 0.0
        %1119 = vmatpush1.msra.mxu0 %v1091
        %1120 = vmatprep.subr.mxu0 0.0
        %1121 = vmatpush1.msra.mxu0 %v1092
        %1122 = vmatprep.subr.mxu0 0.0
        %1123 = vmatpush1.msra.mxu0 %v1093
        %1124 = vmatprep.subr.mxu0 0.0
        %1125 = vmatpush1.msra.mxu0 %v1094
        %1126 = vmatprep.subr.mxu0 0.0
        %1127 = vmatpush1.msra.mxu0 %v1095
        %1128 = vmatprep.subr.mxu0 0.0
        %1129 = vmatpush1.msra.mxu0 0.0
        %1130 = vmatprep.subr.mxu0 0.0
        %1131 = vmatpush1.msra.mxu0 0.0
        %1132 = vmatprep.subr.mxu0 0.0
        %1133 = vmatpush1.msra.mxu0 0.0
        %1134 = vmatprep.subr.mxu0 0.0
        %1135 = vmatpush1.msra.mxu0 0.0
        %1136 = vmatprep.subr.mxu0 0.0
        %1137 = vmatpush1.msra.mxu0 0.0
        %1138 = vmatprep.subr.mxu0 0.0
        %1139 = vmatpush1.msra.mxu0 0.0
        %1140 = vmatprep.subr.mxu0 0.0
        %1141 = vmatpush1.msra.mxu0 0.0
        %1142 = vmatprep.subr.mxu0 0.0
        %1143 = vmatpush1.msra.mxu0 0.0
        %1144 = vmatprep.subr.mxu0 0.0
        %1145 = vmatpush1.msra.mxu0 0.0
        %1146 = vmatprep.subr.mxu0 0.0
        %1147 = vmatpush1.msra.mxu0 0.0
        %1148 = vmatprep.subr.mxu0 0.0
        %1149 = vmatpush1.msra.mxu0 0.0
        %1150 = vmatprep.subr.mxu0 0.0
        %1151 = vmatpush1.msra.mxu0 0.0
        %1152 = vmatprep.subr.mxu0 0.0
        %1153 = vmatpush1.msra.mxu0 0.0
        %1154 = vmatprep.subr.mxu0 0.0
        %1155 = vmatpush1.msra.mxu0 0.0
        %1156 = vmatprep.subr.mxu0 0.0
        %1157 = vmatpush1.msra.mxu0 0.0
        %1158 = vmatprep.subr.mxu0 0.0
        %1159 = vmatpush1.msra.mxu0 0.0
        %1160 = vmatprep.mubr.f32.mxu0 0.0
        %1161 = vmatmul.mubr.f32.gmra.mrb[0].mxu0 %v969
        %v1162 = vpop.f32.mrb[0].mxu0
        %v1163 = vadd.f32 0.0, %v1162
        %v1164 = vpop.f32.mrb[0].mxu0
        %1165 = vmatprep.mubr.f32.mxu0 0.0
        %1166 = vmatmul.mubr.f32.gmra.mrb[0].mxu0 %v971
        %v1167 = vpop.f32.mrb[0].mxu0
        %v1168 = vadd.f32 0.0, %v1167
        %v1169 = vpop.f32.mrb[0].mxu0
        %1170 = vmatprep.mubr.f32.mxu0 0.0
        %1171 = vmatmul.mubr.f32.gmra.mrb[0].mxu0 %v974
        %v1172 = vpop.f32.mrb[0].mxu0
        %v1173 = vadd.f32 0.0, %v1172
        %v1174 = vpop.f32.mrb[0].mxu0
        %1175 = vmatprep.mubr.f32.mxu0 0.0
        %1176 = vmatmul.mubr.f32.gmra.mrb[0].mxu0 %v976
        %v1177 = vpop.f32.mrb[0].mxu0
        %v1178 = vadd.f32 0.0, %v1177
        %v1179 = vpop.f32.mrb[0].mxu0
        %1180 = vmatprep.mubr.f32.mxu0 0.0
        %1181 = vmatmul.mubr.f32.gmra.mrb[0].mxu0 %v979
        %v1182 = vpop.f32.mrb[0].mxu0
        %v1183 = vadd.f32 0.0, %v1182
        %v1184 = vpop.f32.mrb[0].mxu0
        %1185 = vmatprep.mubr.f32.mxu0 0.0
        %1186 = vmatmul.mubr.f32.gmra.mrb[0].mxu0 %v981
        %v1187 = vpop.f32.mrb[0].mxu0
        %v1188 = vadd.f32 0.0, %v1187
        %v1189 = vpop.f32.mrb[0].mxu0
        %1190 = vmatprep.mubr.f32.mxu0 0.0
        %1191 = vmatmul.mubr.f32.gmra.mrb[0].mxu0 %v984
        %v1192 = vpop.f32.mrb[0].mxu0
        %v1193 = vadd.f32 0.0, %v1192
        %v1194 = vpop.f32.mrb[0].mxu0
        %1195 = vmatprep.mubr.f32.mxu0 0.0
        %1196 = vmatmul.mubr.f32.gmra.mrb[0].mxu0 %v986
        %v1197 = vpop.f32.mrb[0].mxu0
        %v1198 = vadd.f32 0.0, %v1197
        %v1199 = vpop.f32.mrb[0].mxu0
        %1200 = vmatprep.mubr.f32.mxu0 0.0
        %1201 = vmatmul.mubr.f32.gmra.mrb[0].mxu0 %v989
        %v1202 = vpop.f32.mrb[0].mxu0
        %v1203 = vadd.f32 0.0, %v1202
        %v1204 = vpop.f32.mrb[0].mxu0
        %1205 = vmatprep.mubr.f32.mxu0 0.0
        %1206 = vmatmul.mubr.f32.gmra.mrb[0].mxu0 %v991
        %v1207 = vpop.f32.mrb[0].mxu0
        %v1208 = vadd.f32 0.0, %v1207
        %v1209 = vpop.f32.mrb[0].mxu0
        %1210 = vmatprep.mubr.f32.mxu0 0.0
        %1211 = vmatmul.mubr.f32.gmra.mrb[0].mxu0 %v994
        %v1212 = vpop.f32.mrb[0].mxu0
        %v1213 = vadd.f32 0.0, %v1212
        %v1214 = vpop.f32.mrb[0].mxu0
        %1215 = vmatprep.mubr.f32.mxu0 0.0
        %1216 = vmatmul.mubr.f32.gmra.mrb[0].mxu0 %v996
        %v1217 = vpop.f32.mrb[0].mxu0
        %v1218 = vadd.f32 0.0, %v1217
        %v1219 = vpop.f32.mrb[0].mxu0
        %1220 = vmatprep.mubr.f32.mxu0 0.0
        %1221 = vmatmul.mubr.f32.gmra.mrb[0].mxu0 %v999
        %v1222 = vpop.f32.mrb[0].mxu0
        %v1223 = vadd.f32 0.0, %v1222
        %v1224 = vpop.f32.mrb[0].mxu0
        %1225 = vmatprep.mubr.f32.mxu0 0.0
        %1226 = vmatmul.mubr.f32.gmra.mrb[0].mxu0 %v1001
        %v1227 = vpop.f32.mrb[0].mxu0
        %v1228 = vadd.f32 0.0, %v1227
        %v1229 = vpop.f32.mrb[0].mxu0
        %1230 = vmatprep.mubr.f32.mxu0 0.0
        %1231 = vmatmul.mubr.f32.gmra.mrb[0].mxu0 %v1004
        %v1232 = vpop.f32.mrb[0].mxu0
        %v1233 = vadd.f32 0.0, %v1232
        %v1234 = vpop.f32.mrb[0].mxu0
        %1235 = vmatprep.mubr.f32.mxu0 0.0
        %1236 = vmatmul.mubr.f32.gmra.mrb[0].mxu0 %v1006
        %v1237 = vpop.f32.mrb[0].mxu0
        %v1238 = vadd.f32 0.0, %v1237
        %v1239 = vpop.f32.mrb[0].mxu0
        %1240 = vmatprep.mubr.f32.mxu0 0.0
        %1241 = vmatmul.mubr.f32.gmra.mrb[0].mxu0 %v1009
        %v1242 = vpop.f32.mrb[0].mxu0
        %v1243 = vadd.f32 0.0, %v1242
        %v1244 = vpop.f32.mrb[0].mxu0
        %1245 = vmatprep.mubr.f32.mxu0 0.0
        %1246 = vmatmul.mubr.f32.gmra.mrb[0].mxu0 %v1011
        %v1247 = vpop.f32.mrb[0].mxu0
        %v1248 = vadd.f32 0.0, %v1247
        %v1249 = vpop.f32.mrb[0].mxu0
        %1250 = vmatprep.mubr.f32.mxu0 0.0
        %1251 = vmatmul.mubr.f32.gmra.mrb[0].mxu0 %v1014
        %v1252 = vpop.f32.mrb[0].mxu0
        %v1253 = vadd.f32 0.0, %v1252
        %v1254 = vpop.f32.mrb[0].mxu0
        %1255 = vmatprep.mubr.f32.mxu0 0.0
        %1256 = vmatmul.mubr.f32.gmra.mrb[0].mxu0 %v1016
        %v1257 = vpop.f32.mrb[0].mxu0
        %v1258 = vadd.f32 0.0, %v1257
        %v1259 = vpop.f32.mrb[0].mxu0
        %1260 = vmatprep.mubr.f32.mxu0 0.0
        %1261 = vmatmul.mubr.f32.gmra.mrb[0].mxu0 %v1019
        %v1262 = vpop.f32.mrb[0].mxu0
        %v1263 = vadd.f32 0.0, %v1262
        %v1264 = vpop.f32.mrb[0].mxu0
        %1265 = vmatprep.mubr.f32.mxu0 0.0
        %1266 = vmatmul.mubr.f32.gmra.mrb[0].mxu0 %v1021
        %v1267 = vpop.f32.mrb[0].mxu0
        %v1268 = vadd.f32 0.0, %v1267
        %v1269 = vpop.f32.mrb[0].mxu0
        %1270 = vmatprep.mubr.f32.mxu0 0.0
        %1271 = vmatmul.mubr.f32.gmra.mrb[0].mxu0 %v1024
        %v1272 = vpop.f32.mrb[0].mxu0
        %v1273 = vadd.f32 0.0, %v1272
        %v1274 = vpop.f32.mrb[0].mxu0
        %1275 = vmatprep.mubr.f32.mxu0 0.0
        %1276 = vmatmul.mubr.f32.gmra.mrb[0].mxu0 %v1026
        %v1277 = vpop.f32.mrb[0].mxu0
        %v1278 = vadd.f32 0.0, %v1277
        %v1279 = vpop.f32.mrb[0].mxu0
        %1280 = vmatprep.mubr.f32.mxu0 0.0
        %1281 = vmatmul.mubr.f32.gmra.mrb[0].mxu0 %v1029
        %v1282 = vpop.f32.mrb[0].mxu0
        %v1283 = vadd.f32 0.0, %v1282
        %v1284 = vpop.f32.mrb[0].mxu0
        %1285 = vmatprep.mubr.f32.mxu0 0.0
        %1286 = vmatmul.mubr.f32.gmra.mrb[0].mxu0 %v1031
        %v1287 = vpop.f32.mrb[0].mxu0
        %v1288 = vadd.f32 0.0, %v1287
        %v1289 = vpop.f32.mrb[0].mxu0
        %1290 = vmatprep.mubr.f32.mxu0 0.0
        %1291 = vmatmul.mubr.f32.gmra.mrb[0].mxu0 %v1034
        %v1292 = vpop.f32.mrb[0].mxu0
        %v1293 = vadd.f32 0.0, %v1292
        %v1294 = vpop.f32.mrb[0].mxu0
        %1295 = vmatprep.mubr.f32.mxu0 0.0
        %1296 = vmatmul.mubr.f32.gmra.mrb[0].mxu0 %v1036
        %v1297 = vpop.f32.mrb[0].mxu0
        %v1298 = vadd.f32 0.0, %v1297
        %v1299 = vpop.f32.mrb[0].mxu0
        %1300 = vmatprep.mubr.f32.mxu0 0.0
        %1301 = vmatmul.mubr.f32.gmra.mrb[0].mxu0 %v1039
        %v1302 = vpop.f32.mrb[0].mxu0
        %v1303 = vadd.f32 0.0, %v1302
        %v1304 = vpop.f32.mrb[0].mxu0
        %1305 = vmatprep.mubr.f32.mxu0 0.0
        %1306 = vmatmul.mubr.f32.gmra.mrb[0].mxu0 %v1041
        %v1307 = vpop.f32.mrb[0].mxu0
        %v1308 = vadd.f32 0.0, %v1307
        %v1309 = vpop.f32.mrb[0].mxu0
        %1310 = vmatprep.mubr.f32.mxu0 0.0
        %1311 = vmatmul.mubr.f32.gmra.mrb[0].mxu0 %v1044
        %v1312 = vpop.f32.mrb[0].mxu0
        %v1313 = vadd.f32 0.0, %v1312
        %v1314 = vpop.f32.mrb[0].mxu0
        %1315 = vmatprep.mubr.f32.mxu0 0.0
        %1316 = vmatmul.mubr.f32.gmra.mrb[0].mxu0 %v1046
        %v1317 = vpop.f32.mrb[0].mxu0
        %v1318 = vadd.f32 0.0, %v1317
        %v1319 = vpop.f32.mrb[0].mxu0
        %1320 = vdwg.mxu0
        %v1321 = vadd.f32 %v808, %v1163
        %v1322 = vadd.f32 %v813, %v1168
        %v1323 = vadd.f32 %v818, %v1173
        %v1324 = vadd.f32 %v823, %v1178
        %v1325 = vadd.f32 %v828, %v1183
        %v1326 = vadd.f32 %v833, %v1188
        %v1327 = vadd.f32 %v838, %v1193
        %v1328 = vadd.f32 %v843, %v1198
        %v1329 = vadd.f32 %v848, %v1203
        %v1330 = vadd.f32 %v853, %v1208
        %v1331 = vadd.f32 %v858, %v1213
        %v1332 = vadd.f32 %v863, %v1218
        %v1333 = vadd.f32 %v868, %v1223
        %v1334 = vadd.f32 %v873, %v1228
        %v1335 = vadd.f32 %v878, %v1233
        %v1336 = vadd.f32 %v883, %v1238
        %v1337 = vadd.f32 %v888, %v1243
        %v1338 = vadd.f32 %v893, %v1248
        %v1339 = vadd.f32 %v898, %v1253
        %v1340 = vadd.f32 %v903, %v1258
        %v1341 = vadd.f32 %v908, %v1263
        %v1342 = vadd.f32 %v913, %v1268
        %v1343 = vadd.f32 %v918, %v1273
        %v1344 = vadd.f32 %v923, %v1278
        %v1345 = vadd.f32 %v928, %v1283
        %v1346 = vadd.f32 %v933, %v1288
        %v1347 = vadd.f32 %v938, %v1293
        %v1348 = vadd.f32 %v943, %v1298
        %v1349 = vadd.f32 %v948, %v1303
        %v1350 = vadd.f32 %v953, %v1308
        %v1351 = vadd.f32 %v958, %v1313
        %v1352 = vadd.f32 %v963, %v1318
        %s1353 = scalar_lea.vmem %s1, 384
        %v1354 = vld [vmem:[%s1353] sm:$0xff]
        %v1355 = vld [vmem:[%s1353 + $0x8] sm:$0xff]
        %v1356 = vld [vmem:[%s1353 + $0x10] sm:$0xff]
        %v1357 = vld [vmem:[%s1353 + $0x18] sm:$0xff]
        %v1358 = vld [vmem:[%s1353 + $0x20] sm:$0xff]
        %v1359 = vld [vmem:[%s1353 + $0x28] sm:$0xff]
        %v1360 = vld [vmem:[%s1353 + $0x30] sm:$0xff]
        %v1361 = vld [vmem:[%s1353 + $0x38] sm:$0xff]
        %v1362 = vld [vmem:[%s1353 + $0x40] sm:$0xff]
        %v1363 = vld [vmem:[%s1353 + $0x48] sm:$0xff]
        %v1364 = vld [vmem:[%s1353 + $0x50] sm:$0xff]
        %v1365 = vld [vmem:[%s1353 + $0x58] sm:$0xff]
        %v1366 = vld [vmem:[%s1353 + $0x60] sm:$0xff]
        %v1367 = vld [vmem:[%s1353 + $0x68] sm:$0xff]
        %v1368 = vld [vmem:[%s1353 + $0x70] sm:$0xff]
        %v1369 = vld [vmem:[%s1353 + $0x78] sm:$0xff]
        %1370 = vmatprep.subr.mxu0 0.0
        %1371 = vmatpush1.msra.mxu0 %v1354
        %1372 = vmatprep.subr.mxu0 0.0
        %1373 = vmatpush1.msra.mxu0 %v1355
        %1374 = vmatprep.subr.mxu0 0.0
        %1375 = vmatpush1.msra.mxu0 %v1356
        %1376 = vmatprep.subr.mxu0 0.0
        %1377 = vmatpush1.msra.mxu0 %v1357
        %1378 = vmatprep.subr.mxu0 0.0
        %1379 = vmatpush1.msra.mxu0 %v1358
        %1380 = vmatprep.subr.mxu0 0.0
        %1381 = vmatpush1.msra.mxu0 %v1359
        %1382 = vmatprep.subr.mxu0 0.0
        %1383 = vmatpush1.msra.mxu0 %v1360
        %1384 = vmatprep.subr.mxu0 0.0
        %1385 = vmatpush1.msra.mxu0 %v1361
        %1386 = vmatprep.subr.mxu0 0.0
        %1387 = vmatpush1.msra.mxu0 %v1362
        %1388 = vmatprep.subr.mxu0 0.0
        %1389 = vmatpush1.msra.mxu0 %v1363
        %1390 = vmatprep.subr.mxu0 0.0
        %1391 = vmatpush1.msra.mxu0 %v1364
        %1392 = vmatprep.subr.mxu0 0.0
        %1393 = vmatpush1.msra.mxu0 %v1365
        %1394 = vmatprep.subr.mxu0 0.0
        %1395 = vmatpush1.msra.mxu0 %v1366
        %1396 = vmatprep.subr.mxu0 0.0
        %1397 = vmatpush1.msra.mxu0 %v1367
        %1398 = vmatprep.subr.mxu0 0.0
        %1399 = vmatpush1.msra.mxu0 %v1368
        %1400 = vmatprep.subr.mxu0 0.0
        %1401 = vmatpush1.msra.mxu0 %v1369
        %1402 = vmatprep.subr.mxu0 0.0
        %1403 = vmatpush1.msra.mxu0 0.0
        %1404 = vmatprep.subr.mxu0 0.0
        %1405 = vmatpush1.msra.mxu0 0.0
        %1406 = vmatprep.subr.mxu0 0.0
        %1407 = vmatpush1.msra.mxu0 0.0
        %1408 = vmatprep.subr.mxu0 0.0
        %1409 = vmatpush1.msra.mxu0 0.0
        %1410 = vmatprep.subr.mxu0 0.0
        %1411 = vmatpush1.msra.mxu0 0.0
        %1412 = vmatprep.subr.mxu0 0.0
        %1413 = vmatpush1.msra.mxu0 0.0
        %1414 = vmatprep.subr.mxu0 0.0
        %1415 = vmatpush1.msra.mxu0 0.0
        %1416 = vmatprep.subr.mxu0 0.0
        %1417 = vmatpush1.msra.mxu0 0.0
        %1418 = vmatprep.subr.mxu0 0.0
        %1419 = vmatpush1.msra.mxu0 0.0
        %1420 = vmatprep.subr.mxu0 0.0
        %1421 = vmatpush1.msra.mxu0 0.0
        %1422 = vmatprep.subr.mxu0 0.0
        %1423 = vmatpush1.msra.mxu0 0.0
        %1424 = vmatprep.subr.mxu0 0.0
        %1425 = vmatpush1.msra.mxu0 0.0
        %1426 = vmatprep.subr.mxu0 0.0
        %1427 = vmatpush1.msra.mxu0 0.0
        %1428 = vmatprep.subr.mxu0 0.0
        %1429 = vmatpush1.msra.mxu0 0.0
        %1430 = vmatprep.subr.mxu0 0.0
        %1431 = vmatpush1.msra.mxu0 0.0
        %1432 = vmatprep.subr.mxu0 0.0
        %1433 = vmatpush1.msra.mxu0 0.0
        %1434 = vmatprep.mubr.f32.mxu0 0.0
        %1435 = vmatmul.mubr.f32.gmra.mrb[0].mxu0 %v271
        %v1436 = vpop.f32.mrb[0].mxu0
        %v1437 = vadd.f32 0.0, %v1436
        %v1438 = vpop.f32.mrb[0].mxu0
        %1439 = vmatprep.mubr.f32.mxu0 0.0
        %1440 = vmatmul.mubr.f32.gmra.mrb[0].mxu0 %v272
        %v1441 = vpop.f32.mrb[0].mxu0
        %v1442 = vadd.f32 0.0, %v1441
        %v1443 = vpop.f32.mrb[0].mxu0
        %1444 = vmatprep.mubr.f32.mxu0 0.0
        %1445 = vmatmul.mubr.f32.gmra.mrb[0].mxu0 %v274
        %v1446 = vpop.f32.mrb[0].mxu0
        %v1447 = vadd.f32 0.0, %v1446
        %v1448 = vpop.f32.mrb[0].mxu0
        %1449 = vmatprep.mubr.f32.mxu0 0.0
        %1450 = vmatmul.mubr.f32.gmra.mrb[0].mxu0 %v275
        %v1451 = vpop.f32.mrb[0].mxu0
        %v1452 = vadd.f32 0.0, %v1451
        %v1453 = vpop.f32.mrb[0].mxu0
        %1454 = vmatprep.mubr.f32.mxu0 0.0
        %1455 = vmatmul.mubr.f32.gmra.mrb[0].mxu0 %v277
        %v1456 = vpop.f32.mrb[0].mxu0
        %v1457 = vadd.f32 0.0, %v1456
        %v1458 = vpop.f32.mrb[0].mxu0
        %1459 = vmatprep.mubr.f32.mxu0 0.0
        %1460 = vmatmul.mubr.f32.gmra.mrb[0].mxu0 %v278
        %v1461 = vpop.f32.mrb[0].mxu0
        %v1462 = vadd.f32 0.0, %v1461
        %v1463 = vpop.f32.mrb[0].mxu0
        %1464 = vmatprep.mubr.f32.mxu0 0.0
        %1465 = vmatmul.mubr.f32.gmra.mrb[0].mxu0 %v280
        %v1466 = vpop.f32.mrb[0].mxu0
        %v1467 = vadd.f32 0.0, %v1466
        %v1468 = vpop.f32.mrb[0].mxu0
        %1469 = vmatprep.mubr.f32.mxu0 0.0
        %1470 = vmatmul.mubr.f32.gmra.mrb[0].mxu0 %v281
        %v1471 = vpop.f32.mrb[0].mxu0
        %v1472 = vadd.f32 0.0, %v1471
        %v1473 = vpop.f32.mrb[0].mxu0
        %1474 = vmatprep.mubr.f32.mxu0 0.0
        %1475 = vmatmul.mubr.f32.gmra.mrb[0].mxu0 %v283
        %v1476 = vpop.f32.mrb[0].mxu0
        %v1477 = vadd.f32 0.0, %v1476
        %v1478 = vpop.f32.mrb[0].mxu0
        %1479 = vmatprep.mubr.f32.mxu0 0.0
        %1480 = vmatmul.mubr.f32.gmra.mrb[0].mxu0 %v284
        %v1481 = vpop.f32.mrb[0].mxu0
        %v1482 = vadd.f32 0.0, %v1481
        %v1483 = vpop.f32.mrb[0].mxu0
        %1484 = vmatprep.mubr.f32.mxu0 0.0
        %1485 = vmatmul.mubr.f32.gmra.mrb[0].mxu0 %v286
        %v1486 = vpop.f32.mrb[0].mxu0
        %v1487 = vadd.f32 0.0, %v1486
        %v1488 = vpop.f32.mrb[0].mxu0
        %1489 = vmatprep.mubr.f32.mxu0 0.0
        %1490 = vmatmul.mubr.f32.gmra.mrb[0].mxu0 %v287
        %v1491 = vpop.f32.mrb[0].mxu0
        %v1492 = vadd.f32 0.0, %v1491
        %v1493 = vpop.f32.mrb[0].mxu0
        %1494 = vmatprep.mubr.f32.mxu0 0.0
        %1495 = vmatmul.mubr.f32.gmra.mrb[0].mxu0 %v289
        %v1496 = vpop.f32.mrb[0].mxu0
        %v1497 = vadd.f32 0.0, %v1496
        %v1498 = vpop.f32.mrb[0].mxu0
        %1499 = vmatprep.mubr.f32.mxu0 0.0
        %1500 = vmatmul.mubr.f32.gmra.mrb[0].mxu0 %v290
        %v1501 = vpop.f32.mrb[0].mxu0
        %v1502 = vadd.f32 0.0, %v1501
        %v1503 = vpop.f32.mrb[0].mxu0
        %1504 = vmatprep.mubr.f32.mxu0 0.0
        %1505 = vmatmul.mubr.f32.gmra.mrb[0].mxu0 %v292
        %v1506 = vpop.f32.mrb[0].mxu0
        %v1507 = vadd.f32 0.0, %v1506
        %v1508 = vpop.f32.mrb[0].mxu0
        %1509 = vmatprep.mubr.f32.mxu0 0.0
        %1510 = vmatmul.mubr.f32.gmra.mrb[0].mxu0 %v293
        %v1511 = vpop.f32.mrb[0].mxu0
        %v1512 = vadd.f32 0.0, %v1511
        %v1513 = vpop.f32.mrb[0].mxu0
        %1514 = vmatprep.mubr.f32.mxu0 0.0
        %1515 = vmatmul.mubr.f32.gmra.mrb[0].mxu0 %v295
        %v1516 = vpop.f32.mrb[0].mxu0
        %v1517 = vadd.f32 0.0, %v1516
        %v1518 = vpop.f32.mrb[0].mxu0
        %1519 = vmatprep.mubr.f32.mxu0 0.0
        %1520 = vmatmul.mubr.f32.gmra.mrb[0].mxu0 %v296
        %v1521 = vpop.f32.mrb[0].mxu0
        %v1522 = vadd.f32 0.0, %v1521
        %v1523 = vpop.f32.mrb[0].mxu0
        %1524 = vmatprep.mubr.f32.mxu0 0.0
        %1525 = vmatmul.mubr.f32.gmra.mrb[0].mxu0 %v298
        %v1526 = vpop.f32.mrb[0].mxu0
        %v1527 = vadd.f32 0.0, %v1526
        %v1528 = vpop.f32.mrb[0].mxu0
        %1529 = vmatprep.mubr.f32.mxu0 0.0
        %1530 = vmatmul.mubr.f32.gmra.mrb[0].mxu0 %v299
        %v1531 = vpop.f32.mrb[0].mxu0
        %v1532 = vadd.f32 0.0, %v1531
        %v1533 = vpop.f32.mrb[0].mxu0
        %1534 = vmatprep.mubr.f32.mxu0 0.0
        %1535 = vmatmul.mubr.f32.gmra.mrb[0].mxu0 %v301
        %v1536 = vpop.f32.mrb[0].mxu0
        %v1537 = vadd.f32 0.0, %v1536
        %v1538 = vpop.f32.mrb[0].mxu0
        %1539 = vmatprep.mubr.f32.mxu0 0.0
        %1540 = vmatmul.mubr.f32.gmra.mrb[0].mxu0 %v302
        %v1541 = vpop.f32.mrb[0].mxu0
        %v1542 = vadd.f32 0.0, %v1541
        %v1543 = vpop.f32.mrb[0].mxu0
        %1544 = vmatprep.mubr.f32.mxu0 0.0
        %1545 = vmatmul.mubr.f32.gmra.mrb[0].mxu0 %v304
        %v1546 = vpop.f32.mrb[0].mxu0
        %v1547 = vadd.f32 0.0, %v1546
        %v1548 = vpop.f32.mrb[0].mxu0
        %1549 = vmatprep.mubr.f32.mxu0 0.0
        %1550 = vmatmul.mubr.f32.gmra.mrb[0].mxu0 %v305
        %v1551 = vpop.f32.mrb[0].mxu0
        %v1552 = vadd.f32 0.0, %v1551
        %v1553 = vpop.f32.mrb[0].mxu0
        %1554 = vmatprep.mubr.f32.mxu0 0.0
        %1555 = vmatmul.mubr.f32.gmra.mrb[0].mxu0 %v307
        %v1556 = vpop.f32.mrb[0].mxu0
        %v1557 = vadd.f32 0.0, %v1556
        %v1558 = vpop.f32.mrb[0].mxu0
        %1559 = vmatprep.mubr.f32.mxu0 0.0
        %1560 = vmatmul.mubr.f32.gmra.mrb[0].mxu0 %v308
        %v1561 = vpop.f32.mrb[0].mxu0
        %v1562 = vadd.f32 0.0, %v1561
        %v1563 = vpop.f32.mrb[0].mxu0
        %1564 = vmatprep.mubr.f32.mxu0 0.0
        %1565 = vmatmul.mubr.f32.gmra.mrb[0].mxu0 %v310
        %v1566 = vpop.f32.mrb[0].mxu0
        %v1567 = vadd.f32 0.0, %v1566
        %v1568 = vpop.f32.mrb[0].mxu0
        %1569 = vmatprep.mubr.f32.mxu0 0.0
        %1570 = vmatmul.mubr.f32.gmra.mrb[0].mxu0 %v311
        %v1571 = vpop.f32.mrb[0].mxu0
        %v1572 = vadd.f32 0.0, %v1571
        %v1573 = vpop.f32.mrb[0].mxu0
        %1574 = vmatprep.mubr.f32.mxu0 0.0
        %1575 = vmatmul.mubr.f32.gmra.mrb[0].mxu0 %v313
        %v1576 = vpop.f32.mrb[0].mxu0
        %v1577 = vadd.f32 0.0, %v1576
        %v1578 = vpop.f32.mrb[0].mxu0
        %1579 = vmatprep.mubr.f32.mxu0 0.0
        %1580 = vmatmul.mubr.f32.gmra.mrb[0].mxu0 %v314
        %v1581 = vpop.f32.mrb[0].mxu0
        %v1582 = vadd.f32 0.0, %v1581
        %v1583 = vpop.f32.mrb[0].mxu0
        %1584 = vmatprep.mubr.f32.mxu0 0.0
        %1585 = vmatmul.mubr.f32.gmra.mrb[0].mxu0 %v316
        %v1586 = vpop.f32.mrb[0].mxu0
        %v1587 = vadd.f32 0.0, %v1586
        %v1588 = vpop.f32.mrb[0].mxu0
        %1589 = vmatprep.mubr.f32.mxu0 0.0
        %1590 = vmatmul.mubr.f32.gmra.mrb[0].mxu0 %v317
        %v1591 = vpop.f32.mrb[0].mxu0
        %v1592 = vadd.f32 0.0, %v1591
        %v1593 = vpop.f32.mrb[0].mxu0
        %1594 = vdwg.mxu0
        %v1595 = vadd.f32 %v1321, %v1437
        %v1596 = vadd.f32 %v1322, %v1442
        %v1597 = vadd.f32 %v1323, %v1447
        %v1598 = vadd.f32 %v1324, %v1452
        %v1599 = vadd.f32 %v1325, %v1457
        %v1600 = vadd.f32 %v1326, %v1462
        %v1601 = vadd.f32 %v1327, %v1467
        %v1602 = vadd.f32 %v1328, %v1472
        %v1603 = vadd.f32 %v1329, %v1477
        %v1604 = vadd.f32 %v1330, %v1482
        %v1605 = vadd.f32 %v1331, %v1487
        %v1606 = vadd.f32 %v1332, %v1492
        %v1607 = vadd.f32 %v1333, %v1497
        %v1608 = vadd.f32 %v1334, %v1502
        %v1609 = vadd.f32 %v1335, %v1507
        %v1610 = vadd.f32 %v1336, %v1512
        %v1611 = vadd.f32 %v1337, %v1517
        %v1612 = vadd.f32 %v1338, %v1522
        %v1613 = vadd.f32 %v1339, %v1527
        %v1614 = vadd.f32 %v1340, %v1532
        %v1615 = vadd.f32 %v1341, %v1537
        %v1616 = vadd.f32 %v1342, %v1542
        %v1617 = vadd.f32 %v1343, %v1547
        %v1618 = vadd.f32 %v1344, %v1552
        %v1619 = vadd.f32 %v1345, %v1557
        %v1620 = vadd.f32 %v1346, %v1562
        %v1621 = vadd.f32 %v1347, %v1567
        %v1622 = vadd.f32 %v1348, %v1572
        %v1623 = vadd.f32 %v1349, %v1577
        %v1624 = vadd.f32 %v1350, %v1582
        %v1625 = vadd.f32 %v1351, %v1587
        %v1626 = vadd.f32 %v1352, %v1592
        %v1630 = vrot.slane %v316, 1
        %v1631 = vrot.slane %v317, 1
        %v1632 = vsel %vm386, %v1630, %v1631
        %v1633 = vrot.slane %v318, 1
        %v1634 = vsel %vm386, %v1631, %v1633
        %s1637 = scalar_lea.vmem %s1, 512
        %v1638 = vld [vmem:[%s1637] sm:$0xff]
        %v1639 = vld [vmem:[%s1637 + $0x8] sm:$0xff]
        %v1640 = vld [vmem:[%s1637 + $0x10] sm:$0xff]
        %v1641 = vld [vmem:[%s1637 + $0x18] sm:$0xff]
        %v1642 = vld [vmem:[%s1637 + $0x20] sm:$0xff]
        %v1643 = vld [vmem:[%s1637 + $0x28] sm:$0xff]
        %v1644 = vld [vmem:[%s1637 + $0x30] sm:$0xff]
        %v1645 = vld [vmem:[%s1637 + $0x38] sm:$0xff]
        %v1646 = vld [vmem:[%s1637 + $0x40] sm:$0xff]
        %v1647 = vld [vmem:[%s1637 + $0x48] sm:$0xff]
        %v1648 = vld [vmem:[%s1637 + $0x50] sm:$0xff]
        %v1649 = vld [vmem:[%s1637 + $0x58] sm:$0xff]
        %v1650 = vld [vmem:[%s1637 + $0x60] sm:$0xff]
        %v1651 = vld [vmem:[%s1637 + $0x68] sm:$0xff]
        %v1652 = vld [vmem:[%s1637 + $0x70] sm:$0xff]
        %v1653 = vld [vmem:[%s1637 + $0x78] sm:$0xff]
        %1654 = vmatprep.subr.mxu0 0.0
        %1655 = vmatpush1.msra.mxu0 %v1638
        %1656 = vmatprep.subr.mxu0 0.0
        %1657 = vmatpush1.msra.mxu0 %v1639
        %1658 = vmatprep.subr.mxu0 0.0
        %1659 = vmatpush1.msra.mxu0 %v1640
        %1660 = vmatprep.subr.mxu0 0.0
        %1661 = vmatpush1.msra.mxu0 %v1641
        %1662 = vmatprep.subr.mxu0 0.0
        %1663 = vmatpush1.msra.mxu0 %v1642
        %1664 = vmatprep.subr.mxu0 0.0
        %1665 = vmatpush1.msra.mxu0 %v1643
        %1666 = vmatprep.subr.mxu0 0.0
        %1667 = vmatpush1.msra.mxu0 %v1644
        %1668 = vmatprep.subr.mxu0 0.0
        %1669 = vmatpush1.msra.mxu0 %v1645
        %1670 = vmatprep.subr.mxu0 0.0
        %1671 = vmatpush1.msra.mxu0 %v1646
        %1672 = vmatprep.subr.mxu0 0.0
        %1673 = vmatpush1.msra.mxu0 %v1647
        %1674 = vmatprep.subr.mxu0 0.0
        %1675 = vmatpush1.msra.mxu0 %v1648
        %1676 = vmatprep.subr.mxu0 0.0
        %1677 = vmatpush1.msra.mxu0 %v1649
        %1678 = vmatprep.subr.mxu0 0.0
        %1679 = vmatpush1.msra.mxu0 %v1650
        %1680 = vmatprep.subr.mxu0 0.0
        %1681 = vmatpush1.msra.mxu0 %v1651
        %1682 = vmatprep.subr.mxu0 0.0
        %1683 = vmatpush1.msra.mxu0 %v1652
        %1684 = vmatprep.subr.mxu0 0.0
        %1685 = vmatpush1.msra.mxu0 %v1653
        %1686 = vmatprep.subr.mxu0 0.0
        %1687 = vmatpush1.msra.mxu0 0.0
        %1688 = vmatprep.subr.mxu0 0.0
        %1689 = vmatpush1.msra.mxu0 0.0
        %1690 = vmatprep.subr.mxu0 0.0
        %1691 = vmatpush1.msra.mxu0 0.0
        %1692 = vmatprep.subr.mxu0 0.0
        %1693 = vmatpush1.msra.mxu0 0.0
        %1694 = vmatprep.subr.mxu0 0.0
        %1695 = vmatpush1.msra.mxu0 0.0
        %1696 = vmatprep.subr.mxu0 0.0
        %1697 = vmatpush1.msra.mxu0 0.0
        %1698 = vmatprep.subr.mxu0 0.0
        %1699 = vmatpush1.msra.mxu0 0.0
        %1700 = vmatprep.subr.mxu0 0.0
        %1701 = vmatpush1.msra.mxu0 0.0
        %1702 = vmatprep.subr.mxu0 0.0
        %1703 = vmatpush1.msra.mxu0 0.0
        %1704 = vmatprep.subr.mxu0 0.0
        %1705 = vmatpush1.msra.mxu0 0.0
        %1706 = vmatprep.subr.mxu0 0.0
        %1707 = vmatpush1.msra.mxu0 0.0
        %1708 = vmatprep.subr.mxu0 0.0
        %1709 = vmatpush1.msra.mxu0 0.0
        %1710 = vmatprep.subr.mxu0 0.0
        %1711 = vmatpush1.msra.mxu0 0.0
        %1712 = vmatprep.subr.mxu0 0.0
        %1713 = vmatpush1.msra.mxu0 0.0
        %1714 = vmatprep.subr.mxu0 0.0
        %1715 = vmatpush1.msra.mxu0 0.0
        %1716 = vmatprep.subr.mxu0 0.0
        %1717 = vmatpush1.msra.mxu0 0.0
        %1718 = vmatprep.mubr.f32.mxu0 0.0
        %1719 = vmatmul.mubr.f32.gmra.mrb[0].mxu0 %v394
        %v1720 = vpop.f32.mrb[0].mxu0
        %v1721 = vadd.f32 0.0, %v1720
        %v1722 = vpop.f32.mrb[0].mxu0
        %1723 = vmatprep.mubr.f32.mxu0 0.0
        %1724 = vmatmul.mubr.f32.gmra.mrb[0].mxu0 %v396
        %v1725 = vpop.f32.mrb[0].mxu0
        %v1726 = vadd.f32 0.0, %v1725
        %v1727 = vpop.f32.mrb[0].mxu0
        %1728 = vmatprep.mubr.f32.mxu0 0.0
        %1729 = vmatmul.mubr.f32.gmra.mrb[0].mxu0 %v399
        %v1730 = vpop.f32.mrb[0].mxu0
        %v1731 = vadd.f32 0.0, %v1730
        %v1732 = vpop.f32.mrb[0].mxu0
        %1733 = vmatprep.mubr.f32.mxu0 0.0
        %1734 = vmatmul.mubr.f32.gmra.mrb[0].mxu0 %v401
        %v1735 = vpop.f32.mrb[0].mxu0
        %v1736 = vadd.f32 0.0, %v1735
        %v1737 = vpop.f32.mrb[0].mxu0
        %1738 = vmatprep.mubr.f32.mxu0 0.0
        %1739 = vmatmul.mubr.f32.gmra.mrb[0].mxu0 %v404
        %v1740 = vpop.f32.mrb[0].mxu0
        %v1741 = vadd.f32 0.0, %v1740
        %v1742 = vpop.f32.mrb[0].mxu0
        %1743 = vmatprep.mubr.f32.mxu0 0.0
        %1744 = vmatmul.mubr.f32.gmra.mrb[0].mxu0 %v406
        %v1745 = vpop.f32.mrb[0].mxu0
        %v1746 = vadd.f32 0.0, %v1745
        %v1747 = vpop.f32.mrb[0].mxu0
        %1748 = vmatprep.mubr.f32.mxu0 0.0
        %1749 = vmatmul.mubr.f32.gmra.mrb[0].mxu0 %v409
        %v1750 = vpop.f32.mrb[0].mxu0
        %v1751 = vadd.f32 0.0, %v1750
        %v1752 = vpop.f32.mrb[0].mxu0
        %1753 = vmatprep.mubr.f32.mxu0 0.0
        %1754 = vmatmul.mubr.f32.gmra.mrb[0].mxu0 %v411
        %v1755 = vpop.f32.mrb[0].mxu0
        %v1756 = vadd.f32 0.0, %v1755
        %v1757 = vpop.f32.mrb[0].mxu0
        %1758 = vmatprep.mubr.f32.mxu0 0.0
        %1759 = vmatmul.mubr.f32.gmra.mrb[0].mxu0 %v414
        %v1760 = vpop.f32.mrb[0].mxu0
        %v1761 = vadd.f32 0.0, %v1760
        %v1762 = vpop.f32.mrb[0].mxu0
        %1763 = vmatprep.mubr.f32.mxu0 0.0
        %1764 = vmatmul.mubr.f32.gmra.mrb[0].mxu0 %v416
        %v1765 = vpop.f32.mrb[0].mxu0
        %v1766 = vadd.f32 0.0, %v1765
        %v1767 = vpop.f32.mrb[0].mxu0
        %1768 = vmatprep.mubr.f32.mxu0 0.0
        %1769 = vmatmul.mubr.f32.gmra.mrb[0].mxu0 %v419
        %v1770 = vpop.f32.mrb[0].mxu0
        %v1771 = vadd.f32 0.0, %v1770
        %v1772 = vpop.f32.mrb[0].mxu0
        %1773 = vmatprep.mubr.f32.mxu0 0.0
        %1774 = vmatmul.mubr.f32.gmra.mrb[0].mxu0 %v421
        %v1775 = vpop.f32.mrb[0].mxu0
        %v1776 = vadd.f32 0.0, %v1775
        %v1777 = vpop.f32.mrb[0].mxu0
        %1778 = vmatprep.mubr.f32.mxu0 0.0
        %1779 = vmatmul.mubr.f32.gmra.mrb[0].mxu0 %v424
        %v1780 = vpop.f32.mrb[0].mxu0
        %v1781 = vadd.f32 0.0, %v1780
        %v1782 = vpop.f32.mrb[0].mxu0
        %1783 = vmatprep.mubr.f32.mxu0 0.0
        %1784 = vmatmul.mubr.f32.gmra.mrb[0].mxu0 %v426
        %v1785 = vpop.f32.mrb[0].mxu0
        %v1786 = vadd.f32 0.0, %v1785
        %v1787 = vpop.f32.mrb[0].mxu0
        %1788 = vmatprep.mubr.f32.mxu0 0.0
        %1789 = vmatmul.mubr.f32.gmra.mrb[0].mxu0 %v429
        %v1790 = vpop.f32.mrb[0].mxu0
        %v1791 = vadd.f32 0.0, %v1790
        %v1792 = vpop.f32.mrb[0].mxu0
        %1793 = vmatprep.mubr.f32.mxu0 0.0
        %1794 = vmatmul.mubr.f32.gmra.mrb[0].mxu0 %v431
        %v1795 = vpop.f32.mrb[0].mxu0
        %v1796 = vadd.f32 0.0, %v1795
        %v1797 = vpop.f32.mrb[0].mxu0
        %1798 = vmatprep.mubr.f32.mxu0 0.0
        %1799 = vmatmul.mubr.f32.gmra.mrb[0].mxu0 %v434
        %v1800 = vpop.f32.mrb[0].mxu0
        %v1801 = vadd.f32 0.0, %v1800
        %v1802 = vpop.f32.mrb[0].mxu0
        %1803 = vmatprep.mubr.f32.mxu0 0.0
        %1804 = vmatmul.mubr.f32.gmra.mrb[0].mxu0 %v436
        %v1805 = vpop.f32.mrb[0].mxu0
        %v1806 = vadd.f32 0.0, %v1805
        %v1807 = vpop.f32.mrb[0].mxu0
        %1808 = vmatprep.mubr.f32.mxu0 0.0
        %1809 = vmatmul.mubr.f32.gmra.mrb[0].mxu0 %v439
        %v1810 = vpop.f32.mrb[0].mxu0
        %v1811 = vadd.f32 0.0, %v1810
        %v1812 = vpop.f32.mrb[0].mxu0
        %1813 = vmatprep.mubr.f32.mxu0 0.0
        %1814 = vmatmul.mubr.f32.gmra.mrb[0].mxu0 %v441
        %v1815 = vpop.f32.mrb[0].mxu0
        %v1816 = vadd.f32 0.0, %v1815
        %v1817 = vpop.f32.mrb[0].mxu0
        %1818 = vmatprep.mubr.f32.mxu0 0.0
        %1819 = vmatmul.mubr.f32.gmra.mrb[0].mxu0 %v444
        %v1820 = vpop.f32.mrb[0].mxu0
        %v1821 = vadd.f32 0.0, %v1820
        %v1822 = vpop.f32.mrb[0].mxu0
        %1823 = vmatprep.mubr.f32.mxu0 0.0
        %1824 = vmatmul.mubr.f32.gmra.mrb[0].mxu0 %v446
        %v1825 = vpop.f32.mrb[0].mxu0
        %v1826 = vadd.f32 0.0, %v1825
        %v1827 = vpop.f32.mrb[0].mxu0
        %1828 = vmatprep.mubr.f32.mxu0 0.0
        %1829 = vmatmul.mubr.f32.gmra.mrb[0].mxu0 %v449
        %v1830 = vpop.f32.mrb[0].mxu0
        %v1831 = vadd.f32 0.0, %v1830
        %v1832 = vpop.f32.mrb[0].mxu0
        %1833 = vmatprep.mubr.f32.mxu0 0.0
        %1834 = vmatmul.mubr.f32.gmra.mrb[0].mxu0 %v451
        %v1835 = vpop.f32.mrb[0].mxu0
        %v1836 = vadd.f32 0.0, %v1835
        %v1837 = vpop.f32.mrb[0].mxu0
        %1838 = vmatprep.mubr.f32.mxu0 0.0
        %1839 = vmatmul.mubr.f32.gmra.mrb[0].mxu0 %v454
        %v1840 = vpop.f32.mrb[0].mxu0
        %v1841 = vadd.f32 0.0, %v1840
        %v1842 = vpop.f32.mrb[0].mxu0
        %1843 = vmatprep.mubr.f32.mxu0 0.0
        %1844 = vmatmul.mubr.f32.gmra.mrb[0].mxu0 %v456
        %v1845 = vpop.f32.mrb[0].mxu0
        %v1846 = vadd.f32 0.0, %v1845
        %v1847 = vpop.f32.mrb[0].mxu0
        %1848 = vmatprep.mubr.f32.mxu0 0.0
        %1849 = vmatmul.mubr.f32.gmra.mrb[0].mxu0 %v459
        %v1850 = vpop.f32.mrb[0].mxu0
        %v1851 = vadd.f32 0.0, %v1850
        %v1852 = vpop.f32.mrb[0].mxu0
        %1853 = vmatprep.mubr.f32.mxu0 0.0
        %1854 = vmatmul.mubr.f32.gmra.mrb[0].mxu0 %v461
        %v1855 = vpop.f32.mrb[0].mxu0
        %v1856 = vadd.f32 0.0, %v1855
        %v1857 = vpop.f32.mrb[0].mxu0
        %1858 = vmatprep.mubr.f32.mxu0 0.0
        %1859 = vmatmul.mubr.f32.gmra.mrb[0].mxu0 %v464
        %v1860 = vpop.f32.mrb[0].mxu0
        %v1861 = vadd.f32 0.0, %v1860
        %v1862 = vpop.f32.mrb[0].mxu0
        %1863 = vmatprep.mubr.f32.mxu0 0.0
        %1864 = vmatmul.mubr.f32.gmra.mrb[0].mxu0 %v466
        %v1865 = vpop.f32.mrb[0].mxu0
        %v1866 = vadd.f32 0.0, %v1865
        %v1867 = vpop.f32.mrb[0].mxu0
        %1868 = vmatprep.mubr.f32.mxu0 0.0
        %1869 = vmatmul.mubr.f32.gmra.mrb[0].mxu0 %v1632
        %v1870 = vpop.f32.mrb[0].mxu0
        %v1871 = vadd.f32 0.0, %v1870
        %v1872 = vpop.f32.mrb[0].mxu0
        %1873 = vmatprep.mubr.f32.mxu0 0.0
        %1874 = vmatmul.mubr.f32.gmra.mrb[0].mxu0 %v1634
        %v1875 = vpop.f32.mrb[0].mxu0
        %v1876 = vadd.f32 0.0, %v1875
        %v1877 = vpop.f32.mrb[0].mxu0
        %1878 = vdwg.mxu0
        %v1879 = vadd.f32 %v1595, %v1721
        %v1880 = vadd.f32 %v1596, %v1726
        %v1881 = vadd.f32 %v1597, %v1731
        %v1882 = vadd.f32 %v1598, %v1736
        %v1883 = vadd.f32 %v1599, %v1741
        %v1884 = vadd.f32 %v1600, %v1746
        %v1885 = vadd.f32 %v1601, %v1751
        %v1886 = vadd.f32 %v1602, %v1756
        %v1887 = vadd.f32 %v1603, %v1761
        %v1888 = vadd.f32 %v1604, %v1766
        %v1889 = vadd.f32 %v1605, %v1771
        %v1890 = vadd.f32 %v1606, %v1776
        %v1891 = vadd.f32 %v1607, %v1781
        %v1892 = vadd.f32 %v1608, %v1786
        %v1893 = vadd.f32 %v1609, %v1791
        %v1894 = vadd.f32 %v1610, %v1796
        %v1895 = vadd.f32 %v1611, %v1801
        %v1896 = vadd.f32 %v1612, %v1806
        %v1897 = vadd.f32 %v1613, %v1811
        %v1898 = vadd.f32 %v1614, %v1816
        %v1899 = vadd.f32 %v1615, %v1821
        %v1900 = vadd.f32 %v1616, %v1826
        %v1901 = vadd.f32 %v1617, %v1831
        %v1902 = vadd.f32 %v1618, %v1836
        %v1903 = vadd.f32 %v1619, %v1841
        %v1904 = vadd.f32 %v1620, %v1846
        %v1905 = vadd.f32 %v1621, %v1851
        %v1906 = vadd.f32 %v1622, %v1856
        %v1907 = vadd.f32 %v1623, %v1861
        %v1908 = vadd.f32 %v1624, %v1866
        %v1909 = vadd.f32 %v1625, %v1871
        %v1910 = vadd.f32 %v1626, %v1876
        %v1911 = vrot.slane %v316, 2
        %v1912 = vrot.slane %v317, 2
        %v1913 = vsel %vm966, %v1911, %v1912
        %v1914 = vrot.slane %v318, 2
        %v1915 = vsel %vm966, %v1912, %v1914
        %s1918 = scalar_lea.vmem %s1, 640
        %v1919 = vld [vmem:[%s1918] sm:$0xff]
        %v1920 = vld [vmem:[%s1918 + $0x8] sm:$0xff]
        %v1921 = vld [vmem:[%s1918 + $0x10] sm:$0xff]
        %v1922 = vld [vmem:[%s1918 + $0x18] sm:$0xff]
        %v1923 = vld [vmem:[%s1918 + $0x20] sm:$0xff]
        %v1924 = vld [vmem:[%s1918 + $0x28] sm:$0xff]
        %v1925 = vld [vmem:[%s1918 + $0x30] sm:$0xff]
        %v1926 = vld [vmem:[%s1918 + $0x38] sm:$0xff]
        %v1927 = vld [vmem:[%s1918 + $0x40] sm:$0xff]
        %v1928 = vld [vmem:[%s1918 + $0x48] sm:$0xff]
        %v1929 = vld [vmem:[%s1918 + $0x50] sm:$0xff]
        %v1930 = vld [vmem:[%s1918 + $0x58] sm:$0xff]
        %v1931 = vld [vmem:[%s1918 + $0x60] sm:$0xff]
        %v1932 = vld [vmem:[%s1918 + $0x68] sm:$0xff]
        %v1933 = vld [vmem:[%s1918 + $0x70] sm:$0xff]
        %v1934 = vld [vmem:[%s1918 + $0x78] sm:$0xff]
        %1935 = vmatprep.subr.mxu0 0.0
        %1936 = vmatpush1.msra.mxu0 %v1919
        %1937 = vmatprep.subr.mxu0 0.0
        %1938 = vmatpush1.msra.mxu0 %v1920
        %1939 = vmatprep.subr.mxu0 0.0
        %1940 = vmatpush1.msra.mxu0 %v1921
        %1941 = vmatprep.subr.mxu0 0.0
        %1942 = vmatpush1.msra.mxu0 %v1922
        %1943 = vmatprep.subr.mxu0 0.0
        %1944 = vmatpush1.msra.mxu0 %v1923
        %1945 = vmatprep.subr.mxu0 0.0
        %1946 = vmatpush1.msra.mxu0 %v1924
        %1947 = vmatprep.subr.mxu0 0.0
        %1948 = vmatpush1.msra.mxu0 %v1925
        %1949 = vmatprep.subr.mxu0 0.0
        %1950 = vmatpush1.msra.mxu0 %v1926
        %1951 = vmatprep.subr.mxu0 0.0
        %1952 = vmatpush1.msra.mxu0 %v1927
        %1953 = vmatprep.subr.mxu0 0.0
        %1954 = vmatpush1.msra.mxu0 %v1928
        %1955 = vmatprep.subr.mxu0 0.0
        %1956 = vmatpush1.msra.mxu0 %v1929
        %1957 = vmatprep.subr.mxu0 0.0
        %1958 = vmatpush1.msra.mxu0 %v1930
        %1959 = vmatprep.subr.mxu0 0.0
        %1960 = vmatpush1.msra.mxu0 %v1931
        %1961 = vmatprep.subr.mxu0 0.0
        %1962 = vmatpush1.msra.mxu0 %v1932
        %1963 = vmatprep.subr.mxu0 0.0
        %1964 = vmatpush1.msra.mxu0 %v1933
        %1965 = vmatprep.subr.mxu0 0.0
        %1966 = vmatpush1.msra.mxu0 %v1934
        %1967 = vmatprep.subr.mxu0 0.0
        %1968 = vmatpush1.msra.mxu0 0.0
        %1969 = vmatprep.subr.mxu0 0.0
        %1970 = vmatpush1.msra.mxu0 0.0
        %1971 = vmatprep.subr.mxu0 0.0
        %1972 = vmatpush1.msra.mxu0 0.0
        %1973 = vmatprep.subr.mxu0 0.0
        %1974 = vmatpush1.msra.mxu0 0.0
        %1975 = vmatprep.subr.mxu0 0.0
        %1976 = vmatpush1.msra.mxu0 0.0
        %1977 = vmatprep.subr.mxu0 0.0
        %1978 = vmatpush1.msra.mxu0 0.0
        %1979 = vmatprep.subr.mxu0 0.0
        %1980 = vmatpush1.msra.mxu0 0.0
        %1981 = vmatprep.subr.mxu0 0.0
        %1982 = vmatpush1.msra.mxu0 0.0
        %1983 = vmatprep.subr.mxu0 0.0
        %1984 = vmatpush1.msra.mxu0 0.0
        %1985 = vmatprep.subr.mxu0 0.0
        %1986 = vmatpush1.msra.mxu0 0.0
        %1987 = vmatprep.subr.mxu0 0.0
        %1988 = vmatpush1.msra.mxu0 0.0
        %1989 = vmatprep.subr.mxu0 0.0
        %1990 = vmatpush1.msra.mxu0 0.0
        %1991 = vmatprep.subr.mxu0 0.0
        %1992 = vmatpush1.msra.mxu0 0.0
        %1993 = vmatprep.subr.mxu0 0.0
        %1994 = vmatpush1.msra.mxu0 0.0
        %1995 = vmatprep.subr.mxu0 0.0
        %1996 = vmatpush1.msra.mxu0 0.0
        %1997 = vmatprep.subr.mxu0 0.0
        %1998 = vmatpush1.msra.mxu0 0.0
        %1999 = vmatprep.mubr.f32.mxu0 0.0
        %2000 = vmatmul.mubr.f32.gmra.mrb[0].mxu0 %v974
        %v2001 = vpop.f32.mrb[0].mxu0
        %v2002 = vadd.f32 0.0, %v2001
        %v2003 = vpop.f32.mrb[0].mxu0
        %2004 = vmatprep.mubr.f32.mxu0 0.0
        %2005 = vmatmul.mubr.f32.gmra.mrb[0].mxu0 %v976
        %v2006 = vpop.f32.mrb[0].mxu0
        %v2007 = vadd.f32 0.0, %v2006
        %v2008 = vpop.f32.mrb[0].mxu0
        %2009 = vmatprep.mubr.f32.mxu0 0.0
        %2010 = vmatmul.mubr.f32.gmra.mrb[0].mxu0 %v979
        %v2011 = vpop.f32.mrb[0].mxu0
        %v2012 = vadd.f32 0.0, %v2011
        %v2013 = vpop.f32.mrb[0].mxu0
        %2014 = vmatprep.mubr.f32.mxu0 0.0
        %2015 = vmatmul.mubr.f32.gmra.mrb[0].mxu0 %v981
        %v2016 = vpop.f32.mrb[0].mxu0
        %v2017 = vadd.f32 0.0, %v2016
        %v2018 = vpop.f32.mrb[0].mxu0
        %2019 = vmatprep.mubr.f32.mxu0 0.0
        %2020 = vmatmul.mubr.f32.gmra.mrb[0].mxu0 %v984
        %v2021 = vpop.f32.mrb[0].mxu0
        %v2022 = vadd.f32 0.0, %v2021
        %v2023 = vpop.f32.mrb[0].mxu0
        %2024 = vmatprep.mubr.f32.mxu0 0.0
        %2025 = vmatmul.mubr.f32.gmra.mrb[0].mxu0 %v986
        %v2026 = vpop.f32.mrb[0].mxu0
        %v2027 = vadd.f32 0.0, %v2026
        %v2028 = vpop.f32.mrb[0].mxu0
        %2029 = vmatprep.mubr.f32.mxu0 0.0
        %2030 = vmatmul.mubr.f32.gmra.mrb[0].mxu0 %v989
        %v2031 = vpop.f32.mrb[0].mxu0
        %v2032 = vadd.f32 0.0, %v2031
        %v2033 = vpop.f32.mrb[0].mxu0
        %2034 = vmatprep.mubr.f32.mxu0 0.0
        %2035 = vmatmul.mubr.f32.gmra.mrb[0].mxu0 %v991
        %v2036 = vpop.f32.mrb[0].mxu0
        %v2037 = vadd.f32 0.0, %v2036
        %v2038 = vpop.f32.mrb[0].mxu0
        %2039 = vmatprep.mubr.f32.mxu0 0.0
        %2040 = vmatmul.mubr.f32.gmra.mrb[0].mxu0 %v994
        %v2041 = vpop.f32.mrb[0].mxu0
        %v2042 = vadd.f32 0.0, %v2041
        %v2043 = vpop.f32.mrb[0].mxu0
        %2044 = vmatprep.mubr.f32.mxu0 0.0
        %2045 = vmatmul.mubr.f32.gmra.mrb[0].mxu0 %v996
        %v2046 = vpop.f32.mrb[0].mxu0
        %v2047 = vadd.f32 0.0, %v2046
        %v2048 = vpop.f32.mrb[0].mxu0
        %2049 = vmatprep.mubr.f32.mxu0 0.0
        %2050 = vmatmul.mubr.f32.gmra.mrb[0].mxu0 %v999
        %v2051 = vpop.f32.mrb[0].mxu0
        %v2052 = vadd.f32 0.0, %v2051
        %v2053 = vpop.f32.mrb[0].mxu0
        %2054 = vmatprep.mubr.f32.mxu0 0.0
        %2055 = vmatmul.mubr.f32.gmra.mrb[0].mxu0 %v1001
        %v2056 = vpop.f32.mrb[0].mxu0
        %v2057 = vadd.f32 0.0, %v2056
        %v2058 = vpop.f32.mrb[0].mxu0
        %2059 = vmatprep.mubr.f32.mxu0 0.0
        %2060 = vmatmul.mubr.f32.gmra.mrb[0].mxu0 %v1004
        %v2061 = vpop.f32.mrb[0].mxu0
        %v2062 = vadd.f32 0.0, %v2061
        %v2063 = vpop.f32.mrb[0].mxu0
        %2064 = vmatprep.mubr.f32.mxu0 0.0
        %2065 = vmatmul.mubr.f32.gmra.mrb[0].mxu0 %v1006
        %v2066 = vpop.f32.mrb[0].mxu0
        %v2067 = vadd.f32 0.0, %v2066
        %v2068 = vpop.f32.mrb[0].mxu0
        %2069 = vmatprep.mubr.f32.mxu0 0.0
        %2070 = vmatmul.mubr.f32.gmra.mrb[0].mxu0 %v1009
        %v2071 = vpop.f32.mrb[0].mxu0
        %v2072 = vadd.f32 0.0, %v2071
        %v2073 = vpop.f32.mrb[0].mxu0
        %2074 = vmatprep.mubr.f32.mxu0 0.0
        %2075 = vmatmul.mubr.f32.gmra.mrb[0].mxu0 %v1011
        %v2076 = vpop.f32.mrb[0].mxu0
        %v2077 = vadd.f32 0.0, %v2076
        %v2078 = vpop.f32.mrb[0].mxu0
        %2079 = vmatprep.mubr.f32.mxu0 0.0
        %2080 = vmatmul.mubr.f32.gmra.mrb[0].mxu0 %v1014
        %v2081 = vpop.f32.mrb[0].mxu0
        %v2082 = vadd.f32 0.0, %v2081
        %v2083 = vpop.f32.mrb[0].mxu0
        %2084 = vmatprep.mubr.f32.mxu0 0.0
        %2085 = vmatmul.mubr.f32.gmra.mrb[0].mxu0 %v1016
        %v2086 = vpop.f32.mrb[0].mxu0
        %v2087 = vadd.f32 0.0, %v2086
        %v2088 = vpop.f32.mrb[0].mxu0
        %2089 = vmatprep.mubr.f32.mxu0 0.0
        %2090 = vmatmul.mubr.f32.gmra.mrb[0].mxu0 %v1019
        %v2091 = vpop.f32.mrb[0].mxu0
        %v2092 = vadd.f32 0.0, %v2091
        %v2093 = vpop.f32.mrb[0].mxu0
        %2094 = vmatprep.mubr.f32.mxu0 0.0
        %2095 = vmatmul.mubr.f32.gmra.mrb[0].mxu0 %v1021
        %v2096 = vpop.f32.mrb[0].mxu0
        %v2097 = vadd.f32 0.0, %v2096
        %v2098 = vpop.f32.mrb[0].mxu0
        %2099 = vmatprep.mubr.f32.mxu0 0.0
        %2100 = vmatmul.mubr.f32.gmra.mrb[0].mxu0 %v1024
        %v2101 = vpop.f32.mrb[0].mxu0
        %v2102 = vadd.f32 0.0, %v2101
        %v2103 = vpop.f32.mrb[0].mxu0
        %2104 = vmatprep.mubr.f32.mxu0 0.0
        %2105 = vmatmul.mubr.f32.gmra.mrb[0].mxu0 %v1026
        %v2106 = vpop.f32.mrb[0].mxu0
        %v2107 = vadd.f32 0.0, %v2106
        %v2108 = vpop.f32.mrb[0].mxu0
        %2109 = vmatprep.mubr.f32.mxu0 0.0
        %2110 = vmatmul.mubr.f32.gmra.mrb[0].mxu0 %v1029
        %v2111 = vpop.f32.mrb[0].mxu0
        %v2112 = vadd.f32 0.0, %v2111
        %v2113 = vpop.f32.mrb[0].mxu0
        %2114 = vmatprep.mubr.f32.mxu0 0.0
        %2115 = vmatmul.mubr.f32.gmra.mrb[0].mxu0 %v1031
        %v2116 = vpop.f32.mrb[0].mxu0
        %v2117 = vadd.f32 0.0, %v2116
        %v2118 = vpop.f32.mrb[0].mxu0
        %2119 = vmatprep.mubr.f32.mxu0 0.0
        %2120 = vmatmul.mubr.f32.gmra.mrb[0].mxu0 %v1034
        %v2121 = vpop.f32.mrb[0].mxu0
        %v2122 = vadd.f32 0.0, %v2121
        %v2123 = vpop.f32.mrb[0].mxu0
        %2124 = vmatprep.mubr.f32.mxu0 0.0
        %2125 = vmatmul.mubr.f32.gmra.mrb[0].mxu0 %v1036
        %v2126 = vpop.f32.mrb[0].mxu0
        %v2127 = vadd.f32 0.0, %v2126
        %v2128 = vpop.f32.mrb[0].mxu0
        %2129 = vmatprep.mubr.f32.mxu0 0.0
        %2130 = vmatmul.mubr.f32.gmra.mrb[0].mxu0 %v1039
        %v2131 = vpop.f32.mrb[0].mxu0
        %v2132 = vadd.f32 0.0, %v2131
        %v2133 = vpop.f32.mrb[0].mxu0
        %2134 = vmatprep.mubr.f32.mxu0 0.0
        %2135 = vmatmul.mubr.f32.gmra.mrb[0].mxu0 %v1041
        %v2136 = vpop.f32.mrb[0].mxu0
        %v2137 = vadd.f32 0.0, %v2136
        %v2138 = vpop.f32.mrb[0].mxu0
        %2139 = vmatprep.mubr.f32.mxu0 0.0
        %2140 = vmatmul.mubr.f32.gmra.mrb[0].mxu0 %v1044
        %v2141 = vpop.f32.mrb[0].mxu0
        %v2142 = vadd.f32 0.0, %v2141
        %v2143 = vpop.f32.mrb[0].mxu0
        %2144 = vmatprep.mubr.f32.mxu0 0.0
        %2145 = vmatmul.mubr.f32.gmra.mrb[0].mxu0 %v1046
        %v2146 = vpop.f32.mrb[0].mxu0
        %v2147 = vadd.f32 0.0, %v2146
        %v2148 = vpop.f32.mrb[0].mxu0
        %2149 = vmatprep.mubr.f32.mxu0 0.0
        %2150 = vmatmul.mubr.f32.gmra.mrb[0].mxu0 %v1913
        %v2151 = vpop.f32.mrb[0].mxu0
        %v2152 = vadd.f32 0.0, %v2151
        %v2153 = vpop.f32.mrb[0].mxu0
        %2154 = vmatprep.mubr.f32.mxu0 0.0
        %2155 = vmatmul.mubr.f32.gmra.mrb[0].mxu0 %v1915
        %v2156 = vpop.f32.mrb[0].mxu0
        %v2157 = vadd.f32 0.0, %v2156
        %v2158 = vpop.f32.mrb[0].mxu0
        %2159 = vdwg.mxu0
        %v2160 = vadd.f32 %v1879, %v2002
        %v2161 = vadd.f32 %v1880, %v2007
        %v2162 = vadd.f32 %v1881, %v2012
        %v2163 = vadd.f32 %v1882, %v2017
        %v2164 = vadd.f32 %v1883, %v2022
        %v2165 = vadd.f32 %v1884, %v2027
        %v2166 = vadd.f32 %v1885, %v2032
        %v2167 = vadd.f32 %v1886, %v2037
        %v2168 = vadd.f32 %v1887, %v2042
        %v2169 = vadd.f32 %v1888, %v2047
        %v2170 = vadd.f32 %v1889, %v2052
        %v2171 = vadd.f32 %v1890, %v2057
        %v2172 = vadd.f32 %v1891, %v2062
        %v2173 = vadd.f32 %v1892, %v2067
        %v2174 = vadd.f32 %v1893, %v2072
        %v2175 = vadd.f32 %v1894, %v2077
        %v2176 = vadd.f32 %v1895, %v2082
        %v2177 = vadd.f32 %v1896, %v2087
        %v2178 = vadd.f32 %v1897, %v2092
        %v2179 = vadd.f32 %v1898, %v2097
        %v2180 = vadd.f32 %v1899, %v2102
        %v2181 = vadd.f32 %v1900, %v2107
        %v2182 = vadd.f32 %v1901, %v2112
        %v2183 = vadd.f32 %v1902, %v2117
        %v2184 = vadd.f32 %v1903, %v2122
        %v2185 = vadd.f32 %v1904, %v2127
        %v2186 = vadd.f32 %v1905, %v2132
        %v2187 = vadd.f32 %v1906, %v2137
        %v2188 = vadd.f32 %v1907, %v2142
        %v2189 = vadd.f32 %v1908, %v2147
        %v2190 = vadd.f32 %v1909, %v2152
        %v2191 = vadd.f32 %v1910, %v2157
        %s2192 = scalar_lea.vmem %s1, 768
        %v2193 = vld [vmem:[%s2192] sm:$0xff]
        %v2194 = vld [vmem:[%s2192 + $0x8] sm:$0xff]
        %v2195 = vld [vmem:[%s2192 + $0x10] sm:$0xff]
        %v2196 = vld [vmem:[%s2192 + $0x18] sm:$0xff]
        %v2197 = vld [vmem:[%s2192 + $0x20] sm:$0xff]
        %v2198 = vld [vmem:[%s2192 + $0x28] sm:$0xff]
        %v2199 = vld [vmem:[%s2192 + $0x30] sm:$0xff]
        %v2200 = vld [vmem:[%s2192 + $0x38] sm:$0xff]
        %v2201 = vld [vmem:[%s2192 + $0x40] sm:$0xff]
        %v2202 = vld [vmem:[%s2192 + $0x48] sm:$0xff]
        %v2203 = vld [vmem:[%s2192 + $0x50] sm:$0xff]
        %v2204 = vld [vmem:[%s2192 + $0x58] sm:$0xff]
        %v2205 = vld [vmem:[%s2192 + $0x60] sm:$0xff]
        %v2206 = vld [vmem:[%s2192 + $0x68] sm:$0xff]
        %v2207 = vld [vmem:[%s2192 + $0x70] sm:$0xff]
        %v2208 = vld [vmem:[%s2192 + $0x78] sm:$0xff]
        %2209 = vmatprep.subr.mxu0 0.0
        %2210 = vmatpush1.msra.mxu0 %v2193
        %2211 = vmatprep.subr.mxu0 0.0
        %2212 = vmatpush1.msra.mxu0 %v2194
        %2213 = vmatprep.subr.mxu0 0.0
        %2214 = vmatpush1.msra.mxu0 %v2195
        %2215 = vmatprep.subr.mxu0 0.0
        %2216 = vmatpush1.msra.mxu0 %v2196
        %2217 = vmatprep.subr.mxu0 0.0
        %2218 = vmatpush1.msra.mxu0 %v2197
        %2219 = vmatprep.subr.mxu0 0.0
        %2220 = vmatpush1.msra.mxu0 %v2198
        %2221 = vmatprep.subr.mxu0 0.0
        %2222 = vmatpush1.msra.mxu0 %v2199
        %2223 = vmatprep.subr.mxu0 0.0
        %2224 = vmatpush1.msra.mxu0 %v2200
        %2225 = vmatprep.subr.mxu0 0.0
        %2226 = vmatpush1.msra.mxu0 %v2201
        %2227 = vmatprep.subr.mxu0 0.0
        %2228 = vmatpush1.msra.mxu0 %v2202
        %2229 = vmatprep.subr.mxu0 0.0
        %2230 = vmatpush1.msra.mxu0 %v2203
        %2231 = vmatprep.subr.mxu0 0.0
        %2232 = vmatpush1.msra.mxu0 %v2204
        %2233 = vmatprep.subr.mxu0 0.0
        %2234 = vmatpush1.msra.mxu0 %v2205
        %2235 = vmatprep.subr.mxu0 0.0
        %2236 = vmatpush1.msra.mxu0 %v2206
        %2237 = vmatprep.subr.mxu0 0.0
        %2238 = vmatpush1.msra.mxu0 %v2207
        %2239 = vmatprep.subr.mxu0 0.0
        %2240 = vmatpush1.msra.mxu0 %v2208
        %2241 = vmatprep.subr.mxu0 0.0
        %2242 = vmatpush1.msra.mxu0 0.0
        %2243 = vmatprep.subr.mxu0 0.0
        %2244 = vmatpush1.msra.mxu0 0.0
        %2245 = vmatprep.subr.mxu0 0.0
        %2246 = vmatpush1.msra.mxu0 0.0
        %2247 = vmatprep.subr.mxu0 0.0
        %2248 = vmatpush1.msra.mxu0 0.0
        %2249 = vmatprep.subr.mxu0 0.0
        %2250 = vmatpush1.msra.mxu0 0.0
        %2251 = vmatprep.subr.mxu0 0.0
        %2252 = vmatpush1.msra.mxu0 0.0
        %2253 = vmatprep.subr.mxu0 0.0
        %2254 = vmatpush1.msra.mxu0 0.0
        %2255 = vmatprep.subr.mxu0 0.0
        %2256 = vmatpush1.msra.mxu0 0.0
        %2257 = vmatprep.subr.mxu0 0.0
        %2258 = vmatpush1.msra.mxu0 0.0
        %2259 = vmatprep.subr.mxu0 0.0
        %2260 = vmatpush1.msra.mxu0 0.0
        %2261 = vmatprep.subr.mxu0 0.0
        %2262 = vmatpush1.msra.mxu0 0.0
        %2263 = vmatprep.subr.mxu0 0.0
        %2264 = vmatpush1.msra.mxu0 0.0
        %2265 = vmatprep.subr.mxu0 0.0
        %2266 = vmatpush1.msra.mxu0 0.0
        %2267 = vmatprep.subr.mxu0 0.0
        %2268 = vmatpush1.msra.mxu0 0.0
        %2269 = vmatprep.subr.mxu0 0.0
        %2270 = vmatpush1.msra.mxu0 0.0
        %2271 = vmatprep.subr.mxu0 0.0
        %2272 = vmatpush1.msra.mxu0 0.0
        %2273 = vmatprep.mubr.f32.mxu0 0.0
        %2274 = vmatmul.mubr.f32.gmra.mrb[0].mxu0 %v274
        %v2275 = vpop.f32.mrb[0].mxu0
        %v2276 = vadd.f32 0.0, %v2275
        %v2277 = vpop.f32.mrb[0].mxu0
        %2278 = vmatprep.mubr.f32.mxu0 0.0
        %2279 = vmatmul.mubr.f32.gmra.mrb[0].mxu0 %v275
        %v2280 = vpop.f32.mrb[0].mxu0
        %v2281 = vadd.f32 0.0, %v2280
        %v2282 = vpop.f32.mrb[0].mxu0
        %2283 = vmatprep.mubr.f32.mxu0 0.0
        %2284 = vmatmul.mubr.f32.gmra.mrb[0].mxu0 %v277
        %v2285 = vpop.f32.mrb[0].mxu0
        %v2286 = vadd.f32 0.0, %v2285
        %v2287 = vpop.f32.mrb[0].mxu0
        %2288 = vmatprep.mubr.f32.mxu0 0.0
        %2289 = vmatmul.mubr.f32.gmra.mrb[0].mxu0 %v278
        %v2290 = vpop.f32.mrb[0].mxu0
        %v2291 = vadd.f32 0.0, %v2290
        %v2292 = vpop.f32.mrb[0].mxu0
        %2293 = vmatprep.mubr.f32.mxu0 0.0
        %2294 = vmatmul.mubr.f32.gmra.mrb[0].mxu0 %v280
        %v2295 = vpop.f32.mrb[0].mxu0
        %v2296 = vadd.f32 0.0, %v2295
        %v2297 = vpop.f32.mrb[0].mxu0
        %2298 = vmatprep.mubr.f32.mxu0 0.0
        %2299 = vmatmul.mubr.f32.gmra.mrb[0].mxu0 %v281
        %v2300 = vpop.f32.mrb[0].mxu0
        %v2301 = vadd.f32 0.0, %v2300
        %v2302 = vpop.f32.mrb[0].mxu0
        %2303 = vmatprep.mubr.f32.mxu0 0.0
        %2304 = vmatmul.mubr.f32.gmra.mrb[0].mxu0 %v283
        %v2305 = vpop.f32.mrb[0].mxu0
        %v2306 = vadd.f32 0.0, %v2305
        %v2307 = vpop.f32.mrb[0].mxu0
        %2308 = vmatprep.mubr.f32.mxu0 0.0
        %2309 = vmatmul.mubr.f32.gmra.mrb[0].mxu0 %v284
        %v2310 = vpop.f32.mrb[0].mxu0
        %v2311 = vadd.f32 0.0, %v2310
        %v2312 = vpop.f32.mrb[0].mxu0
        %2313 = vmatprep.mubr.f32.mxu0 0.0
        %2314 = vmatmul.mubr.f32.gmra.mrb[0].mxu0 %v286
        %v2315 = vpop.f32.mrb[0].mxu0
        %v2316 = vadd.f32 0.0, %v2315
        %v2317 = vpop.f32.mrb[0].mxu0
        %2318 = vmatprep.mubr.f32.mxu0 0.0
        %2319 = vmatmul.mubr.f32.gmra.mrb[0].mxu0 %v287
        %v2320 = vpop.f32.mrb[0].mxu0
        %v2321 = vadd.f32 0.0, %v2320
        %v2322 = vpop.f32.mrb[0].mxu0
        %2323 = vmatprep.mubr.f32.mxu0 0.0
        %2324 = vmatmul.mubr.f32.gmra.mrb[0].mxu0 %v289
        %v2325 = vpop.f32.mrb[0].mxu0
        %v2326 = vadd.f32 0.0, %v2325
        %v2327 = vpop.f32.mrb[0].mxu0
        %2328 = vmatprep.mubr.f32.mxu0 0.0
        %2329 = vmatmul.mubr.f32.gmra.mrb[0].mxu0 %v290
        %v2330 = vpop.f32.mrb[0].mxu0
        %v2331 = vadd.f32 0.0, %v2330
        %v2332 = vpop.f32.mrb[0].mxu0
        %2333 = vmatprep.mubr.f32.mxu0 0.0
        %2334 = vmatmul.mubr.f32.gmra.mrb[0].mxu0 %v292
        %v2335 = vpop.f32.mrb[0].mxu0
        %v2336 = vadd.f32 0.0, %v2335
        %v2337 = vpop.f32.mrb[0].mxu0
        %2338 = vmatprep.mubr.f32.mxu0 0.0
        %2339 = vmatmul.mubr.f32.gmra.mrb[0].mxu0 %v293
        %v2340 = vpop.f32.mrb[0].mxu0
        %v2341 = vadd.f32 0.0, %v2340
        %v2342 = vpop.f32.mrb[0].mxu0
        %2343 = vmatprep.mubr.f32.mxu0 0.0
        %2344 = vmatmul.mubr.f32.gmra.mrb[0].mxu0 %v295
        %v2345 = vpop.f32.mrb[0].mxu0
        %v2346 = vadd.f32 0.0, %v2345
        %v2347 = vpop.f32.mrb[0].mxu0
        %2348 = vmatprep.mubr.f32.mxu0 0.0
        %2349 = vmatmul.mubr.f32.gmra.mrb[0].mxu0 %v296
        %v2350 = vpop.f32.mrb[0].mxu0
        %v2351 = vadd.f32 0.0, %v2350
        %v2352 = vpop.f32.mrb[0].mxu0
        %2353 = vmatprep.mubr.f32.mxu0 0.0
        %2354 = vmatmul.mubr.f32.gmra.mrb[0].mxu0 %v298
        %v2355 = vpop.f32.mrb[0].mxu0
        %v2356 = vadd.f32 0.0, %v2355
        %v2357 = vpop.f32.mrb[0].mxu0
        %2358 = vmatprep.mubr.f32.mxu0 0.0
        %2359 = vmatmul.mubr.f32.gmra.mrb[0].mxu0 %v299
        %v2360 = vpop.f32.mrb[0].mxu0
        %v2361 = vadd.f32 0.0, %v2360
        %v2362 = vpop.f32.mrb[0].mxu0
        %2363 = vmatprep.mubr.f32.mxu0 0.0
        %2364 = vmatmul.mubr.f32.gmra.mrb[0].mxu0 %v301
        %v2365 = vpop.f32.mrb[0].mxu0
        %v2366 = vadd.f32 0.0, %v2365
        %v2367 = vpop.f32.mrb[0].mxu0
        %2368 = vmatprep.mubr.f32.mxu0 0.0
        %2369 = vmatmul.mubr.f32.gmra.mrb[0].mxu0 %v302
        %v2370 = vpop.f32.mrb[0].mxu0
        %v2371 = vadd.f32 0.0, %v2370
        %v2372 = vpop.f32.mrb[0].mxu0
        %2373 = vmatprep.mubr.f32.mxu0 0.0
        %2374 = vmatmul.mubr.f32.gmra.mrb[0].mxu0 %v304
        %v2375 = vpop.f32.mrb[0].mxu0
        %v2376 = vadd.f32 0.0, %v2375
        %v2377 = vpop.f32.mrb[0].mxu0
        %2378 = vmatprep.mubr.f32.mxu0 0.0
        %2379 = vmatmul.mubr.f32.gmra.mrb[0].mxu0 %v305
        %v2380 = vpop.f32.mrb[0].mxu0
        %v2381 = vadd.f32 0.0, %v2380
        %v2382 = vpop.f32.mrb[0].mxu0
        %2383 = vmatprep.mubr.f32.mxu0 0.0
        %2384 = vmatmul.mubr.f32.gmra.mrb[0].mxu0 %v307
        %v2385 = vpop.f32.mrb[0].mxu0
        %v2386 = vadd.f32 0.0, %v2385
        %v2387 = vpop.f32.mrb[0].mxu0
        %2388 = vmatprep.mubr.f32.mxu0 0.0
        %2389 = vmatmul.mubr.f32.gmra.mrb[0].mxu0 %v308
        %v2390 = vpop.f32.mrb[0].mxu0
        %v2391 = vadd.f32 0.0, %v2390
        %v2392 = vpop.f32.mrb[0].mxu0
        %2393 = vmatprep.mubr.f32.mxu0 0.0
        %2394 = vmatmul.mubr.f32.gmra.mrb[0].mxu0 %v310
        %v2395 = vpop.f32.mrb[0].mxu0
        %v2396 = vadd.f32 0.0, %v2395
        %v2397 = vpop.f32.mrb[0].mxu0
        %2398 = vmatprep.mubr.f32.mxu0 0.0
        %2399 = vmatmul.mubr.f32.gmra.mrb[0].mxu0 %v311
        %v2400 = vpop.f32.mrb[0].mxu0
        %v2401 = vadd.f32 0.0, %v2400
        %v2402 = vpop.f32.mrb[0].mxu0
        %2403 = vmatprep.mubr.f32.mxu0 0.0
        %2404 = vmatmul.mubr.f32.gmra.mrb[0].mxu0 %v313
        %v2405 = vpop.f32.mrb[0].mxu0
        %v2406 = vadd.f32 0.0, %v2405
        %v2407 = vpop.f32.mrb[0].mxu0
        %2408 = vmatprep.mubr.f32.mxu0 0.0
        %2409 = vmatmul.mubr.f32.gmra.mrb[0].mxu0 %v314
        %v2410 = vpop.f32.mrb[0].mxu0
        %v2411 = vadd.f32 0.0, %v2410
        %v2412 = vpop.f32.mrb[0].mxu0
        %2413 = vmatprep.mubr.f32.mxu0 0.0
        %2414 = vmatmul.mubr.f32.gmra.mrb[0].mxu0 %v316
        %v2415 = vpop.f32.mrb[0].mxu0
        %v2416 = vadd.f32 0.0, %v2415
        %v2417 = vpop.f32.mrb[0].mxu0
        %2418 = vmatprep.mubr.f32.mxu0 0.0
        %2419 = vmatmul.mubr.f32.gmra.mrb[0].mxu0 %v317
        %v2420 = vpop.f32.mrb[0].mxu0
        %v2421 = vadd.f32 0.0, %v2420
        %v2422 = vpop.f32.mrb[0].mxu0
        %2423 = vmatprep.mubr.f32.mxu0 0.0
        %2424 = vmatmul.mubr.f32.gmra.mrb[0].mxu0 %v319
        %v2425 = vpop.f32.mrb[0].mxu0
        %v2426 = vadd.f32 0.0, %v2425
        %v2427 = vpop.f32.mrb[0].mxu0
        %2428 = vmatprep.mubr.f32.mxu0 0.0
        %2429 = vmatmul.mubr.f32.gmra.mrb[0].mxu0 %v320
        %v2430 = vpop.f32.mrb[0].mxu0
        %v2431 = vadd.f32 0.0, %v2430
        %v2432 = vpop.f32.mrb[0].mxu0
        %2433 = vdwg.mxu0
        %v2434 = vadd.f32 %v2160, %v2276
        %v2435 = vadd.f32 %v2161, %v2281
        %v2436 = vadd.f32 %v2162, %v2286
        %v2437 = vadd.f32 %v2163, %v2291
        %v2438 = vadd.f32 %v2164, %v2296
        %v2439 = vadd.f32 %v2165, %v2301
        %v2440 = vadd.f32 %v2166, %v2306
        %v2441 = vadd.f32 %v2167, %v2311
        %v2442 = vadd.f32 %v2168, %v2316
        %v2443 = vadd.f32 %v2169, %v2321
        %v2444 = vadd.f32 %v2170, %v2326
        %v2445 = vadd.f32 %v2171, %v2331
        %v2446 = vadd.f32 %v2172, %v2336
        %v2447 = vadd.f32 %v2173, %v2341
        %v2448 = vadd.f32 %v2174, %v2346
        %v2449 = vadd.f32 %v2175, %v2351
        %v2450 = vadd.f32 %v2176, %v2356
        %v2451 = vadd.f32 %v2177, %v2361
        %v2452 = vadd.f32 %v2178, %v2366
        %v2453 = vadd.f32 %v2179, %v2371
        %v2454 = vadd.f32 %v2180, %v2376
        %v2455 = vadd.f32 %v2181, %v2381
        %v2456 = vadd.f32 %v2182, %v2386
        %v2457 = vadd.f32 %v2183, %v2391
        %v2458 = vadd.f32 %v2184, %v2396
        %v2459 = vadd.f32 %v2185, %v2401
        %v2460 = vadd.f32 %v2186, %v2406
        %v2461 = vadd.f32 %v2187, %v2411
        %v2462 = vadd.f32 %v2188, %v2416
        %v2463 = vadd.f32 %v2189, %v2421
        %v2464 = vadd.f32 %v2190, %v2426
        %v2465 = vadd.f32 %v2191, %v2431
        %v2469 = vrot.slane %v319, 1
        %v2470 = vrot.slane %v320, 1
        %v2471 = vsel %vm386, %v2469, %v2470
        %v2472 = vrot.slane %v321, 1
        %v2473 = vsel %vm386, %v2470, %v2472
        %s2476 = scalar_lea.vmem %s1, 896
        %v2477 = vld [vmem:[%s2476] sm:$0xff]
        %v2478 = vld [vmem:[%s2476 + $0x8] sm:$0xff]
        %v2479 = vld [vmem:[%s2476 + $0x10] sm:$0xff]
        %v2480 = vld [vmem:[%s2476 + $0x18] sm:$0xff]
        %v2481 = vld [vmem:[%s2476 + $0x20] sm:$0xff]
        %v2482 = vld [vmem:[%s2476 + $0x28] sm:$0xff]
        %v2483 = vld [vmem:[%s2476 + $0x30] sm:$0xff]
        %v2484 = vld [vmem:[%s2476 + $0x38] sm:$0xff]
        %v2485 = vld [vmem:[%s2476 + $0x40] sm:$0xff]
        %v2486 = vld [vmem:[%s2476 + $0x48] sm:$0xff]
        %v2487 = vld [vmem:[%s2476 + $0x50] sm:$0xff]
        %v2488 = vld [vmem:[%s2476 + $0x58] sm:$0xff]
        %v2489 = vld [vmem:[%s2476 + $0x60] sm:$0xff]
        %v2490 = vld [vmem:[%s2476 + $0x68] sm:$0xff]
        %v2491 = vld [vmem:[%s2476 + $0x70] sm:$0xff]
        %v2492 = vld [vmem:[%s2476 + $0x78] sm:$0xff]
        %2493 = vmatprep.subr.mxu0 0.0
        %2494 = vmatpush1.msra.mxu0 %v2477
        %2495 = vmatprep.subr.mxu0 0.0
        %2496 = vmatpush1.msra.mxu0 %v2478
        %2497 = vmatprep.subr.mxu0 0.0
        %2498 = vmatpush1.msra.mxu0 %v2479
        %2499 = vmatprep.subr.mxu0 0.0
        %2500 = vmatpush1.msra.mxu0 %v2480
        %2501 = vmatprep.subr.mxu0 0.0
        %2502 = vmatpush1.msra.mxu0 %v2481
        %2503 = vmatprep.subr.mxu0 0.0
        %2504 = vmatpush1.msra.mxu0 %v2482
        %2505 = vmatprep.subr.mxu0 0.0
        %2506 = vmatpush1.msra.mxu0 %v2483
        %2507 = vmatprep.subr.mxu0 0.0
        %2508 = vmatpush1.msra.mxu0 %v2484
        %2509 = vmatprep.subr.mxu0 0.0
        %2510 = vmatpush1.msra.mxu0 %v2485
        %2511 = vmatprep.subr.mxu0 0.0
        %2512 = vmatpush1.msra.mxu0 %v2486
        %2513 = vmatprep.subr.mxu0 0.0
        %2514 = vmatpush1.msra.mxu0 %v2487
        %2515 = vmatprep.subr.mxu0 0.0
        %2516 = vmatpush1.msra.mxu0 %v2488
        %2517 = vmatprep.subr.mxu0 0.0
        %2518 = vmatpush1.msra.mxu0 %v2489
        %2519 = vmatprep.subr.mxu0 0.0
        %2520 = vmatpush1.msra.mxu0 %v2490
        %2521 = vmatprep.subr.mxu0 0.0
        %2522 = vmatpush1.msra.mxu0 %v2491
        %2523 = vmatprep.subr.mxu0 0.0
        %2524 = vmatpush1.msra.mxu0 %v2492
        %2525 = vmatprep.subr.mxu0 0.0
        %2526 = vmatpush1.msra.mxu0 0.0
        %2527 = vmatprep.subr.mxu0 0.0
        %2528 = vmatpush1.msra.mxu0 0.0
        %2529 = vmatprep.subr.mxu0 0.0
        %2530 = vmatpush1.msra.mxu0 0.0
        %2531 = vmatprep.subr.mxu0 0.0
        %2532 = vmatpush1.msra.mxu0 0.0
        %2533 = vmatprep.subr.mxu0 0.0
        %2534 = vmatpush1.msra.mxu0 0.0
        %2535 = vmatprep.subr.mxu0 0.0
        %2536 = vmatpush1.msra.mxu0 0.0
        %2537 = vmatprep.subr.mxu0 0.0
        %2538 = vmatpush1.msra.mxu0 0.0
        %2539 = vmatprep.subr.mxu0 0.0
        %2540 = vmatpush1.msra.mxu0 0.0
        %2541 = vmatprep.subr.mxu0 0.0
        %2542 = vmatpush1.msra.mxu0 0.0
        %2543 = vmatprep.subr.mxu0 0.0
        %2544 = vmatpush1.msra.mxu0 0.0
        %2545 = vmatprep.subr.mxu0 0.0
        %2546 = vmatpush1.msra.mxu0 0.0
        %2547 = vmatprep.subr.mxu0 0.0
        %2548 = vmatpush1.msra.mxu0 0.0
        %2549 = vmatprep.subr.mxu0 0.0
        %2550 = vmatpush1.msra.mxu0 0.0
        %2551 = vmatprep.subr.mxu0 0.0
        %2552 = vmatpush1.msra.mxu0 0.0
        %2553 = vmatprep.subr.mxu0 0.0
        %2554 = vmatpush1.msra.mxu0 0.0
        %2555 = vmatprep.subr.mxu0 0.0
        %2556 = vmatpush1.msra.mxu0 0.0
        %2557 = vmatprep.mubr.f32.mxu0 0.0
        %2558 = vmatmul.mubr.f32.gmra.mrb[0].mxu0 %v399
        %v2559 = vpop.f32.mrb[0].mxu0
        %v2560 = vadd.f32 0.0, %v2559
        %v2561 = vpop.f32.mrb[0].mxu0
        %2562 = vmatprep.mubr.f32.mxu0 0.0
        %2563 = vmatmul.mubr.f32.gmra.mrb[0].mxu0 %v401
        %v2564 = vpop.f32.mrb[0].mxu0
        %v2565 = vadd.f32 0.0, %v2564
        %v2566 = vpop.f32.mrb[0].mxu0
        %2567 = vmatprep.mubr.f32.mxu0 0.0
        %2568 = vmatmul.mubr.f32.gmra.mrb[0].mxu0 %v404
        %v2569 = vpop.f32.mrb[0].mxu0
        %v2570 = vadd.f32 0.0, %v2569
        %v2571 = vpop.f32.mrb[0].mxu0
        %2572 = vmatprep.mubr.f32.mxu0 0.0
        %2573 = vmatmul.mubr.f32.gmra.mrb[0].mxu0 %v406
        %v2574 = vpop.f32.mrb[0].mxu0
        %v2575 = vadd.f32 0.0, %v2574
        %v2576 = vpop.f32.mrb[0].mxu0
        %2577 = vmatprep.mubr.f32.mxu0 0.0
        %2578 = vmatmul.mubr.f32.gmra.mrb[0].mxu0 %v409
        %v2579 = vpop.f32.mrb[0].mxu0
        %v2580 = vadd.f32 0.0, %v2579
        %v2581 = vpop.f32.mrb[0].mxu0
        %2582 = vmatprep.mubr.f32.mxu0 0.0
        %2583 = vmatmul.mubr.f32.gmra.mrb[0].mxu0 %v411
        %v2584 = vpop.f32.mrb[0].mxu0
        %v2585 = vadd.f32 0.0, %v2584
        %v2586 = vpop.f32.mrb[0].mxu0
        %2587 = vmatprep.mubr.f32.mxu0 0.0
        %2588 = vmatmul.mubr.f32.gmra.mrb[0].mxu0 %v414
        %v2589 = vpop.f32.mrb[0].mxu0
        %v2590 = vadd.f32 0.0, %v2589
        %v2591 = vpop.f32.mrb[0].mxu0
        %2592 = vmatprep.mubr.f32.mxu0 0.0
        %2593 = vmatmul.mubr.f32.gmra.mrb[0].mxu0 %v416
        %v2594 = vpop.f32.mrb[0].mxu0
        %v2595 = vadd.f32 0.0, %v2594
        %v2596 = vpop.f32.mrb[0].mxu0
        %2597 = vmatprep.mubr.f32.mxu0 0.0
        %2598 = vmatmul.mubr.f32.gmra.mrb[0].mxu0 %v419
        %v2599 = vpop.f32.mrb[0].mxu0
        %v2600 = vadd.f32 0.0, %v2599
        %v2601 = vpop.f32.mrb[0].mxu0
        %2602 = vmatprep.mubr.f32.mxu0 0.0
        %2603 = vmatmul.mubr.f32.gmra.mrb[0].mxu0 %v421
        %v2604 = vpop.f32.mrb[0].mxu0
        %v2605 = vadd.f32 0.0, %v2604
        %v2606 = vpop.f32.mrb[0].mxu0
        %2607 = vmatprep.mubr.f32.mxu0 0.0
        %2608 = vmatmul.mubr.f32.gmra.mrb[0].mxu0 %v424
        %v2609 = vpop.f32.mrb[0].mxu0
        %v2610 = vadd.f32 0.0, %v2609
        %v2611 = vpop.f32.mrb[0].mxu0
        %2612 = vmatprep.mubr.f32.mxu0 0.0
        %2613 = vmatmul.mubr.f32.gmra.mrb[0].mxu0 %v426
        %v2614 = vpop.f32.mrb[0].mxu0
        %v2615 = vadd.f32 0.0, %v2614
        %v2616 = vpop.f32.mrb[0].mxu0
        %2617 = vmatprep.mubr.f32.mxu0 0.0
        %2618 = vmatmul.mubr.f32.gmra.mrb[0].mxu0 %v429
        %v2619 = vpop.f32.mrb[0].mxu0
        %v2620 = vadd.f32 0.0, %v2619
        %v2621 = vpop.f32.mrb[0].mxu0
        %2622 = vmatprep.mubr.f32.mxu0 0.0
        %2623 = vmatmul.mubr.f32.gmra.mrb[0].mxu0 %v431
        %v2624 = vpop.f32.mrb[0].mxu0
        %v2625 = vadd.f32 0.0, %v2624
        %v2626 = vpop.f32.mrb[0].mxu0
        %2627 = vmatprep.mubr.f32.mxu0 0.0
        %2628 = vmatmul.mubr.f32.gmra.mrb[0].mxu0 %v434
        %v2629 = vpop.f32.mrb[0].mxu0
        %v2630 = vadd.f32 0.0, %v2629
        %v2631 = vpop.f32.mrb[0].mxu0
        %2632 = vmatprep.mubr.f32.mxu0 0.0
        %2633 = vmatmul.mubr.f32.gmra.mrb[0].mxu0 %v436
        %v2634 = vpop.f32.mrb[0].mxu0
        %v2635 = vadd.f32 0.0, %v2634
        %v2636 = vpop.f32.mrb[0].mxu0
        %2637 = vmatprep.mubr.f32.mxu0 0.0
        %2638 = vmatmul.mubr.f32.gmra.mrb[0].mxu0 %v439
        %v2639 = vpop.f32.mrb[0].mxu0
        %v2640 = vadd.f32 0.0, %v2639
        %v2641 = vpop.f32.mrb[0].mxu0
        %2642 = vmatprep.mubr.f32.mxu0 0.0
        %2643 = vmatmul.mubr.f32.gmra.mrb[0].mxu0 %v441
        %v2644 = vpop.f32.mrb[0].mxu0
        %v2645 = vadd.f32 0.0, %v2644
        %v2646 = vpop.f32.mrb[0].mxu0
        %2647 = vmatprep.mubr.f32.mxu0 0.0
        %2648 = vmatmul.mubr.f32.gmra.mrb[0].mxu0 %v444
        %v2649 = vpop.f32.mrb[0].mxu0
        %v2650 = vadd.f32 0.0, %v2649
        %v2651 = vpop.f32.mrb[0].mxu0
        %2652 = vmatprep.mubr.f32.mxu0 0.0
        %2653 = vmatmul.mubr.f32.gmra.mrb[0].mxu0 %v446
        %v2654 = vpop.f32.mrb[0].mxu0
        %v2655 = vadd.f32 0.0, %v2654
        %v2656 = vpop.f32.mrb[0].mxu0
        %2657 = vmatprep.mubr.f32.mxu0 0.0
        %2658 = vmatmul.mubr.f32.gmra.mrb[0].mxu0 %v449
        %v2659 = vpop.f32.mrb[0].mxu0
        %v2660 = vadd.f32 0.0, %v2659
        %v2661 = vpop.f32.mrb[0].mxu0
        %2662 = vmatprep.mubr.f32.mxu0 0.0
        %2663 = vmatmul.mubr.f32.gmra.mrb[0].mxu0 %v451
        %v2664 = vpop.f32.mrb[0].mxu0
        %v2665 = vadd.f32 0.0, %v2664
        %v2666 = vpop.f32.mrb[0].mxu0
        %2667 = vmatprep.mubr.f32.mxu0 0.0
        %2668 = vmatmul.mubr.f32.gmra.mrb[0].mxu0 %v454
        %v2669 = vpop.f32.mrb[0].mxu0
        %v2670 = vadd.f32 0.0, %v2669
        %v2671 = vpop.f32.mrb[0].mxu0
        %2672 = vmatprep.mubr.f32.mxu0 0.0
        %2673 = vmatmul.mubr.f32.gmra.mrb[0].mxu0 %v456
        %v2674 = vpop.f32.mrb[0].mxu0
        %v2675 = vadd.f32 0.0, %v2674
        %v2676 = vpop.f32.mrb[0].mxu0
        %2677 = vmatprep.mubr.f32.mxu0 0.0
        %2678 = vmatmul.mubr.f32.gmra.mrb[0].mxu0 %v459
        %v2679 = vpop.f32.mrb[0].mxu0
        %v2680 = vadd.f32 0.0, %v2679
        %v2681 = vpop.f32.mrb[0].mxu0
        %2682 = vmatprep.mubr.f32.mxu0 0.0
        %2683 = vmatmul.mubr.f32.gmra.mrb[0].mxu0 %v461
        %v2684 = vpop.f32.mrb[0].mxu0
        %v2685 = vadd.f32 0.0, %v2684
        %v2686 = vpop.f32.mrb[0].mxu0
        %2687 = vmatprep.mubr.f32.mxu0 0.0
        %2688 = vmatmul.mubr.f32.gmra.mrb[0].mxu0 %v464
        %v2689 = vpop.f32.mrb[0].mxu0
        %v2690 = vadd.f32 0.0, %v2689
        %v2691 = vpop.f32.mrb[0].mxu0
        %2692 = vmatprep.mubr.f32.mxu0 0.0
        %2693 = vmatmul.mubr.f32.gmra.mrb[0].mxu0 %v466
        %v2694 = vpop.f32.mrb[0].mxu0
        %v2695 = vadd.f32 0.0, %v2694
        %v2696 = vpop.f32.mrb[0].mxu0
        %2697 = vmatprep.mubr.f32.mxu0 0.0
        %2698 = vmatmul.mubr.f32.gmra.mrb[0].mxu0 %v1632
        %v2699 = vpop.f32.mrb[0].mxu0
        %v2700 = vadd.f32 0.0, %v2699
        %v2701 = vpop.f32.mrb[0].mxu0
        %2702 = vmatprep.mubr.f32.mxu0 0.0
        %2703 = vmatmul.mubr.f32.gmra.mrb[0].mxu0 %v1634
        %v2704 = vpop.f32.mrb[0].mxu0
        %v2705 = vadd.f32 0.0, %v2704
        %v2706 = vpop.f32.mrb[0].mxu0
        %2707 = vmatprep.mubr.f32.mxu0 0.0
        %2708 = vmatmul.mubr.f32.gmra.mrb[0].mxu0 %v2471
        %v2709 = vpop.f32.mrb[0].mxu0
        %v2710 = vadd.f32 0.0, %v2709
        %v2711 = vpop.f32.mrb[0].mxu0
        %2712 = vmatprep.mubr.f32.mxu0 0.0
        %2713 = vmatmul.mubr.f32.gmra.mrb[0].mxu0 %v2473
        %v2714 = vpop.f32.mrb[0].mxu0
        %v2715 = vadd.f32 0.0, %v2714
        %v2716 = vpop.f32.mrb[0].mxu0
        %2717 = vdwg.mxu0
        %v2718 = vadd.f32 %v2434, %v2560
        %v2719 = vadd.f32 %v2435, %v2565
        %v2720 = vadd.f32 %v2436, %v2570
        %v2721 = vadd.f32 %v2437, %v2575
        %v2722 = vadd.f32 %v2438, %v2580
        %v2723 = vadd.f32 %v2439, %v2585
        %v2724 = vadd.f32 %v2440, %v2590
        %v2725 = vadd.f32 %v2441, %v2595
        %v2726 = vadd.f32 %v2442, %v2600
        %v2727 = vadd.f32 %v2443, %v2605
        %v2728 = vadd.f32 %v2444, %v2610
        %v2729 = vadd.f32 %v2445, %v2615
        %v2730 = vadd.f32 %v2446, %v2620
        %v2731 = vadd.f32 %v2447, %v2625
        %v2732 = vadd.f32 %v2448, %v2630
        %v2733 = vadd.f32 %v2449, %v2635
        %v2734 = vadd.f32 %v2450, %v2640
        %v2735 = vadd.f32 %v2451, %v2645
        %v2736 = vadd.f32 %v2452, %v2650
        %v2737 = vadd.f32 %v2453, %v2655
        %v2738 = vadd.f32 %v2454, %v2660
        %v2739 = vadd.f32 %v2455, %v2665
        %v2740 = vadd.f32 %v2456, %v2670
        %v2741 = vadd.f32 %v2457, %v2675
        %v2742 = vadd.f32 %v2458, %v2680
        %v2743 = vadd.f32 %v2459, %v2685
        %v2744 = vadd.f32 %v2460, %v2690
        %v2745 = vadd.f32 %v2461, %v2695
        %v2746 = vadd.f32 %v2462, %v2700
        %v2747 = vadd.f32 %v2463, %v2705
        %v2748 = vadd.f32 %v2464, %v2710
        %v2749 = vadd.f32 %v2465, %v2715
        %v2750 = vrot.slane %v319, 2
        %v2751 = vrot.slane %v320, 2
        %v2752 = vsel %vm966, %v2750, %v2751
        %v2753 = vrot.slane %v321, 2
        %v2754 = vsel %vm966, %v2751, %v2753
        %s2757 = scalar_lea.vmem %s1, 1024
        %v2758 = vld [vmem:[%s2757] sm:$0xff]
        %v2759 = vld [vmem:[%s2757 + $0x8] sm:$0xff]
        %v2760 = vld [vmem:[%s2757 + $0x10] sm:$0xff]
        %v2761 = vld [vmem:[%s2757 + $0x18] sm:$0xff]
        %v2762 = vld [vmem:[%s2757 + $0x20] sm:$0xff]
        %v2763 = vld [vmem:[%s2757 + $0x28] sm:$0xff]
        %v2764 = vld [vmem:[%s2757 + $0x30] sm:$0xff]
        %v2765 = vld [vmem:[%s2757 + $0x38] sm:$0xff]
        %v2766 = vld [vmem:[%s2757 + $0x40] sm:$0xff]
        %v2767 = vld [vmem:[%s2757 + $0x48] sm:$0xff]
        %v2768 = vld [vmem:[%s2757 + $0x50] sm:$0xff]
        %v2769 = vld [vmem:[%s2757 + $0x58] sm:$0xff]
        %v2770 = vld [vmem:[%s2757 + $0x60] sm:$0xff]
        %v2771 = vld [vmem:[%s2757 + $0x68] sm:$0xff]
        %v2772 = vld [vmem:[%s2757 + $0x70] sm:$0xff]
        %v2773 = vld [vmem:[%s2757 + $0x78] sm:$0xff]
        %2774 = vmatprep.subr.mxu0 0.0
        %2775 = vmatpush1.msra.mxu0 %v2758
        %2776 = vmatprep.subr.mxu0 0.0
        %2777 = vmatpush1.msra.mxu0 %v2759
        %2778 = vmatprep.subr.mxu0 0.0
        %2779 = vmatpush1.msra.mxu0 %v2760
        %2780 = vmatprep.subr.mxu0 0.0
        %2781 = vmatpush1.msra.mxu0 %v2761
        %2782 = vmatprep.subr.mxu0 0.0
        %2783 = vmatpush1.msra.mxu0 %v2762
        %2784 = vmatprep.subr.mxu0 0.0
        %2785 = vmatpush1.msra.mxu0 %v2763
        %2786 = vmatprep.subr.mxu0 0.0
        %2787 = vmatpush1.msra.mxu0 %v2764
        %2788 = vmatprep.subr.mxu0 0.0
        %2789 = vmatpush1.msra.mxu0 %v2765
        %2790 = vmatprep.subr.mxu0 0.0
        %2791 = vmatpush1.msra.mxu0 %v2766
        %2792 = vmatprep.subr.mxu0 0.0
        %2793 = vmatpush1.msra.mxu0 %v2767
        %2794 = vmatprep.subr.mxu0 0.0
        %2795 = vmatpush1.msra.mxu0 %v2768
        %2796 = vmatprep.subr.mxu0 0.0
        %2797 = vmatpush1.msra.mxu0 %v2769
        %2798 = vmatprep.subr.mxu0 0.0
        %2799 = vmatpush1.msra.mxu0 %v2770
        %2800 = vmatprep.subr.mxu0 0.0
        %2801 = vmatpush1.msra.mxu0 %v2771
        %2802 = vmatprep.subr.mxu0 0.0
        %2803 = vmatpush1.msra.mxu0 %v2772
        %2804 = vmatprep.subr.mxu0 0.0
        %2805 = vmatpush1.msra.mxu0 %v2773
        %2806 = vmatprep.subr.mxu0 0.0
        %2807 = vmatpush1.msra.mxu0 0.0
        %2808 = vmatprep.subr.mxu0 0.0
        %2809 = vmatpush1.msra.mxu0 0.0
        %2810 = vmatprep.subr.mxu0 0.0
        %2811 = vmatpush1.msra.mxu0 0.0
        %2812 = vmatprep.subr.mxu0 0.0
        %2813 = vmatpush1.msra.mxu0 0.0
        %2814 = vmatprep.subr.mxu0 0.0
        %2815 = vmatpush1.msra.mxu0 0.0
        %2816 = vmatprep.subr.mxu0 0.0
        %2817 = vmatpush1.msra.mxu0 0.0
        %2818 = vmatprep.subr.mxu0 0.0
        %2819 = vmatpush1.msra.mxu0 0.0
        %2820 = vmatprep.subr.mxu0 0.0
        %2821 = vmatpush1.msra.mxu0 0.0
        %2822 = vmatprep.subr.mxu0 0.0
        %2823 = vmatpush1.msra.mxu0 0.0
        %2824 = vmatprep.subr.mxu0 0.0
        %2825 = vmatpush1.msra.mxu0 0.0
        %2826 = vmatprep.subr.mxu0 0.0
        %2827 = vmatpush1.msra.mxu0 0.0
        %2828 = vmatprep.subr.mxu0 0.0
        %2829 = vmatpush1.msra.mxu0 0.0
        %2830 = vmatprep.subr.mxu0 0.0
        %2831 = vmatpush1.msra.mxu0 0.0
        %2832 = vmatprep.subr.mxu0 0.0
        %2833 = vmatpush1.msra.mxu0 0.0
        %2834 = vmatprep.subr.mxu0 0.0
        %2835 = vmatpush1.msra.mxu0 0.0
        %2836 = vmatprep.subr.mxu0 0.0
        %2837 = vmatpush1.msra.mxu0 0.0
        %2838 = vmatprep.mubr.f32.mxu0 0.0
        %2839 = vmatmul.mubr.f32.gmra.mrb[0].mxu0 %v979
        %v2840 = vpop.f32.mrb[0].mxu0
        %v2841 = vadd.f32 0.0, %v2840
        %v2842 = vpop.f32.mrb[0].mxu0
        %2843 = vmatprep.mubr.f32.mxu0 0.0
        %2844 = vmatmul.mubr.f32.gmra.mrb[0].mxu0 %v981
        %v2845 = vpop.f32.mrb[0].mxu0
        %v2846 = vadd.f32 0.0, %v2845
        %v2847 = vpop.f32.mrb[0].mxu0
        %2848 = vmatprep.mubr.f32.mxu0 0.0
        %2849 = vmatmul.mubr.f32.gmra.mrb[0].mxu0 %v984
        %v2850 = vpop.f32.mrb[0].mxu0
        %v2851 = vadd.f32 0.0, %v2850
        %v2852 = vpop.f32.mrb[0].mxu0
        %2853 = vmatprep.mubr.f32.mxu0 0.0
        %2854 = vmatmul.mubr.f32.gmra.mrb[0].mxu0 %v986
        %v2855 = vpop.f32.mrb[0].mxu0
        %v2856 = vadd.f32 0.0, %v2855
        %v2857 = vpop.f32.mrb[0].mxu0
        %2858 = vmatprep.mubr.f32.mxu0 0.0
        %2859 = vmatmul.mubr.f32.gmra.mrb[0].mxu0 %v989
        %v2860 = vpop.f32.mrb[0].mxu0
        %v2861 = vadd.f32 0.0, %v2860
        %v2862 = vpop.f32.mrb[0].mxu0
        %2863 = vmatprep.mubr.f32.mxu0 0.0
        %2864 = vmatmul.mubr.f32.gmra.mrb[0].mxu0 %v991
        %v2865 = vpop.f32.mrb[0].mxu0
        %v2866 = vadd.f32 0.0, %v2865
        %v2867 = vpop.f32.mrb[0].mxu0
        %2868 = vmatprep.mubr.f32.mxu0 0.0
        %2869 = vmatmul.mubr.f32.gmra.mrb[0].mxu0 %v994
        %v2870 = vpop.f32.mrb[0].mxu0
        %v2871 = vadd.f32 0.0, %v2870
        %v2872 = vpop.f32.mrb[0].mxu0
        %2873 = vmatprep.mubr.f32.mxu0 0.0
        %2874 = vmatmul.mubr.f32.gmra.mrb[0].mxu0 %v996
        %v2875 = vpop.f32.mrb[0].mxu0
        %v2876 = vadd.f32 0.0, %v2875
        %v2877 = vpop.f32.mrb[0].mxu0
        %2878 = vmatprep.mubr.f32.mxu0 0.0
        %2879 = vmatmul.mubr.f32.gmra.mrb[0].mxu0 %v999
        %v2880 = vpop.f32.mrb[0].mxu0
        %v2881 = vadd.f32 0.0, %v2880
        %v2882 = vpop.f32.mrb[0].mxu0
        %2883 = vmatprep.mubr.f32.mxu0 0.0
        %2884 = vmatmul.mubr.f32.gmra.mrb[0].mxu0 %v1001
        %v2885 = vpop.f32.mrb[0].mxu0
        %v2886 = vadd.f32 0.0, %v2885
        %v2887 = vpop.f32.mrb[0].mxu0
        %2888 = vmatprep.mubr.f32.mxu0 0.0
        %2889 = vmatmul.mubr.f32.gmra.mrb[0].mxu0 %v1004
        %v2890 = vpop.f32.mrb[0].mxu0
        %v2891 = vadd.f32 0.0, %v2890
        %v2892 = vpop.f32.mrb[0].mxu0
        %2893 = vmatprep.mubr.f32.mxu0 0.0
        %2894 = vmatmul.mubr.f32.gmra.mrb[0].mxu0 %v1006
        %v2895 = vpop.f32.mrb[0].mxu0
        %v2896 = vadd.f32 0.0, %v2895
        %v2897 = vpop.f32.mrb[0].mxu0
        %2898 = vmatprep.mubr.f32.mxu0 0.0
        %2899 = vmatmul.mubr.f32.gmra.mrb[0].mxu0 %v1009
        %v2900 = vpop.f32.mrb[0].mxu0
        %v2901 = vadd.f32 0.0, %v2900
        %v2902 = vpop.f32.mrb[0].mxu0
        %2903 = vmatprep.mubr.f32.mxu0 0.0
        %2904 = vmatmul.mubr.f32.gmra.mrb[0].mxu0 %v1011
        %v2905 = vpop.f32.mrb[0].mxu0
        %v2906 = vadd.f32 0.0, %v2905
        %v2907 = vpop.f32.mrb[0].mxu0
        %2908 = vmatprep.mubr.f32.mxu0 0.0
        %2909 = vmatmul.mubr.f32.gmra.mrb[0].mxu0 %v1014
        %v2910 = vpop.f32.mrb[0].mxu0
        %v2911 = vadd.f32 0.0, %v2910
        %v2912 = vpop.f32.mrb[0].mxu0
        %2913 = vmatprep.mubr.f32.mxu0 0.0
        %2914 = vmatmul.mubr.f32.gmra.mrb[0].mxu0 %v1016
        %v2915 = vpop.f32.mrb[0].mxu0
        %v2916 = vadd.f32 0.0, %v2915
        %v2917 = vpop.f32.mrb[0].mxu0
        %2918 = vmatprep.mubr.f32.mxu0 0.0
        %2919 = vmatmul.mubr.f32.gmra.mrb[0].mxu0 %v1019
        %v2920 = vpop.f32.mrb[0].mxu0
        %v2921 = vadd.f32 0.0, %v2920
        %v2922 = vpop.f32.mrb[0].mxu0
        %2923 = vmatprep.mubr.f32.mxu0 0.0
        %2924 = vmatmul.mubr.f32.gmra.mrb[0].mxu0 %v1021
        %v2925 = vpop.f32.mrb[0].mxu0
        %v2926 = vadd.f32 0.0, %v2925
        %v2927 = vpop.f32.mrb[0].mxu0
        %2928 = vmatprep.mubr.f32.mxu0 0.0
        %2929 = vmatmul.mubr.f32.gmra.mrb[0].mxu0 %v1024
        %v2930 = vpop.f32.mrb[0].mxu0
        %v2931 = vadd.f32 0.0, %v2930
        %v2932 = vpop.f32.mrb[0].mxu0
        %2933 = vmatprep.mubr.f32.mxu0 0.0
        %2934 = vmatmul.mubr.f32.gmra.mrb[0].mxu0 %v1026
        %v2935 = vpop.f32.mrb[0].mxu0
        %v2936 = vadd.f32 0.0, %v2935
        %v2937 = vpop.f32.mrb[0].mxu0
        %2938 = vmatprep.mubr.f32.mxu0 0.0
        %2939 = vmatmul.mubr.f32.gmra.mrb[0].mxu0 %v1029
        %v2940 = vpop.f32.mrb[0].mxu0
        %v2941 = vadd.f32 0.0, %v2940
        %v2942 = vpop.f32.mrb[0].mxu0
        %2943 = vmatprep.mubr.f32.mxu0 0.0
        %2944 = vmatmul.mubr.f32.gmra.mrb[0].mxu0 %v1031
        %v2945 = vpop.f32.mrb[0].mxu0
        %v2946 = vadd.f32 0.0, %v2945
        %v2947 = vpop.f32.mrb[0].mxu0
        %2948 = vmatprep.mubr.f32.mxu0 0.0
        %2949 = vmatmul.mubr.f32.gmra.mrb[0].mxu0 %v1034
        %v2950 = vpop.f32.mrb[0].mxu0
        %v2951 = vadd.f32 0.0, %v2950
        %v2952 = vpop.f32.mrb[0].mxu0
        %2953 = vmatprep.mubr.f32.mxu0 0.0
        %2954 = vmatmul.mubr.f32.gmra.mrb[0].mxu0 %v1036
        %v2955 = vpop.f32.mrb[0].mxu0
        %v2956 = vadd.f32 0.0, %v2955
        %v2957 = vpop.f32.mrb[0].mxu0
        %2958 = vmatprep.mubr.f32.mxu0 0.0
        %2959 = vmatmul.mubr.f32.gmra.mrb[0].mxu0 %v1039
        %v2960 = vpop.f32.mrb[0].mxu0
        %v2961 = vadd.f32 0.0, %v2960
        %v2962 = vpop.f32.mrb[0].mxu0
        %2963 = vmatprep.mubr.f32.mxu0 0.0
        %2964 = vmatmul.mubr.f32.gmra.mrb[0].mxu0 %v1041
        %v2965 = vpop.f32.mrb[0].mxu0
        %v2966 = vadd.f32 0.0, %v2965
        %v2967 = vpop.f32.mrb[0].mxu0
        %2968 = vmatprep.mubr.f32.mxu0 0.0
        %2969 = vmatmul.mubr.f32.gmra.mrb[0].mxu0 %v1044
        %v2970 = vpop.f32.mrb[0].mxu0
        %v2971 = vadd.f32 0.0, %v2970
        %v2972 = vpop.f32.mrb[0].mxu0
        %2973 = vmatprep.mubr.f32.mxu0 0.0
        %2974 = vmatmul.mubr.f32.gmra.mrb[0].mxu0 %v1046
        %v2975 = vpop.f32.mrb[0].mxu0
        %v2976 = vadd.f32 0.0, %v2975
        %v2977 = vpop.f32.mrb[0].mxu0
        %2978 = vmatprep.mubr.f32.mxu0 0.0
        %2979 = vmatmul.mubr.f32.gmra.mrb[0].mxu0 %v1913
        %v2980 = vpop.f32.mrb[0].mxu0
        %v2981 = vadd.f32 0.0, %v2980
        %v2982 = vpop.f32.mrb[0].mxu0
        %2983 = vmatprep.mubr.f32.mxu0 0.0
        %2984 = vmatmul.mubr.f32.gmra.mrb[0].mxu0 %v1915
        %v2985 = vpop.f32.mrb[0].mxu0
        %v2986 = vadd.f32 0.0, %v2985
        %v2987 = vpop.f32.mrb[0].mxu0
        %2988 = vmatprep.mubr.f32.mxu0 0.0
        %2989 = vmatmul.mubr.f32.gmra.mrb[0].mxu0 %v2752
        %v2990 = vpop.f32.mrb[0].mxu0
        %v2991 = vadd.f32 0.0, %v2990
        %v2992 = vpop.f32.mrb[0].mxu0
        %2993 = vmatprep.mubr.f32.mxu0 0.0
        %2994 = vmatmul.mubr.f32.gmra.mrb[0].mxu0 %v2754
        %v2995 = vpop.f32.mrb[0].mxu0
        %v2996 = vadd.f32 0.0, %v2995
        %v2997 = vpop.f32.mrb[0].mxu0
        %2998 = vdwg.mxu0
        %v2999 = vadd.f32 %v2718, %v2841
        %v3000 = vadd.f32 %v2719, %v2846
        %v3001 = vadd.f32 %v2720, %v2851
        %v3002 = vadd.f32 %v2721, %v2856
        %v3003 = vadd.f32 %v2722, %v2861
        %v3004 = vadd.f32 %v2723, %v2866
        %v3005 = vadd.f32 %v2724, %v2871
        %v3006 = vadd.f32 %v2725, %v2876
        %v3007 = vadd.f32 %v2726, %v2881
        %v3008 = vadd.f32 %v2727, %v2886
        %v3009 = vadd.f32 %v2728, %v2891
        %v3010 = vadd.f32 %v2729, %v2896
        %v3011 = vadd.f32 %v2730, %v2901
        %v3012 = vadd.f32 %v2731, %v2906
        %v3013 = vadd.f32 %v2732, %v2911
        %v3014 = vadd.f32 %v2733, %v2916
        %v3015 = vadd.f32 %v2734, %v2921
        %v3016 = vadd.f32 %v2735, %v2926
        %v3017 = vadd.f32 %v2736, %v2931
        %v3018 = vadd.f32 %v2737, %v2936
        %v3019 = vadd.f32 %v2738, %v2941
        %v3020 = vadd.f32 %v2739, %v2946
        %v3021 = vadd.f32 %v2740, %v2951
        %v3022 = vadd.f32 %v2741, %v2956
        %v3023 = vadd.f32 %v2742, %v2961
        %v3024 = vadd.f32 %v2743, %v2966
        %v3025 = vadd.f32 %v2744, %v2971
        %v3026 = vadd.f32 %v2745, %v2976
        %v3027 = vadd.f32 %v2746, %v2981
        %v3028 = vadd.f32 %v2747, %v2986
        %v3029 = vadd.f32 %v2748, %v2991
        %v3030 = vadd.f32 %v2749, %v2996
        %v3031 = vld [vmem:[%s2] sm:$0xff]
        %v3032 = vld [vmem:[%s2 + $0x8] sm:$0xff]
        %v3033 = vld [vmem:[%s2 + $0x10] sm:$0xff]
        %v3034 = vld [vmem:[%s2 + $0x18] sm:$0xff]
        %v3035 = vld [vmem:[%s2 + $0x20] sm:$0xff]
        %v3036 = vld [vmem:[%s2 + $0x28] sm:$0xff]
        %v3037 = vld [vmem:[%s2 + $0x30] sm:$0xff]
        %v3038 = vld [vmem:[%s2 + $0x38] sm:$0xff]
        %v3039 = vld [vmem:[%s2 + $0x40] sm:$0xff]
        %v3040 = vld [vmem:[%s2 + $0x48] sm:$0xff]
        %v3041 = vld [vmem:[%s2 + $0x50] sm:$0xff]
        %v3042 = vld [vmem:[%s2 + $0x58] sm:$0xff]
        %v3043 = vld [vmem:[%s2 + $0x60] sm:$0xff]
        %v3044 = vld [vmem:[%s2 + $0x68] sm:$0xff]
        %v3045 = vld [vmem:[%s2 + $0x70] sm:$0xff]
        %v3046 = vld [vmem:[%s2 + $0x78] sm:$0xff]
        %v3047 = vld [vmem:[%s3] sm:$0x1]
        %v3049 = vlaneseq
        %v3050 = vshrl.u32 %v3049, 7
        %v3051 = vsub.s32 0, %v3050
        %v3052 = vrot.slane %v3047, %v3051
        %3054 = vmatprep.subr.mxu0 0.0
        %3055 = vmatpush1.msra.mxu0 %v3031
        %3056 = vmatprep.subr.mxu0 0.0
        %3057 = vmatpush1.msra.mxu0 %v3032
        %3058 = vmatprep.subr.mxu0 0.0
        %3059 = vmatpush1.msra.mxu0 %v3033
        %3060 = vmatprep.subr.mxu0 0.0
        %3061 = vmatpush1.msra.mxu0 %v3034
        %3062 = vmatprep.subr.mxu0 0.0
        %3063 = vmatpush1.msra.mxu0 %v3035
        %3064 = vmatprep.subr.mxu0 0.0
        %3065 = vmatpush1.msra.mxu0 %v3036
        %3066 = vmatprep.subr.mxu0 0.0
        %3067 = vmatpush1.msra.mxu0 %v3037
        %3068 = vmatprep.subr.mxu0 0.0
        %3069 = vmatpush1.msra.mxu0 %v3038
        %3070 = vmatprep.subr.mxu0 0.0
        %3071 = vmatpush1.msra.mxu0 %v3039
        %3072 = vmatprep.subr.mxu0 0.0
        %3073 = vmatpush1.msra.mxu0 %v3040
        %3074 = vmatprep.subr.mxu0 0.0
        %3075 = vmatpush1.msra.mxu0 %v3041
        %3076 = vmatprep.subr.mxu0 0.0
        %3077 = vmatpush1.msra.mxu0 %v3042
        %3078 = vmatprep.subr.mxu0 0.0
        %3079 = vmatpush1.msra.mxu0 %v3043
        %3080 = vmatprep.subr.mxu0 0.0
        %3081 = vmatpush1.msra.mxu0 %v3044
        %3082 = vmatprep.subr.mxu0 0.0
        %3083 = vmatpush1.msra.mxu0 %v3045
        %3084 = vmatprep.subr.mxu0 0.0
        %3085 = vmatpush1.msra.mxu0 %v3046
        %3086 = vmatprep.subr.mxu0 0.0
        %3087 = vmatpush1.msra.mxu0 0.0
        %3088 = vmatprep.subr.mxu0 0.0
        %3089 = vmatpush1.msra.mxu0 0.0
        %3090 = vmatprep.subr.mxu0 0.0
        %3091 = vmatpush1.msra.mxu0 0.0
        %3092 = vmatprep.subr.mxu0 0.0
        %3093 = vmatpush1.msra.mxu0 0.0
        %3094 = vmatprep.subr.mxu0 0.0
        %3095 = vmatpush1.msra.mxu0 0.0
        %3096 = vmatprep.subr.mxu0 0.0
        %3097 = vmatpush1.msra.mxu0 0.0
        %3098 = vmatprep.subr.mxu0 0.0
        %3099 = vmatpush1.msra.mxu0 0.0
        %3100 = vmatprep.subr.mxu0 0.0
        %3101 = vmatpush1.msra.mxu0 0.0
        %3102 = vmatprep.subr.mxu0 0.0
        %3103 = vmatpush1.msra.mxu0 0.0
        %3104 = vmatprep.subr.mxu0 0.0
        %3105 = vmatpush1.msra.mxu0 0.0
        %3106 = vmatprep.subr.mxu0 0.0
        %3107 = vmatpush1.msra.mxu0 0.0
        %3108 = vmatprep.subr.mxu0 0.0
        %3109 = vmatpush1.msra.mxu0 0.0
        %3110 = vmatprep.subr.mxu0 0.0
        %3111 = vmatpush1.msra.mxu0 0.0
        %3112 = vmatprep.subr.mxu0 0.0
        %3113 = vmatpush1.msra.mxu0 0.0
        %3114 = vmatprep.subr.mxu0 0.0
        %3115 = vmatpush1.msra.mxu0 0.0
        %3116 = vmatprep.subr.mxu0 0.0
        %3117 = vmatpush1.msra.mxu0 0.0
        %3118 = vmatprep.mubr.f32.mxu0 0.0
        %3119 = vmatmul.mubr.f32.gmra.mrb[0].mxu0 %v394
        %v3120 = vpop.f32.mrb[0].mxu0
        %v3121 = vadd.f32 %v3052, %v3120
        %v3122 = vpop.f32.mrb[0].mxu0
        %3123 = vmatprep.mubr.f32.mxu0 0.0
        %3124 = vmatmul.mubr.f32.gmra.mrb[0].mxu0 %v396
        %v3125 = vpop.f32.mrb[0].mxu0
        %v3126 = vadd.f32 %v3052, %v3125
        %v3127 = vpop.f32.mrb[0].mxu0
        %3128 = vmatprep.mubr.f32.mxu0 0.0
        %3129 = vmatmul.mubr.f32.gmra.mrb[0].mxu0 %v399
        %v3130 = vpop.f32.mrb[0].mxu0
        %v3131 = vadd.f32 %v3052, %v3130
        %v3132 = vpop.f32.mrb[0].mxu0
        %3133 = vmatprep.mubr.f32.mxu0 0.0
        %3134 = vmatmul.mubr.f32.gmra.mrb[0].mxu0 %v401
        %v3135 = vpop.f32.mrb[0].mxu0
        %v3136 = vadd.f32 %v3052, %v3135
        %v3137 = vpop.f32.mrb[0].mxu0
        %3138 = vmatprep.mubr.f32.mxu0 0.0
        %3139 = vmatmul.mubr.f32.gmra.mrb[0].mxu0 %v404
        %v3140 = vpop.f32.mrb[0].mxu0
        %v3141 = vadd.f32 %v3052, %v3140
        %v3142 = vpop.f32.mrb[0].mxu0
        %3143 = vmatprep.mubr.f32.mxu0 0.0
        %3144 = vmatmul.mubr.f32.gmra.mrb[0].mxu0 %v406
        %v3145 = vpop.f32.mrb[0].mxu0
        %v3146 = vadd.f32 %v3052, %v3145
        %v3147 = vpop.f32.mrb[0].mxu0
        %3148 = vmatprep.mubr.f32.mxu0 0.0
        %3149 = vmatmul.mubr.f32.gmra.mrb[0].mxu0 %v409
        %v3150 = vpop.f32.mrb[0].mxu0
        %v3151 = vadd.f32 %v3052, %v3150
        %v3152 = vpop.f32.mrb[0].mxu0
        %3153 = vmatprep.mubr.f32.mxu0 0.0
        %3154 = vmatmul.mubr.f32.gmra.mrb[0].mxu0 %v411
        %v3155 = vpop.f32.mrb[0].mxu0
        %v3156 = vadd.f32 %v3052, %v3155
        %v3157 = vpop.f32.mrb[0].mxu0
        %3158 = vmatprep.mubr.f32.mxu0 0.0
        %3159 = vmatmul.mubr.f32.gmra.mrb[0].mxu0 %v414
        %v3160 = vpop.f32.mrb[0].mxu0
        %v3161 = vadd.f32 %v3052, %v3160
        %v3162 = vpop.f32.mrb[0].mxu0
        %3163 = vmatprep.mubr.f32.mxu0 0.0
        %3164 = vmatmul.mubr.f32.gmra.mrb[0].mxu0 %v416
        %v3165 = vpop.f32.mrb[0].mxu0
        %v3166 = vadd.f32 %v3052, %v3165
        %v3167 = vpop.f32.mrb[0].mxu0
        %3168 = vmatprep.mubr.f32.mxu0 0.0
        %3169 = vmatmul.mubr.f32.gmra.mrb[0].mxu0 %v419
        %v3170 = vpop.f32.mrb[0].mxu0
        %v3171 = vadd.f32 %v3052, %v3170
        %v3172 = vpop.f32.mrb[0].mxu0
        %3173 = vmatprep.mubr.f32.mxu0 0.0
        %3174 = vmatmul.mubr.f32.gmra.mrb[0].mxu0 %v421
        %v3175 = vpop.f32.mrb[0].mxu0
        %v3176 = vadd.f32 %v3052, %v3175
        %v3177 = vpop.f32.mrb[0].mxu0
        %3178 = vmatprep.mubr.f32.mxu0 0.0
        %3179 = vmatmul.mubr.f32.gmra.mrb[0].mxu0 %v424
        %v3180 = vpop.f32.mrb[0].mxu0
        %v3181 = vadd.f32 %v3052, %v3180
        %v3182 = vpop.f32.mrb[0].mxu0
        %3183 = vmatprep.mubr.f32.mxu0 0.0
        %3184 = vmatmul.mubr.f32.gmra.mrb[0].mxu0 %v426
        %v3185 = vpop.f32.mrb[0].mxu0
        %v3186 = vadd.f32 %v3052, %v3185
        %v3187 = vpop.f32.mrb[0].mxu0
        %3188 = vmatprep.mubr.f32.mxu0 0.0
        %3189 = vmatmul.mubr.f32.gmra.mrb[0].mxu0 %v429
        %v3190 = vpop.f32.mrb[0].mxu0
        %v3191 = vadd.f32 %v3052, %v3190
        %v3192 = vpop.f32.mrb[0].mxu0
        %3193 = vmatprep.mubr.f32.mxu0 0.0
        %3194 = vmatmul.mubr.f32.gmra.mrb[0].mxu0 %v431
        %v3195 = vpop.f32.mrb[0].mxu0
        %v3196 = vadd.f32 %v3052, %v3195
        %v3197 = vpop.f32.mrb[0].mxu0
        %3198 = vmatprep.mubr.f32.mxu0 0.0
        %3199 = vmatmul.mubr.f32.gmra.mrb[0].mxu0 %v434
        %v3200 = vpop.f32.mrb[0].mxu0
        %v3201 = vadd.f32 %v3052, %v3200
        %v3202 = vpop.f32.mrb[0].mxu0
        %3203 = vmatprep.mubr.f32.mxu0 0.0
        %3204 = vmatmul.mubr.f32.gmra.mrb[0].mxu0 %v436
        %v3205 = vpop.f32.mrb[0].mxu0
        %v3206 = vadd.f32 %v3052, %v3205
        %v3207 = vpop.f32.mrb[0].mxu0
        %3208 = vmatprep.mubr.f32.mxu0 0.0
        %3209 = vmatmul.mubr.f32.gmra.mrb[0].mxu0 %v439
        %v3210 = vpop.f32.mrb[0].mxu0
        %v3211 = vadd.f32 %v3052, %v3210
        %v3212 = vpop.f32.mrb[0].mxu0
        %3213 = vmatprep.mubr.f32.mxu0 0.0
        %3214 = vmatmul.mubr.f32.gmra.mrb[0].mxu0 %v441
        %v3215 = vpop.f32.mrb[0].mxu0
        %v3216 = vadd.f32 %v3052, %v3215
        %v3217 = vpop.f32.mrb[0].mxu0
        %3218 = vmatprep.mubr.f32.mxu0 0.0
        %3219 = vmatmul.mubr.f32.gmra.mrb[0].mxu0 %v444
        %v3220 = vpop.f32.mrb[0].mxu0
        %v3221 = vadd.f32 %v3052, %v3220
        %v3222 = vpop.f32.mrb[0].mxu0
        %3223 = vmatprep.mubr.f32.mxu0 0.0
        %3224 = vmatmul.mubr.f32.gmra.mrb[0].mxu0 %v446
        %v3225 = vpop.f32.mrb[0].mxu0
        %v3226 = vadd.f32 %v3052, %v3225
        %v3227 = vpop.f32.mrb[0].mxu0
        %3228 = vmatprep.mubr.f32.mxu0 0.0
        %3229 = vmatmul.mubr.f32.gmra.mrb[0].mxu0 %v449
        %v3230 = vpop.f32.mrb[0].mxu0
        %v3231 = vadd.f32 %v3052, %v3230
        %v3232 = vpop.f32.mrb[0].mxu0
        %3233 = vmatprep.mubr.f32.mxu0 0.0
        %3234 = vmatmul.mubr.f32.gmra.mrb[0].mxu0 %v451
        %v3235 = vpop.f32.mrb[0].mxu0
        %v3236 = vadd.f32 %v3052, %v3235
        %v3237 = vpop.f32.mrb[0].mxu0
        %3238 = vmatprep.mubr.f32.mxu0 0.0
        %3239 = vmatmul.mubr.f32.gmra.mrb[0].mxu0 %v454
        %v3240 = vpop.f32.mrb[0].mxu0
        %v3241 = vadd.f32 %v3052, %v3240
        %v3242 = vpop.f32.mrb[0].mxu0
        %3243 = vmatprep.mubr.f32.mxu0 0.0
        %3244 = vmatmul.mubr.f32.gmra.mrb[0].mxu0 %v456
        %v3245 = vpop.f32.mrb[0].mxu0
        %v3246 = vadd.f32 %v3052, %v3245
        %v3247 = vpop.f32.mrb[0].mxu0
        %3248 = vmatprep.mubr.f32.mxu0 0.0
        %3249 = vmatmul.mubr.f32.gmra.mrb[0].mxu0 %v459
        %v3250 = vpop.f32.mrb[0].mxu0
        %v3251 = vadd.f32 %v3052, %v3250
        %v3252 = vpop.f32.mrb[0].mxu0
        %3253 = vmatprep.mubr.f32.mxu0 0.0
        %3254 = vmatmul.mubr.f32.gmra.mrb[0].mxu0 %v461
        %v3255 = vpop.f32.mrb[0].mxu0
        %v3256 = vadd.f32 %v3052, %v3255
        %v3257 = vpop.f32.mrb[0].mxu0
        %3258 = vmatprep.mubr.f32.mxu0 0.0
        %3259 = vmatmul.mubr.f32.gmra.mrb[0].mxu0 %v464
        %v3260 = vpop.f32.mrb[0].mxu0
        %v3261 = vadd.f32 %v3052, %v3260
        %v3262 = vpop.f32.mrb[0].mxu0
        %3263 = vmatprep.mubr.f32.mxu0 0.0
        %3264 = vmatmul.mubr.f32.gmra.mrb[0].mxu0 %v466
        %v3265 = vpop.f32.mrb[0].mxu0
        %v3266 = vadd.f32 %v3052, %v3265
        %v3267 = vpop.f32.mrb[0].mxu0
        %3268 = vmatprep.mubr.f32.mxu0 0.0
        %3269 = vmatmul.mubr.f32.gmra.mrb[0].mxu0 %v1632
        %v3270 = vpop.f32.mrb[0].mxu0
        %v3271 = vadd.f32 %v3052, %v3270
        %v3272 = vpop.f32.mrb[0].mxu0
        %3273 = vmatprep.mubr.f32.mxu0 0.0
        %3274 = vmatmul.mubr.f32.gmra.mrb[0].mxu0 %v1634
        %v3275 = vpop.f32.mrb[0].mxu0
        %v3276 = vadd.f32 %v3052, %v3275
        %v3277 = vpop.f32.mrb[0].mxu0
        %3278 = vdwg.mxu0
        %3279 = vst [vmem:[%s255] sm:$0xff] %v3121
        %3280 = vst [vmem:[%s255 + $0x8] sm:$0xff] %v3126
        %3281 = vst [vmem:[%s255 + $0x10] sm:$0xff] %v3131
        %3282 = vst [vmem:[%s255 + $0x18] sm:$0xff] %v3136
        %3283 = vst [vmem:[%s255 + $0x20] sm:$0xff] %v3141
        %3284 = vst [vmem:[%s255 + $0x28] sm:$0xff] %v3146
        %3285 = vst [vmem:[%s255 + $0x30] sm:$0xff] %v3151
        %3286 = vst [vmem:[%s255 + $0x38] sm:$0xff] %v3156
        %3287 = vst [vmem:[%s255 + $0x40] sm:$0xff] %v3161
        %3288 = vst [vmem:[%s255 + $0x48] sm:$0xff] %v3166
        %3289 = vst [vmem:[%s255 + $0x50] sm:$0xff] %v3171
        %3290 = vst [vmem:[%s255 + $0x58] sm:$0xff] %v3176
        %3291 = vst [vmem:[%s255 + $0x60] sm:$0xff] %v3181
        %3292 = vst [vmem:[%s255 + $0x68] sm:$0xff] %v3186
        %3293 = vst [vmem:[%s255 + $0x70] sm:$0xff] %v3191
        %3294 = vst [vmem:[%s255 + $0x78] sm:$0xff] %v3196
        %3295 = vst [vmem:[%s255 + $0x80] sm:$0xff] %v3201
        %3296 = vst [vmem:[%s255 + $0x88] sm:$0xff] %v3206
        %3297 = vst [vmem:[%s255 + $0x90] sm:$0xff] %v3211
        %3298 = vst [vmem:[%s255 + $0x98] sm:$0xff] %v3216
        %3299 = vst [vmem:[%s255 + $0xa0] sm:$0xff] %v3221
        %3300 = vst [vmem:[%s255 + $0xa8] sm:$0xff] %v3226
        %3301 = vst [vmem:[%s255 + $0xb0] sm:$0xff] %v3231
        %3302 = vst [vmem:[%s255 + $0xb8] sm:$0xff] %v3236
        %3303 = vst [vmem:[%s255 + $0xc0] sm:$0xff] %v3241
        %3304 = vst [vmem:[%s255 + $0xc8] sm:$0xff] %v3246
        %3305 = vst [vmem:[%s255 + $0xd0] sm:$0xff] %v3251
        %3306 = vst [vmem:[%s255 + $0xd8] sm:$0xff] %v3256
        %3307 = vst [vmem:[%s255 + $0xe0] sm:$0xff] %v3261
        %3308 = vst [vmem:[%s255 + $0xe8] sm:$0xff] %v3266
        %3309 = vst [vmem:[%s255 + $0xf0] sm:$0xff] %v3271
        %3310 = vst [vmem:[%s255 + $0xf8] sm:$0xff] %v3276
        %3311 = vst [vmem:[%s248] sm:$0xff] %v2999
        %3312 = vst [vmem:[%s248 + $0x8] sm:$0xff] %v3000
        %3313 = vst [vmem:[%s248 + $0x10] sm:$0xff] %v3001
        %3314 = vst [vmem:[%s248 + $0x18] sm:$0xff] %v3002
        %3315 = vst [vmem:[%s248 + $0x20] sm:$0xff] %v3003
        %3316 = vst [vmem:[%s248 + $0x28] sm:$0xff] %v3004
        %3317 = vst [vmem:[%s248 + $0x30] sm:$0xff] %v3005
        %3318 = vst [vmem:[%s248 + $0x38] sm:$0xff] %v3006
        %3319 = vst [vmem:[%s248 + $0x40] sm:$0xff] %v3007
        %3320 = vst [vmem:[%s248 + $0x48] sm:$0xff] %v3008
        %3321 = vst [vmem:[%s248 + $0x50] sm:$0xff] %v3009
        %3322 = vst [vmem:[%s248 + $0x58] sm:$0xff] %v3010
        %3323 = vst [vmem:[%s248 + $0x60] sm:$0xff] %v3011
        %3324 = vst [vmem:[%s248 + $0x68] sm:$0xff] %v3012
        %3325 = vst [vmem:[%s248 + $0x70] sm:$0xff] %v3013
        %3326 = vst [vmem:[%s248 + $0x78] sm:$0xff] %v3014
        %3327 = vst [vmem:[%s248 + $0x80] sm:$0xff] %v3015
        %3328 = vst [vmem:[%s248 + $0x88] sm:$0xff] %v3016
        %3329 = vst [vmem:[%s248 + $0x90] sm:$0xff] %v3017
        %3330 = vst [vmem:[%s248 + $0x98] sm:$0xff] %v3018
        %3331 = vst [vmem:[%s248 + $0xa0] sm:$0xff] %v3019
        %3332 = vst [vmem:[%s248 + $0xa8] sm:$0xff] %v3020
        %3333 = vst [vmem:[%s248 + $0xb0] sm:$0xff] %v3021
        %3334 = vst [vmem:[%s248 + $0xb8] sm:$0xff] %v3022
        %3335 = vst [vmem:[%s248 + $0xc0] sm:$0xff] %v3023
        %3336 = vst [vmem:[%s248 + $0xc8] sm:$0xff] %v3024
        %3337 = vst [vmem:[%s248 + $0xd0] sm:$0xff] %v3025
        %3338 = vst [vmem:[%s248 + $0xd8] sm:$0xff] %v3026
        %3339 = vst [vmem:[%s248 + $0xe0] sm:$0xff] %v3027
        %3340 = vst [vmem:[%s248 + $0xe8] sm:$0xff] %v3028
        %3341 = vst [vmem:[%s248 + $0xf0] sm:$0xff] %v3029
        %3342 = vst [vmem:[%s248 + $0xf8] sm:$0xff] %v3030
        %v3343 = vadd.f32 %v2999, %v3000
        %v3344 = vadd.f32 %v3343, %v3001
        %v3345 = vadd.f32 %v3344, %v3002
        %v3346 = vadd.f32 %v3345, %v3003
        %v3347 = vadd.f32 %v3346, %v3004
        %v3348 = vadd.f32 %v3347, %v3005
        %v3349 = vadd.f32 %v3348, %v3006
        %v3350 = vadd.f32 %v3349, %v3007
        %v3351 = vadd.f32 %v3350, %v3008
        %v3352 = vadd.f32 %v3351, %v3009
        %v3353 = vadd.f32 %v3352, %v3010
        %v3354 = vadd.f32 %v3353, %v3011
        %v3355 = vadd.f32 %v3354, %v3012
        %v3356 = vadd.f32 %v3355, %v3013
        %v3357 = vadd.f32 %v3356, %v3014
        %v3358 = vadd.f32 %v3357, %v3015
        %v3359 = vadd.f32 %v3358, %v3016
        %v3360 = vadd.f32 %v3359, %v3017
        %v3361 = vadd.f32 %v3360, %v3018
        %v3362 = vadd.f32 %v3361, %v3019
        %v3363 = vadd.f32 %v3362, %v3020
        %v3364 = vadd.f32 %v3363, %v3021
        %v3365 = vadd.f32 %v3364, %v3022
        %v3366 = vadd.f32 %v3365, %v3023
        %v3367 = vadd.f32 %v3366, %v3024
        %v3368 = vadd.f32 %v3367, %v3025
        %v3369 = vadd.f32 %v3368, %v3026
        %v3370 = vadd.f32 %v3369, %v3027
        %v3371 = vadd.f32 %v3370, %v3028
        %v3372 = vadd.f32 %v3371, %v3029
        %v3373 = vadd.f32 %v3372, %v3030
        %v3374 = vrot.slane %v3373, 4
        %v3375 = vadd.f32 %v3373, %v3374
        %v3376 = vrot.slane %v3375, 2
        %v3377 = vadd.f32 %v3375, %v3376
        %v3378 = vrot.slane %v3377, 1
        %v3379 = vadd.f32 %v3377, %v3378
        %v3380 = vmul.f32 %v3379, 0.00390625
        %v3381 = vsub.f32 %v2999, %v3380
        %v3382 = vsub.f32 %v3000, %v3380
        %v3383 = vsub.f32 %v3001, %v3380
        %v3384 = vsub.f32 %v3002, %v3380
        %v3385 = vsub.f32 %v3003, %v3380
        %v3386 = vsub.f32 %v3004, %v3380
        %v3387 = vsub.f32 %v3005, %v3380
        %v3388 = vsub.f32 %v3006, %v3380
        %v3389 = vsub.f32 %v3007, %v3380
        %v3390 = vsub.f32 %v3008, %v3380
        %v3391 = vsub.f32 %v3009, %v3380
        %v3392 = vsub.f32 %v3010, %v3380
        %v3393 = vsub.f32 %v3011, %v3380
        %v3394 = vsub.f32 %v3012, %v3380
        %v3395 = vsub.f32 %v3013, %v3380
        %v3396 = vsub.f32 %v3014, %v3380
        %v3397 = vsub.f32 %v3015, %v3380
        %v3398 = vsub.f32 %v3016, %v3380
        %v3399 = vsub.f32 %v3017, %v3380
        %v3400 = vsub.f32 %v3018, %v3380
        %v3401 = vsub.f32 %v3019, %v3380
        %v3402 = vsub.f32 %v3020, %v3380
        %v3403 = vsub.f32 %v3021, %v3380
        %v3404 = vsub.f32 %v3022, %v3380
        %v3405 = vsub.f32 %v3023, %v3380
        %v3406 = vsub.f32 %v3024, %v3380
        %v3407 = vsub.f32 %v3025, %v3380
        %v3408 = vsub.f32 %v3026, %v3380
        %v3409 = vsub.f32 %v3027, %v3380
        %v3410 = vsub.f32 %v3028, %v3380
        %v3411 = vsub.f32 %v3029, %v3380
        %v3412 = vsub.f32 %v3030, %v3380
        %v3413 = vmul.f32 %v3381, %v3381
        %v3414 = vmul.f32 %v3382, %v3382
        %v3415 = vmul.f32 %v3383, %v3383
        %v3416 = vmul.f32 %v3384, %v3384
        %v3417 = vmul.f32 %v3385, %v3385
        %v3418 = vmul.f32 %v3386, %v3386
        %v3419 = vmul.f32 %v3387, %v3387
        %v3420 = vmul.f32 %v3388, %v3388
        %v3421 = vmul.f32 %v3389, %v3389
        %v3422 = vmul.f32 %v3390, %v3390
        %v3423 = vmul.f32 %v3391, %v3391
        %v3424 = vmul.f32 %v3392, %v3392
        %v3425 = vmul.f32 %v3393, %v3393
        %v3426 = vmul.f32 %v3394, %v3394
        %v3427 = vmul.f32 %v3395, %v3395
        %v3428 = vmul.f32 %v3396, %v3396
        %v3429 = vmul.f32 %v3397, %v3397
        %v3430 = vmul.f32 %v3398, %v3398
        %v3431 = vmul.f32 %v3399, %v3399
        %v3432 = vmul.f32 %v3400, %v3400
        %v3433 = vmul.f32 %v3401, %v3401
        %v3434 = vmul.f32 %v3402, %v3402
        %v3435 = vmul.f32 %v3403, %v3403
        %v3436 = vmul.f32 %v3404, %v3404
        %v3437 = vmul.f32 %v3405, %v3405
        %v3438 = vmul.f32 %v3406, %v3406
        %v3439 = vmul.f32 %v3407, %v3407
        %v3440 = vmul.f32 %v3408, %v3408
        %v3441 = vmul.f32 %v3409, %v3409
        %v3442 = vmul.f32 %v3410, %v3410
        %v3443 = vmul.f32 %v3411, %v3411
        %v3444 = vmul.f32 %v3412, %v3412
        %v3445 = vadd.f32 %v3413, %v3414
        %v3446 = vadd.f32 %v3445, %v3415
        %v3447 = vadd.f32 %v3446, %v3416
        %v3448 = vadd.f32 %v3447, %v3417
        %v3449 = vadd.f32 %v3448, %v3418
        %v3450 = vadd.f32 %v3449, %v3419
        %v3451 = vadd.f32 %v3450, %v3420
        %v3452 = vadd.f32 %v3451, %v3421
        %v3453 = vadd.f32 %v3452, %v3422
        %v3454 = vadd.f32 %v3453, %v3423
        %v3455 = vadd.f32 %v3454, %v3424
        %v3456 = vadd.f32 %v3455, %v3425
        %v3457 = vadd.f32 %v3456, %v3426
        %v3458 = vadd.f32 %v3457, %v3427
        %v3459 = vadd.f32 %v3458, %v3428
        %v3460 = vadd.f32 %v3459, %v3429
        %v3461 = vadd.f32 %v3460, %v3430
        %v3462 = vadd.f32 %v3461, %v3431
        %v3463 = vadd.f32 %v3462, %v3432
        %v3464 = vadd.f32 %v3463, %v3433
        %v3465 = vadd.f32 %v3464, %v3434
        %v3466 = vadd.f32 %v3465, %v3435
        %v3467 = vadd.f32 %v3466, %v3436
        %v3468 = vadd.f32 %v3467, %v3437
        %v3469 = vadd.f32 %v3468, %v3438
        %v3470 = vadd.f32 %v3469, %v3439
        %v3471 = vadd.f32 %v3470, %v3440
        %v3472 = vadd.f32 %v3471, %v3441
        %v3473 = vadd.f32 %v3472, %v3442
        %v3474 = vadd.f32 %v3473, %v3443
        %v3475 = vadd.f32 %v3474, %v3444
        %v3476 = vrot.slane %v3475, 4
        %v3477 = vadd.f32 %v3475, %v3476
        %v3478 = vrot.slane %v3477, 2
        %v3479 = vadd.f32 %v3477, %v3478
        %v3480 = vrot.slane %v3479, 1
        %v3481 = vadd.f32 %v3479, %v3480
        %vm3482 = vcmask 1040384
        %v3483 = vsel %vm3482, %v3379, %v3481
        %3484 = vst [vmem:[%s262] sm:$0x3] %v3483
        %s3485 = sand.u32 %s121, 1
        %s3486 = scalar_lea.sflag [#allocation3], %s3485
        %s3487 = sand.u32 %s121, 1
        %s3488 = smul.addr %s3487, 256
        %s3489 = scalar_lea.vmem [#allocation2], %s3488
        %s3490 = sand.u32 %s24, 1
        %s3491 = scalar_lea.sflag [#allocation5], %s3490
        %s3492 = sand.u32 %s147, 1
        %s3493 = smul.addr %s3492, 256
        %s3494 = scalar_lea.vmem [#allocation4], %s3493
        %s3495 = sand.u32 %s24, 1
        %s3496 = scalar_lea.sflag [#allocation5], %s3495
        %s3497 = sand.u32 %s173, 1
        %s3498 = smul.addr %s3497, 2
        %s3499 = scalar_lea.vmem [#allocation6], %s3498
        // Predicated region
        $region37: #{tpu_custom_call.1} parent=35 // pred_check
          %p3500 = pneg %p131
        $region38: #{tpu_custom_call.1} parent=35 // pred_check_branch
          %3502 = sbr.rel (%p3500) target = $region40
        $region39: #{tpu_custom_call.1} parent=35 // pred_region
          %s3504 = ssub.s32 4096, 4096
          %3505 = vsyncadd %s3486, %s3504
          %s3506 = smul.addr %s24, 32
          %s3507 = smul.addr %s3506, 128
          %s3508 = scalar_lea.hbm %s4, %s3507
          %s3509 = sshll.u32 %s3489, 4
          %s3510 = int_to_ptr.vmem [resolvable:$true] %s3509
          %3515 = dma.vmem_to_hbm [thread:$0]  %s3510, 4096, %s3508, %s3486, 128, 128, 8
        $region40: #{tpu_custom_call.1} parent=35 // pred_fallthru
          _
        // Predicated region
        $region41: #{tpu_custom_call.1} parent=35 // pred_check
          %p3516 = pneg %p157
        $region42: #{tpu_custom_call.1} parent=35 // pred_check_branch
          %3518 = sbr.rel (%p3516) target = $region44
        $region43: #{tpu_custom_call.1} parent=35 // pred_region
          %s3520 = ssub.s32 4096, 4096
          %3521 = vsyncadd %s3491, %s3520
          %s3522 = smul.addr %s24, 32
          %s3523 = smul.addr %s3522, 128
          %s3524 = scalar_lea.hbm %s5, %s3523
          %s3525 = sshll.u32 %s3494, 4
          %s3526 = int_to_ptr.vmem [resolvable:$true] %s3525
          %3531 = dma.vmem_to_hbm [thread:$0]  %s3526, 4096, %s3524, %s3491, 128, 128, 8
        $region44: #{tpu_custom_call.1} parent=35 // pred_fallthru
          _
        // Predicated region
        $region45: #{tpu_custom_call.1} parent=35 // pred_check
          %p3532 = pneg %p183
        $region46: #{tpu_custom_call.1} parent=35 // pred_check_branch
          %3534 = sbr.rel (%p3532) target = $region48
        $region47: #{tpu_custom_call.1} parent=35 // pred_region
          %s3536 = ssub.s32 32, 32
          %3537 = vsyncadd %s3496, %s3536
          %s3538 = smul.addr %s24, 32
          %s3539 = scalar_lea.hbm %s6, %s3538
          %s3541 = sshll.u32 %s3499, 4
          %s3542 = int_to_ptr.vmem [resolvable:$true] %s3541
          %3544 = dma.vmem_to_hbm [thread:$0]  %s3542, 32, %s3539, %s3496
        $region48: #{tpu_custom_call.1} parent=35 // pred_fallthru
          _
      $region36: #{tpu_custom_call.1} parent=5 // pred_fallthru
        _
      %p3545 = scmp.le.s32.totalorder 2, %s19
      // Predicated region
      $region49: #{tpu_custom_call.1} parent=5 // pred_check
        %p3546 = pneg %p3545
      $region50: #{tpu_custom_call.1} parent=5 // pred_check_branch
        %3548 = sbr.rel (%p3546) target = $region52
      $region51: #{tpu_custom_call.1} parent=5 // pred_region
        %s3549 = ssub.s32 %s19, 2
        // Predicated region
        $region53: #{tpu_custom_call.1} parent=51 // pred_check
          %p3550 = pneg %p137
        $region54: #{tpu_custom_call.1} parent=51 // pred_check_branch
          %3552 = sbr.rel (%p3550) target = $region56
        $region55: #{tpu_custom_call.1} parent=51 // pred_region
          %s3553 = sand.u32 %s122, 1
          %s3554 = scalar_lea.sflag [#allocation3], %s3553
          %s3555 = sand.u32 %s122, 1
          %s3556 = smul.addr %s3555, 256
          %s3557 = scalar_lea.vmem [#allocation2], %s3556
          %3558 = dma.done %s3554, 4096
        $region56: #{tpu_custom_call.1} parent=51 // pred_fallthru
          _
        // Predicated region
        $region57: #{tpu_custom_call.1} parent=51 // pred_check
          %p3559 = pneg %p163
        $region58: #{tpu_custom_call.1} parent=51 // pred_check_branch
          %3561 = sbr.rel (%p3559) target = $region60
        $region59: #{tpu_custom_call.1} parent=51 // pred_region
          %s3562 = sand.u32 %s25, 1
          %s3563 = scalar_lea.sflag [#allocation5], %s3562
          %s3564 = sand.u32 %s148, 1
          %s3565 = smul.addr %s3564, 256
          %s3566 = scalar_lea.vmem [#allocation4], %s3565
          %3567 = dma.done %s3563, 4096
        $region60: #{tpu_custom_call.1} parent=51 // pred_fallthru
          _
        // Predicated region
        $region61: #{tpu_custom_call.1} parent=51 // pred_check
          %p3568 = pneg %p189
        $region62: #{tpu_custom_call.1} parent=51 // pred_check_branch
          %3570 = sbr.rel (%p3568) target = $region64
        $region63: #{tpu_custom_call.1} parent=51 // pred_region
          %s3571 = sand.u32 %s25, 1
          %s3572 = scalar_lea.sflag [#allocation5], %s3571
          %s3573 = sand.u32 %s174, 1
          %s3574 = smul.addr %s3573, 2
          %s3575 = scalar_lea.vmem [#allocation6], %s3574
          %3576 = dma.done %s3572, 32
        $region64: #{tpu_custom_call.1} parent=51 // pred_fallthru
          _
      $region52: #{tpu_custom_call.1} parent=5 // pred_fallthru
        _
    $region6: #{tpu_custom_call.1} parent=1 // loop_footer
      %s23 = sadd.s32 1, %s19
    $region7: #{tpu_custom_call.1} parent=1 // loop_footer_branch
      %18 = sbr.rel target = $region3
    $region8: #{tpu_custom_call.1} parent=1 // loop_exit
      _
    %3577 = vsyncpa [#allocation3], 1
    %s3578 = scalar_lea.sflag [#allocation3], 1
    %3579 = vsyncpa %s3578, 1
    %3580 = vsyncpa [#allocation5], 1
    %s3581 = scalar_lea.sflag [#allocation5], 1
    %3582 = vsyncpa %s3581, 1

</llo_original>
